<compile_context>
chip_gen: v5e
topology: v5e:2x2
jax: 0.10.0
libtpu: 0.0.40
codegen_flags: <defaults>
</compile_context>

<pallas_src>
import functools

import jax
import jax.numpy as jnp
from jax.experimental import pallas as pl
from jax.experimental.pallas import tpu as pltpu

# ----------------------------- model config (small) -------------------------
PATCH = 16
IMG_SIZE = 32
IMG_C = 3
N_PATCHES = (IMG_SIZE // PATCH) ** 2          # 4
SEQ = N_PATCHES + 1                           # 5 real tokens (cls + patches)
CPP = IMG_C * PATCH * PATCH                   # 768 pixels per patch
WIDTH = 128                                   # transformer width
HEADS = 2
HEAD_DIM = WIDTH // HEADS                     # 64
MLP_DIM = 4 * WIDTH                           # 512
LAYERS = 2                                    # TODO(synk): 12 in ViT-B/16
OUT_DIM = 128                                 # visual projection dim

# Frames per grid step: with seq_pad=8 this gives 256 tokens/step, i.e. full
# 256-row MXU passes on v6e/v7x (and >=128 on v5e), and amortizes grid overhead.
MAX_FRAMES_PER_STEP = 32


# ----------------------------- fused ViT kernel -----------------------------
def _vit_kernel(patch_ref, pos_ref, conv_w_ref,
                ln_pre_g_ref, ln_pre_b_ref,
                ln1_g_ref, ln1_b_ref, w_qkv_ref, b_qkv_ref,
                w_ao_ref, b_ao_ref, ln2_g_ref, ln2_b_ref,
                w_fc1_ref, b_fc1_ref, w_fc2_ref, b_fc2_ref,
                ln_post_g_ref, ln_post_b_ref, proj_ref,
                out_ref,
                *, layers, heads, head_dim, width, frames, seq_pad, seq_real):
    f = frames
    tokens = f * seq_pad                       # rows of every big matmul

    def matmul(x, w, bias=None):
        # bf16 weights / inputs, f32 accumulation on the MXU.
        y = jax.lax.dot_general(x.astype(jnp.bfloat16), w,
                                (((1,), (0,)), ((), ())),
                                preferred_element_type=jnp.float32)
        return y if bias is None else y + bias

    def layer_norm(x, g, b):
        mu = jnp.mean(x, axis=-1, keepdims=True)
        var = jnp.mean(jnp.square(x - mu), axis=-1, keepdims=True)
        return (x - mu) * jax.lax.rsqrt(var + 1e-5) * g + b

    # --- patch embedding (conv == unfold+matmul, unfold done in wrapper) -----
    # pos_ref already contains the class embedding folded into token 0 and is
    # pre-tiled over the F frames of this step.
    x = matmul(patch_ref[...], conv_w_ref[...]) + pos_ref[...]   # [tokens, width]
    x = layer_norm(x, ln_pre_g_ref[...], ln_pre_b_ref[...])

    # Attention key mask for the padded tokens (built once, reused everywhere).
    k_idx = jax.lax.broadcasted_iota(jnp.int32, (f, seq_pad, seq_pad), 2)
    key_valid = k_idx < seq_real

    inv_sqrt_d = 1.0 / (float(head_dim) ** 0.5)
    # TODO(synk): for the real 12-layer / width-768 config, stream one layer per
    # grid step (extra "arbitrary" grid axis) instead of this static unroll.
    for l in range(layers):
        # ---- multi-head self-attention (pre-LN, residual) ----
        h = layer_norm(x, ln1_g_ref[l], ln1_b_ref[l])
        qkv = matmul(h, w_qkv_ref[l], b_qkv_ref[l])              # [tokens, 3*width]
        head_outs = []
        for hh in range(heads):                                  # static, small
            lo = hh * head_dim
            qh = qkv[:, lo:lo + head_dim].reshape(f, seq_pad, head_dim)
            kh = qkv[:, width + lo:width + lo + head_dim].reshape(f, seq_pad, head_dim)
            vh = qkv[:, 2 * width + lo:2 * width + lo + head_dim].reshape(f, seq_pad, head_dim)
            # frame-batched contractions: one MXU call per head, not per frame
            s = jnp.einsum('bqd,bkd->bqk', qh, kh,
                           preferred_element_type=jnp.float32) * inv_sqrt_d
            s = jnp.where(key_valid, s, -1e30)                   # mask pad keys
            s = s - jnp.max(s, axis=-1, keepdims=True)
            p = jnp.exp(s)
            p = p * pl.reciprocal(jnp.sum(p, axis=-1, keepdims=True), approx=True)
            oh = jnp.einsum('bqk,bkd->bqd', p, vh,
                            preferred_element_type=jnp.float32)
            head_outs.append(oh.reshape(tokens, head_dim))
        attn = jnp.concatenate(head_outs, axis=-1)               # [tokens, width]
        x = x + matmul(attn, w_ao_ref[l], b_ao_ref[l])

        # ---- MLP with QuickGELU (pre-LN, residual) ----
        h = layer_norm(x, ln2_g_ref[l], ln2_b_ref[l])
        h = matmul(h, w_fc1_ref[l], b_fc1_ref[l])                # [tokens, mlp]
        h = h * jax.nn.sigmoid(1.702 * h)                        # QuickGELU
        x = x + matmul(h, w_fc2_ref[l], b_fc2_ref[l])

    # ---- class token per frame -> ln_post -> visual projection ----
    cls_tok = x.reshape(f, seq_pad, width)[:, 0, :]              # [f, width]
    cls_tok = layer_norm(cls_tok, ln_post_g_ref[...], ln_post_b_ref[...])
    # lane-dense full-block store (own (F, OUT_DIM) block per grid step)
    out_ref[...] = matmul(cls_tok, proj_ref[...]).astype(out_ref.dtype)


# ----------------------------- parameters ------------------------------------
def init_params(key):
    ks = jax.random.split(key, 10)
    s = 0.02
    conv_w = s * jax.random.normal(ks[0], (WIDTH, IMG_C, PATCH, PATCH), jnp.float32)
    p = {
        # torch Conv2d weight [D, C, p, p] -> [C*p*p, D], bf16
        "conv_w": conv_w.reshape(WIDTH, CPP).T.astype(jnp.bfloat16),
        "cls": s * jax.random.normal(ks[1], (1, WIDTH), jnp.float32),
        "pos": s * jax.random.normal(ks[2], (SEQ, WIDTH), jnp.float32),
        "ln_pre_g": jnp.ones((1, WIDTH), jnp.float32),
        "ln_pre_b": jnp.zeros((1, WIDTH), jnp.float32),
        "ln_post_g": jnp.ones((1, WIDTH), jnp.float32),
        "ln_post_b": jnp.zeros((1, WIDTH), jnp.float32),
        "proj": (s * jax.random.normal(ks[3], (WIDTH, OUT_DIM), jnp.float32)
                 ).astype(jnp.bfloat16),
        # per-layer weights stacked on a leading layer axis
        "ln1_g": jnp.ones((LAYERS, 1, WIDTH), jnp.float32),
        "ln1_b": jnp.zeros((LAYERS, 1, WIDTH), jnp.float32),
        "ln2_g": jnp.ones((LAYERS, 1, WIDTH), jnp.float32),
        "ln2_b": jnp.zeros((LAYERS, 1, WIDTH), jnp.float32),
        "w_qkv": (s * jax.random.normal(ks[4], (LAYERS, WIDTH, 3 * WIDTH),
                                        jnp.float32)).astype(jnp.bfloat16),
        "b_qkv": jnp.zeros((LAYERS, 1, 3 * WIDTH), jnp.float32),
        "w_attn_out": (s * jax.random.normal(ks[5], (LAYERS, WIDTH, WIDTH),
                                             jnp.float32)).astype(jnp.bfloat16),
        "b_attn_out": jnp.zeros((LAYERS, 1, WIDTH), jnp.float32),
        "w_fc1": (s * jax.random.normal(ks[6], (LAYERS, WIDTH, MLP_DIM),
                                        jnp.float32)).astype(jnp.bfloat16),
        "b_fc1": jnp.zeros((LAYERS, 1, MLP_DIM), jnp.float32),
        "w_fc2": (s * jax.random.normal(ks[7], (LAYERS, MLP_DIM, WIDTH),
                                        jnp.float32)).astype(jnp.bfloat16),
        "b_fc2": jnp.zeros((LAYERS, 1, WIDTH), jnp.float32),
    }
    return p


# ----------------------------- forward (jitted) ------------------------------
@jax.jit
def image_clip_forward(params, image):
    """ImageCLIP.forward: NCTHW video -> [B, OUT_DIM] mean-pooled CLIP features."""
    B, C, T, H, W = image.shape
    n = B * T
    gh, gw = H // PATCH, W // PATCH
    n_patch = gh * gw
    seq = n_patch + 1                       # real tokens per frame
    seq_pad = ((seq + 7) // 8) * 8          # pad to sublane multiple -> native reshapes
    cpp = C * PATCH * PATCH

    # image.permute(0, 2, 1, 3, 4).reshape(-1, C, H, W)   (glue: pure layout)
    x = jnp.transpose(image, (0, 2, 1, 3, 4)).reshape(n, C, H, W)
    # Conv2d(kernel=stride=PATCH, bias=False) == patch unfold (+ matmul in-kernel)
    x = x.reshape(n, C, gh, PATCH, gw, PATCH)
    x = jnp.transpose(x, (0, 2, 4, 1, 3, 5)).reshape(n, n_patch, cpp)
    # token 0 = class-token slot (zero pixels), tokens [1, seq) = patches, rest pad
    patches = jnp.pad(x, ((0, 0), (1, seq_pad - seq), (0, 0)))   # [n, seq_pad, cpp]

    # Frames per grid step; pad frame count to a multiple of F.
    f_step = n if n <= MAX_FRAMES_PER_STEP else MAX_FRAMES_PER_STEP
    n_pad = ((n + f_step - 1) // f_step) * f_step
    if n_pad != n:
        patches = jnp.pad(patches, ((0, n_pad - n), (0, 0), (0, 0)))
    # bf16 patches: the only DMA that scales with the grid (halves its bandwidth)
    patches = patches.reshape(n_pad * seq_pad, cpp).astype(jnp.bfloat16)

    # Fold class embedding into the positional embedding (token 0), zero-pad the
    # pad-token rows, and pre-tile over the F frames of one step (constant block).
    pos_cls = params["pos"] + jnp.pad(params["cls"], ((0, seq - 1), (0, 0)))
    pos_cls = jnp.pad(pos_cls, ((0, seq_pad - seq), (0, 0)))      # [seq_pad, width]
    pos_tiled = jnp.tile(pos_cls, (f_step, 1))                    # [F*seq_pad, width]

    kernel = functools.partial(
        _vit_kernel, layers=LAYERS, heads=HEADS, head_dim=HEAD_DIM,
        width=WIDTH, frames=f_step, seq_pad=seq_pad, seq_real=seq)

    def full(shape):
        # Constant-index weight block: DMA'd once, stays resident in VMEM.
        # TODO(synk): pipeline_mode=pl.Buffered(1) would drop the redundant second
        # buffer; irrelevant at this VMEM footprint (<3 MiB total).
        nd = len(shape)
        return pl.BlockSpec(shape, lambda i, _nd=nd: (0,) * _nd)

    in_specs = [
        # per-step slab of F frames' unfolded patches: [F*seq_pad, cpp]
        pl.BlockSpec((f_step * seq_pad, cpp), lambda i: (i, 0)),
        full((f_step * seq_pad, WIDTH)),        # pos_tiled
        full(params["conv_w"].shape),
        full(params["ln_pre_g"].shape),
        full(params["ln_pre_b"].shape),
        full(params["ln1_g"].shape),
        full(params["ln1_b"].shape),
        full(params["w_qkv"].shape),
        full(params["b_qkv"].shape),
        full(params["w_attn_out"].shape),
        full(params["b_attn_out"].shape),
        full(params["ln2_g"].shape),
        full(params["ln2_b"].shape),
        full(params["w_fc1"].shape),
        full(params["b_fc1"].shape),
        full(params["w_fc2"].shape),
        full(params["b_fc2"].shape),
        full(params["ln_post_g"].shape),
        full(params["ln_post_b"].shape),
        full(params["proj"].shape),
    ]

    frame_feats = pl.pallas_call(
        kernel,
        out_shape=jax.ShapeDtypeStruct((n_pad, OUT_DIM), jnp.float32),
        grid_spec=pltpu.PrefetchScalarGridSpec(
            num_scalar_prefetch=0,
            grid=(n_pad // f_step,),
            in_specs=in_specs,
            # each step owns its (F, OUT_DIM) block -> no accumulator, no RMW
            out_specs=pl.BlockSpec((f_step, OUT_DIM), lambda i: (i, 0)),
        ),
        compiler_params=pltpu.CompilerParams(
            dimension_semantics=("parallel",)),   # megacore-shardable on v7x
    )(patches, pos_tiled, params["conv_w"],
      params["ln_pre_g"], params["ln_pre_b"],
      params["ln1_g"], params["ln1_b"],
      params["w_qkv"], params["b_qkv"],
      params["w_attn_out"], params["b_attn_out"],
      params["ln2_g"], params["ln2_b"],
      params["w_fc1"], params["b_fc1"],
      params["w_fc2"], params["b_fc2"],
      params["ln_post_g"], params["ln_post_b"],
      params["proj"])

    # x.view(B, T, -1).mean(1): trivial reduction over the frame features.
    frame_feats = frame_feats[:n].reshape(B, T, OUT_DIM)
    return jnp.mean(frame_feats, axis=1)


# ----------------------------- demo ------------------------------------------
if __name__ == "__main__":
    key = jax.random.PRNGKey(0)
    k_img, k_par = jax.random.split(key)

    B, C, T, H, W = 2, IMG_C, 2, IMG_SIZE, IMG_SIZE
    image = jax.random.normal(k_img, (B, C, T, H, W), jnp.float32)   # NCTHW video

    params = init_params(k_par)

    feats = image_clip_forward(params, image)   # [B, OUT_DIM]
    jax.block_until_ready(feats)

    assert feats.shape == (B, OUT_DIM)
    assert bool(jnp.all(jnp.isfinite(feats)))

    print("KERNEL_OK")
</pallas_src>

<mosaic_0001>
module attributes {stable_mosaic.version = 11 : i64} {
  func.func @_vit_kernel(%arg0: i32, %arg1: memref<32x768xbf16, #tpu.memory_space<vmem>>, %arg2: memref<32x128xf32, #tpu.memory_space<vmem>>, %arg3: memref<768x128xbf16, #tpu.memory_space<vmem>>, %arg4: memref<1x128xf32, #tpu.memory_space<vmem>>, %arg5: memref<1x128xf32, #tpu.memory_space<vmem>>, %arg6: memref<2x1x128xf32, #tpu.memory_space<vmem>>, %arg7: memref<2x1x128xf32, #tpu.memory_space<vmem>>, %arg8: memref<2x128x384xbf16, #tpu.memory_space<vmem>>, %arg9: memref<2x1x384xf32, #tpu.memory_space<vmem>>, %arg10: memref<2x128x128xbf16, #tpu.memory_space<vmem>>, %arg11: memref<2x1x128xf32, #tpu.memory_space<vmem>>, %arg12: memref<2x1x128xf32, #tpu.memory_space<vmem>>, %arg13: memref<2x1x128xf32, #tpu.memory_space<vmem>>, %arg14: memref<2x128x512xbf16, #tpu.memory_space<vmem>>, %arg15: memref<2x1x512xf32, #tpu.memory_space<vmem>>, %arg16: memref<2x512x128xbf16, #tpu.memory_space<vmem>>, %arg17: memref<2x1x128xf32, #tpu.memory_space<vmem>>, %arg18: memref<1x128xf32, #tpu.memory_space<vmem>>, %arg19: memref<1x128xf32, #tpu.memory_space<vmem>>, %arg20: memref<128x128xbf16, #tpu.memory_space<vmem>>, %arg21: memref<4x128xf32, #tpu.memory_space<vmem>>) attributes {dimension_semantics = [#tpu.dimension_semantics<parallel>], iteration_bounds = array<i64: 1>, scalar_prefetch = 0 : i64, scratch_operands = 0 : i64, tpu.core_type = #tpu.core_type<tc>, window_params = [{transform_indices = @transform_0, window_bounds = array<i64: 32, 768>}, {pipeline_mode = #tpu.pipeline_mode<synchronous>, transform_indices = @transform_1, window_bounds = array<i64: 32, 128>}, {pipeline_mode = #tpu.pipeline_mode<synchronous>, transform_indices = @transform_2, window_bounds = array<i64: 768, 128>}, {pipeline_mode = #tpu.pipeline_mode<synchronous>, transform_indices = @transform_3, window_bounds = array<i64: 1, 128>}, {pipeline_mode = #tpu.pipeline_mode<synchronous>, transform_indices = @transform_4, window_bounds = array<i64: 1, 128>}, {pipeline_mode = #tpu.pipeline_mode<synchronous>, transform_indices = @transform_5, window_bounds = array<i64: 2, 1, 128>}, {pipeline_mode = #tpu.pipeline_mode<synchronous>, transform_indices = @transform_6, window_bounds = array<i64: 2, 1, 128>}, {pipeline_mode = #tpu.pipeline_mode<synchronous>, transform_indices = @transform_7, window_bounds = array<i64: 2, 128, 384>}, {pipeline_mode = #tpu.pipeline_mode<synchronous>, transform_indices = @transform_8, window_bounds = array<i64: 2, 1, 384>}, {pipeline_mode = #tpu.pipeline_mode<synchronous>, transform_indices = @transform_9, window_bounds = array<i64: 2, 128, 128>}, {pipeline_mode = #tpu.pipeline_mode<synchronous>, transform_indices = @transform_10, window_bounds = array<i64: 2, 1, 128>}, {pipeline_mode = #tpu.pipeline_mode<synchronous>, transform_indices = @transform_11, window_bounds = array<i64: 2, 1, 128>}, {pipeline_mode = #tpu.pipeline_mode<synchronous>, transform_indices = @transform_12, window_bounds = array<i64: 2, 1, 128>}, {pipeline_mode = #tpu.pipeline_mode<synchronous>, transform_indices = @transform_13, window_bounds = array<i64: 2, 128, 512>}, {pipeline_mode = #tpu.pipeline_mode<synchronous>, transform_indices = @transform_14, window_bounds = array<i64: 2, 1, 512>}, {pipeline_mode = #tpu.pipeline_mode<synchronous>, transform_indices = @transform_15, window_bounds = array<i64: 2, 512, 128>}, {pipeline_mode = #tpu.pipeline_mode<synchronous>, transform_indices = @transform_16, window_bounds = array<i64: 2, 1, 128>}, {pipeline_mode = #tpu.pipeline_mode<synchronous>, transform_indices = @transform_17, window_bounds = array<i64: 1, 128>}, {pipeline_mode = #tpu.pipeline_mode<synchronous>, transform_indices = @transform_18, window_bounds = array<i64: 1, 128>}, {pipeline_mode = #tpu.pipeline_mode<synchronous>, transform_indices = @transform_19, window_bounds = array<i64: 128, 128>}, {transform_indices = @transform_20, window_bounds = array<i64: 4, 128>}]} {
    %c0 = arith.constant 0 : index
    %c0_0 = arith.constant 0 : index
    %0 = vector.load %arg1[%c0, %c0_0] : memref<32x768xbf16, #tpu.memory_space<vmem>>, vector<32x768xbf16>
    %c0_1 = arith.constant 0 : index
    %c0_2 = arith.constant 0 : index
    %1 = vector.load %arg3[%c0_1, %c0_2] : memref<768x128xbf16, #tpu.memory_space<vmem>>, vector<768x128xbf16>
    %cst = arith.constant dense<0.000000e+00> : vector<32x128xf32>
    %2 = tpu.matmul %0, %1, %cst {dimension_numbers = #tpu.dot_dimension_numbers<[1], [0], [0], [1], [0, 0, 1, 1], [], []>} : vector<32x768xbf16>, vector<768x128xbf16>, vector<32x128xf32> -> vector<32x128xf32>
    %c0_3 = arith.constant 0 : index
    %c0_4 = arith.constant 0 : index
    %3 = vector.load %arg2[%c0_3, %c0_4] : memref<32x128xf32, #tpu.memory_space<vmem>>, vector<32x128xf32>
    %4 = arith.addf %2, %3 : vector<32x128xf32>
    %c0_5 = arith.constant 0 : index
    %c0_6 = arith.constant 0 : index
    %5 = vector.load %arg4[%c0_5, %c0_6] : memref<1x128xf32, #tpu.memory_space<vmem>>, vector<1x128xf32>
    %c0_7 = arith.constant 0 : index
    %c0_8 = arith.constant 0 : index
    %6 = vector.load %arg5[%c0_7, %c0_8] : memref<1x128xf32, #tpu.memory_space<vmem>>, vector<1x128xf32>
    %cst_9 = arith.constant dense<0.000000e+00> : vector<32xf32>
    %7 = vector.multi_reduction <add>, %4, %cst_9 [1] : vector<32x128xf32> to vector<32xf32>
    %8 = vector.shape_cast %7 : vector<32xf32> to vector<32x1xf32>
    %cst_10 = arith.constant 1.280000e+02 : f32
    %9 = vector.broadcast %cst_10 : f32 to vector<32x1xf32>
    %10 = arith.divf %8, %9 : vector<32x1xf32>
    %11 = vector.broadcast %10 : vector<32x1xf32> to vector<32x128xf32>
    %12 = arith.subf %4, %11 : vector<32x128xf32>
    %13 = arith.mulf %12, %12 : vector<32x128xf32>
    %cst_11 = arith.constant dense<0.000000e+00> : vector<32xf32>
    %14 = vector.multi_reduction <add>, %13, %cst_11 [1] : vector<32x128xf32> to vector<32xf32>
    %15 = vector.shape_cast %14 : vector<32xf32> to vector<32x1xf32>
    %cst_12 = arith.constant 1.280000e+02 : f32
    %16 = vector.broadcast %cst_12 : f32 to vector<32x1xf32>
    %17 = arith.divf %15, %16 : vector<32x1xf32>
    %18 = vector.broadcast %10 : vector<32x1xf32> to vector<32x128xf32>
    %19 = arith.subf %4, %18 : vector<32x128xf32>
    %cst_13 = arith.constant 9.99999974E-6 : f32
    %20 = vector.broadcast %cst_13 : f32 to vector<32x1xf32>
    %21 = arith.addf %17, %20 : vector<32x1xf32>
    %22 = math.rsqrt %21 : vector<32x1xf32>
    %23 = vector.broadcast %22 : vector<32x1xf32> to vector<32x128xf32>
    %24 = arith.mulf %19, %23 : vector<32x128xf32>
    %25 = vector.broadcast %5 : vector<1x128xf32> to vector<32x128xf32>
    %26 = arith.mulf %24, %25 : vector<32x128xf32>
    %27 = vector.broadcast %6 : vector<1x128xf32> to vector<32x128xf32>
    %28 = arith.addf %26, %27 : vector<32x128xf32>
    %29 = tpu.iota {dimensions = array<i32: 2>} : vector<4x8x8xi32>
    %c5_i32 = arith.constant 5 : i32
    %30 = vector.broadcast %c5_i32 : i32 to vector<4x8x8xi32>
    %31 = arith.cmpi slt, %29, %30 : vector<4x8x8xi32>
    %c0_14 = arith.constant 0 : index
    %c0_15 = arith.constant 0 : index
    %c0_16 = arith.constant 0 : index
    %32 = vector.load %arg6[%c0_14, %c0_15, %c0_16] : memref<2x1x128xf32, #tpu.memory_space<vmem>>, vector<1x1x128xf32>
    %33 = vector.shape_cast %32 : vector<1x1x128xf32> to vector<1x128xf32>
    %c0_17 = arith.constant 0 : index
    %c0_18 = arith.constant 0 : index
    %c0_19 = arith.constant 0 : index
    %34 = vector.load %arg7[%c0_17, %c0_18, %c0_19] : memref<2x1x128xf32, #tpu.memory_space<vmem>>, vector<1x1x128xf32>
    %35 = vector.shape_cast %34 : vector<1x1x128xf32> to vector<1x128xf32>
    %cst_20 = arith.constant dense<0.000000e+00> : vector<32xf32>
    %36 = vector.multi_reduction <add>, %28, %cst_20 [1] : vector<32x128xf32> to vector<32xf32>
    %37 = vector.shape_cast %36 : vector<32xf32> to vector<32x1xf32>
    %cst_21 = arith.constant 1.280000e+02 : f32
    %38 = vector.broadcast %cst_21 : f32 to vector<32x1xf32>
    %39 = arith.divf %37, %38 : vector<32x1xf32>
    %40 = vector.broadcast %39 : vector<32x1xf32> to vector<32x128xf32>
    %41 = arith.subf %28, %40 : vector<32x128xf32>
    %42 = arith.mulf %41, %41 : vector<32x128xf32>
    %cst_22 = arith.constant dense<0.000000e+00> : vector<32xf32>
    %43 = vector.multi_reduction <add>, %42, %cst_22 [1] : vector<32x128xf32> to vector<32xf32>
    %44 = vector.shape_cast %43 : vector<32xf32> to vector<32x1xf32>
    %cst_23 = arith.constant 1.280000e+02 : f32
    %45 = vector.broadcast %cst_23 : f32 to vector<32x1xf32>
    %46 = arith.divf %44, %45 : vector<32x1xf32>
    %47 = vector.broadcast %39 : vector<32x1xf32> to vector<32x128xf32>
    %48 = arith.subf %28, %47 : vector<32x128xf32>
    %cst_24 = arith.constant 9.99999974E-6 : f32
    %49 = vector.broadcast %cst_24 : f32 to vector<32x1xf32>
    %50 = arith.addf %46, %49 : vector<32x1xf32>
    %51 = math.rsqrt %50 : vector<32x1xf32>
    %52 = vector.broadcast %51 : vector<32x1xf32> to vector<32x128xf32>
    %53 = arith.mulf %48, %52 : vector<32x128xf32>
    %54 = vector.broadcast %33 : vector<1x128xf32> to vector<32x128xf32>
    %55 = arith.mulf %53, %54 : vector<32x128xf32>
    %56 = vector.broadcast %35 : vector<1x128xf32> to vector<32x128xf32>
    %57 = arith.addf %55, %56 : vector<32x128xf32>
    %c0_25 = arith.constant 0 : index
    %c0_26 = arith.constant 0 : index
    %c0_27 = arith.constant 0 : index
    %58 = vector.load %arg8[%c0_25, %c0_26, %c0_27] : memref<2x128x384xbf16, #tpu.memory_space<vmem>>, vector<1x128x384xbf16>
    %59 = vector.shape_cast %58 : vector<1x128x384xbf16> to vector<128x384xbf16>
    %c0_28 = arith.constant 0 : index
    %c0_29 = arith.constant 0 : index
    %c0_30 = arith.constant 0 : index
    %60 = vector.load %arg9[%c0_28, %c0_29, %c0_30] : memref<2x1x384xf32, #tpu.memory_space<vmem>>, vector<1x1x384xf32>
    %61 = vector.shape_cast %60 : vector<1x1x384xf32> to vector<1x384xf32>
    %62 = arith.truncf %57 : vector<32x128xf32> to vector<32x128xbf16>
    %cst_31 = arith.constant dense<0.000000e+00> : vector<32x384xf32>
    %63 = tpu.matmul %62, %59, %cst_31 {dimension_numbers = #tpu.dot_dimension_numbers<[1], [0], [0], [1], [0, 0, 1, 1], [], []>} : vector<32x128xbf16>, vector<128x384xbf16>, vector<32x384xf32> -> vector<32x384xf32>
    %64 = vector.broadcast %61 : vector<1x384xf32> to vector<32x384xf32>
    %65 = arith.addf %63, %64 : vector<32x384xf32>
    %66 = vector.extract_strided_slice %65 {offsets = [0, 0], sizes = [32, 64], strides = [1, 1]} : vector<32x384xf32> to vector<32x64xf32>
    %67 = vector.shape_cast %66 : vector<32x64xf32> to vector<4x8x64xf32>
    %68 = vector.extract_strided_slice %65 {offsets = [0, 128], sizes = [32, 64], strides = [1, 1]} : vector<32x384xf32> to vector<32x64xf32>
    %69 = vector.shape_cast %68 : vector<32x64xf32> to vector<4x8x64xf32>
    %70 = vector.extract_strided_slice %65 {offsets = [0, 256], sizes = [32, 64], strides = [1, 1]} : vector<32x384xf32> to vector<32x64xf32>
    %71 = vector.shape_cast %70 : vector<32x64xf32> to vector<4x8x64xf32>
    "tpu.trace_start"() <{level = 10 : i32, message = "bqd,bkd->bqk"}> : () -> ()
    %cst_32 = arith.constant dense<0.000000e+00> : vector<4x8x8xf32>
    %72 = tpu.matmul %67, %69, %cst_32 {dimension_numbers = #tpu.dot_dimension_numbers<[2], [2], [1], [1], [0, 0, 0, 1, 1, 1], [0], [0]>} : vector<4x8x64xf32>, vector<4x8x64xf32>, vector<4x8x8xf32> -> vector<4x8x8xf32>
    "tpu.trace_stop"() : () -> ()
    %cst_33 = arith.constant 1.250000e-01 : f32
    %73 = vector.broadcast %cst_33 : f32 to vector<4x8x8xf32>
    %74 = arith.mulf %72, %73 : vector<4x8x8xf32>
    %cst_34 = arith.constant -1.000000e+30 : f32
    %75 = vector.broadcast %cst_34 : f32 to vector<4x8x8xf32>
    %76 = arith.select %31, %74, %75 : vector<4x8x8xi1>, vector<4x8x8xf32>
    %cst_35 = arith.constant dense<0xFF800000> : vector<4x8xf32>
    %77 = vector.multi_reduction <maximumf>, %76, %cst_35 [2] : vector<4x8x8xf32> to vector<4x8xf32>
    %78 = vector.shape_cast %77 : vector<4x8xf32> to vector<4x8x1xf32>
    %79 = vector.broadcast %78 : vector<4x8x1xf32> to vector<4x8x8xf32>
    %80 = arith.subf %76, %79 : vector<4x8x8xf32>
    %81 = math.exp %80 : vector<4x8x8xf32>
    %cst_36 = arith.constant dense<0.000000e+00> : vector<4x8xf32>
    %82 = vector.multi_reduction <add>, %81, %cst_36 [2] : vector<4x8x8xf32> to vector<4x8xf32>
    %83 = vector.shape_cast %82 : vector<4x8xf32> to vector<4x8x1xf32>
    %84 = tpu.reciprocal %83 {approx = true} : vector<4x8x1xf32> -> vector<4x8x1xf32>
    %85 = vector.broadcast %84 : vector<4x8x1xf32> to vector<4x8x8xf32>
    %86 = arith.mulf %81, %85 : vector<4x8x8xf32>
    "tpu.trace_start"() <{level = 10 : i32, message = "bqk,bkd->bqd"}> : () -> ()
    %cst_37 = arith.constant dense<0.000000e+00> : vector<4x8x64xf32>
    %87 = tpu.matmul %86, %71, %cst_37 {dimension_numbers = #tpu.dot_dimension_numbers<[2], [1], [1], [2], [0, 0, 0, 1, 1, 2], [0], [0]>} : vector<4x8x8xf32>, vector<4x8x64xf32>, vector<4x8x64xf32> -> vector<4x8x64xf32>
    "tpu.trace_stop"() : () -> ()
    %88 = vector.shape_cast %87 : vector<4x8x64xf32> to vector<32x64xf32>
    %89 = vector.extract_strided_slice %65 {offsets = [0, 64], sizes = [32, 64], strides = [1, 1]} : vector<32x384xf32> to vector<32x64xf32>
    %90 = vector.shape_cast %89 : vector<32x64xf32> to vector<4x8x64xf32>
    %91 = vector.extract_strided_slice %65 {offsets = [0, 192], sizes = [32, 64], strides = [1, 1]} : vector<32x384xf32> to vector<32x64xf32>
    %92 = vector.shape_cast %91 : vector<32x64xf32> to vector<4x8x64xf32>
    %93 = vector.extract_strided_slice %65 {offsets = [0, 320], sizes = [32, 64], strides = [1, 1]} : vector<32x384xf32> to vector<32x64xf32>
    %94 = vector.shape_cast %93 : vector<32x64xf32> to vector<4x8x64xf32>
    "tpu.trace_start"() <{level = 10 : i32, message = "bqd,bkd->bqk"}> : () -> ()
    %cst_38 = arith.constant dense<0.000000e+00> : vector<4x8x8xf32>
    %95 = tpu.matmul %90, %92, %cst_38 {dimension_numbers = #tpu.dot_dimension_numbers<[2], [2], [1], [1], [0, 0, 0, 1, 1, 1], [0], [0]>} : vector<4x8x64xf32>, vector<4x8x64xf32>, vector<4x8x8xf32> -> vector<4x8x8xf32>
    "tpu.trace_stop"() : () -> ()
    %cst_39 = arith.constant 1.250000e-01 : f32
    %96 = vector.broadcast %cst_39 : f32 to vector<4x8x8xf32>
    %97 = arith.mulf %95, %96 : vector<4x8x8xf32>
    %cst_40 = arith.constant -1.000000e+30 : f32
    %98 = vector.broadcast %cst_40 : f32 to vector<4x8x8xf32>
    %99 = arith.select %31, %97, %98 : vector<4x8x8xi1>, vector<4x8x8xf32>
    %cst_41 = arith.constant dense<0xFF800000> : vector<4x8xf32>
    %100 = vector.multi_reduction <maximumf>, %99, %cst_41 [2] : vector<4x8x8xf32> to vector<4x8xf32>
    %101 = vector.shape_cast %100 : vector<4x8xf32> to vector<4x8x1xf32>
    %102 = vector.broadcast %101 : vector<4x8x1xf32> to vector<4x8x8xf32>
    %103 = arith.subf %99, %102 : vector<4x8x8xf32>
    %104 = math.exp %103 : vector<4x8x8xf32>
    %cst_42 = arith.constant dense<0.000000e+00> : vector<4x8xf32>
    %105 = vector.multi_reduction <add>, %104, %cst_42 [2] : vector<4x8x8xf32> to vector<4x8xf32>
    %106 = vector.shape_cast %105 : vector<4x8xf32> to vector<4x8x1xf32>
    %107 = tpu.reciprocal %106 {approx = true} : vector<4x8x1xf32> -> vector<4x8x1xf32>
    %108 = vector.broadcast %107 : vector<4x8x1xf32> to vector<4x8x8xf32>
    %109 = arith.mulf %104, %108 : vector<4x8x8xf32>
    "tpu.trace_start"() <{level = 10 : i32, message = "bqk,bkd->bqd"}> : () -> ()
    %cst_43 = arith.constant dense<0.000000e+00> : vector<4x8x64xf32>
    %110 = tpu.matmul %109, %94, %cst_43 {dimension_numbers = #tpu.dot_dimension_numbers<[2], [1], [1], [2], [0, 0, 0, 1, 1, 2], [0], [0]>} : vector<4x8x8xf32>, vector<4x8x64xf32>, vector<4x8x64xf32> -> vector<4x8x64xf32>
    "tpu.trace_stop"() : () -> ()
    %111 = vector.shape_cast %110 : vector<4x8x64xf32> to vector<32x64xf32>
    %112 = tpu.concatenate %88, %111 in 1 : vector<32x64xf32>, vector<32x64xf32> -> vector<32x128xf32>
    %c0_44 = arith.constant 0 : index
    %c0_45 = arith.constant 0 : index
    %c0_46 = arith.constant 0 : index
    %113 = vector.load %arg10[%c0_44, %c0_45, %c0_46] : memref<2x128x128xbf16, #tpu.memory_space<vmem>>, vector<1x128x128xbf16>
    %114 = vector.shape_cast %113 : vector<1x128x128xbf16> to vector<128x128xbf16>
    %c0_47 = arith.constant 0 : index
    %c0_48 = arith.constant 0 : index
    %c0_49 = arith.constant 0 : index
    %115 = vector.load %arg11[%c0_47, %c0_48, %c0_49] : memref<2x1x128xf32, #tpu.memory_space<vmem>>, vector<1x1x128xf32>
    %116 = vector.shape_cast %115 : vector<1x1x128xf32> to vector<1x128xf32>
    %117 = arith.truncf %112 : vector<32x128xf32> to vector<32x128xbf16>
    %cst_50 = arith.constant dense<0.000000e+00> : vector<32x128xf32>
    %118 = tpu.matmul %117, %114, %cst_50 {dimension_numbers = #tpu.dot_dimension_numbers<[1], [0], [0], [1], [0, 0, 1, 1], [], []>} : vector<32x128xbf16>, vector<128x128xbf16>, vector<32x128xf32> -> vector<32x128xf32>
    %119 = vector.broadcast %116 : vector<1x128xf32> to vector<32x128xf32>
    %120 = arith.addf %118, %119 : vector<32x128xf32>
    %121 = arith.addf %28, %120 : vector<32x128xf32>
    %c0_51 = arith.constant 0 : index
    %c0_52 = arith.constant 0 : index
    %c0_53 = arith.constant 0 : index
    %122 = vector.load %arg12[%c0_51, %c0_52, %c0_53] : memref<2x1x128xf32, #tpu.memory_space<vmem>>, vector<1x1x128xf32>
    %123 = vector.shape_cast %122 : vector<1x1x128xf32> to vector<1x128xf32>
    %c0_54 = arith.constant 0 : index
    %c0_55 = arith.constant 0 : index
    %c0_56 = arith.constant 0 : index
    %124 = vector.load %arg13[%c0_54, %c0_55, %c0_56] : memref<2x1x128xf32, #tpu.memory_space<vmem>>, vector<1x1x128xf32>
    %125 = vector.shape_cast %124 : vector<1x1x128xf32> to vector<1x128xf32>
    %cst_57 = arith.constant dense<0.000000e+00> : vector<32xf32>
    %126 = vector.multi_reduction <add>, %121, %cst_57 [1] : vector<32x128xf32> to vector<32xf32>
    %127 = vector.shape_cast %126 : vector<32xf32> to vector<32x1xf32>
    %cst_58 = arith.constant 1.280000e+02 : f32
    %128 = vector.broadcast %cst_58 : f32 to vector<32x1xf32>
    %129 = arith.divf %127, %128 : vector<32x1xf32>
    %130 = vector.broadcast %129 : vector<32x1xf32> to vector<32x128xf32>
    %131 = arith.subf %121, %130 : vector<32x128xf32>
    %132 = arith.mulf %131, %131 : vector<32x128xf32>
    %cst_59 = arith.constant dense<0.000000e+00> : vector<32xf32>
    %133 = vector.multi_reduction <add>, %132, %cst_59 [1] : vector<32x128xf32> to vector<32xf32>
    %134 = vector.shape_cast %133 : vector<32xf32> to vector<32x1xf32>
    %cst_60 = arith.constant 1.280000e+02 : f32
    %135 = vector.broadcast %cst_60 : f32 to vector<32x1xf32>
    %136 = arith.divf %134, %135 : vector<32x1xf32>
    %137 = vector.broadcast %129 : vector<32x1xf32> to vector<32x128xf32>
    %138 = arith.subf %121, %137 : vector<32x128xf32>
    %cst_61 = arith.constant 9.99999974E-6 : f32
    %139 = vector.broadcast %cst_61 : f32 to vector<32x1xf32>
    %140 = arith.addf %136, %139 : vector<32x1xf32>
    %141 = math.rsqrt %140 : vector<32x1xf32>
    %142 = vector.broadcast %141 : vector<32x1xf32> to vector<32x128xf32>
    %143 = arith.mulf %138, %142 : vector<32x128xf32>
    %144 = vector.broadcast %123 : vector<1x128xf32> to vector<32x128xf32>
    %145 = arith.mulf %143, %144 : vector<32x128xf32>
    %146 = vector.broadcast %125 : vector<1x128xf32> to vector<32x128xf32>
    %147 = arith.addf %145, %146 : vector<32x128xf32>
    %c0_62 = arith.constant 0 : index
    %c0_63 = arith.constant 0 : index
    %c0_64 = arith.constant 0 : index
    %148 = vector.load %arg14[%c0_62, %c0_63, %c0_64] : memref<2x128x512xbf16, #tpu.memory_space<vmem>>, vector<1x128x512xbf16>
    %149 = vector.shape_cast %148 : vector<1x128x512xbf16> to vector<128x512xbf16>
    %c0_65 = arith.constant 0 : index
    %c0_66 = arith.constant 0 : index
    %c0_67 = arith.constant 0 : index
    %150 = vector.load %arg15[%c0_65, %c0_66, %c0_67] : memref<2x1x512xf32, #tpu.memory_space<vmem>>, vector<1x1x512xf32>
    %151 = vector.shape_cast %150 : vector<1x1x512xf32> to vector<1x512xf32>
    %152 = arith.truncf %147 : vector<32x128xf32> to vector<32x128xbf16>
    %cst_68 = arith.constant dense<0.000000e+00> : vector<32x512xf32>
    %153 = tpu.matmul %152, %149, %cst_68 {dimension_numbers = #tpu.dot_dimension_numbers<[1], [0], [0], [1], [0, 0, 1, 1], [], []>} : vector<32x128xbf16>, vector<128x512xbf16>, vector<32x512xf32> -> vector<32x512xf32>
    %154 = vector.broadcast %151 : vector<1x512xf32> to vector<32x512xf32>
    %155 = arith.addf %153, %154 : vector<32x512xf32>
    %cst_69 = arith.constant 1.702000e+00 : f32
    %156 = vector.broadcast %cst_69 : f32 to vector<32x512xf32>
    %157 = arith.mulf %156, %155 : vector<32x512xf32>
    %158 = arith.negf %157 : vector<32x512xf32>
    %159 = math.exp %158 : vector<32x512xf32>
    %cst_70 = arith.constant 1.000000e+00 : f32
    %160 = vector.broadcast %cst_70 : f32 to vector<32x512xf32>
    %161 = arith.addf %160, %159 : vector<32x512xf32>
    %162 = arith.divf %160, %161 : vector<32x512xf32>
    %163 = arith.mulf %155, %162 : vector<32x512xf32>
    %c0_71 = arith.constant 0 : index
    %c0_72 = arith.constant 0 : index
    %c0_73 = arith.constant 0 : index
    %164 = vector.load %arg16[%c0_71, %c0_72, %c0_73] : memref<2x512x128xbf16, #tpu.memory_space<vmem>>, vector<1x512x128xbf16>
    %165 = vector.shape_cast %164 : vector<1x512x128xbf16> to vector<512x128xbf16>
    %c0_74 = arith.constant 0 : index
    %c0_75 = arith.constant 0 : index
    %c0_76 = arith.constant 0 : index
    %166 = vector.load %arg17[%c0_74, %c0_75, %c0_76] : memref<2x1x128xf32, #tpu.memory_space<vmem>>, vector<1x1x128xf32>
    %167 = vector.shape_cast %166 : vector<1x1x128xf32> to vector<1x128xf32>
    %168 = arith.truncf %163 : vector<32x512xf32> to vector<32x512xbf16>
    %cst_77 = arith.constant dense<0.000000e+00> : vector<32x128xf32>
    %169 = tpu.matmul %168, %165, %cst_77 {dimension_numbers = #tpu.dot_dimension_numbers<[1], [0], [0], [1], [0, 0, 1, 1], [], []>} : vector<32x512xbf16>, vector<512x128xbf16>, vector<32x128xf32> -> vector<32x128xf32>
    %170 = vector.broadcast %167 : vector<1x128xf32> to vector<32x128xf32>
    %171 = arith.addf %169, %170 : vector<32x128xf32>
    %172 = arith.addf %121, %171 : vector<32x128xf32>
    %c1 = arith.constant 1 : index
    %c0_78 = arith.constant 0 : index
    %c0_79 = arith.constant 0 : index
    %173 = vector.load %arg6[%c1, %c0_78, %c0_79] : memref<2x1x128xf32, #tpu.memory_space<vmem>>, vector<1x1x128xf32>
    %174 = vector.shape_cast %173 : vector<1x1x128xf32> to vector<1x128xf32>
    %c1_80 = arith.constant 1 : index
    %c0_81 = arith.constant 0 : index
    %c0_82 = arith.constant 0 : index
    %175 = vector.load %arg7[%c1_80, %c0_81, %c0_82] : memref<2x1x128xf32, #tpu.memory_space<vmem>>, vector<1x1x128xf32>
    %176 = vector.shape_cast %175 : vector<1x1x128xf32> to vector<1x128xf32>
    %cst_83 = arith.constant dense<0.000000e+00> : vector<32xf32>
    %177 = vector.multi_reduction <add>, %172, %cst_83 [1] : vector<32x128xf32> to vector<32xf32>
    %178 = vector.shape_cast %177 : vector<32xf32> to vector<32x1xf32>
    %cst_84 = arith.constant 1.280000e+02 : f32
    %179 = vector.broadcast %cst_84 : f32 to vector<32x1xf32>
    %180 = arith.divf %178, %179 : vector<32x1xf32>
    %181 = vector.broadcast %180 : vector<32x1xf32> to vector<32x128xf32>
    %182 = arith.subf %172, %181 : vector<32x128xf32>
    %183 = arith.mulf %182, %182 : vector<32x128xf32>
    %cst_85 = arith.constant dense<0.000000e+00> : vector<32xf32>
    %184 = vector.multi_reduction <add>, %183, %cst_85 [1] : vector<32x128xf32> to vector<32xf32>
    %185 = vector.shape_cast %184 : vector<32xf32> to vector<32x1xf32>
    %cst_86 = arith.constant 1.280000e+02 : f32
    %186 = vector.broadcast %cst_86 : f32 to vector<32x1xf32>
    %187 = arith.divf %185, %186 : vector<32x1xf32>
    %188 = vector.broadcast %180 : vector<32x1xf32> to vector<32x128xf32>
    %189 = arith.subf %172, %188 : vector<32x128xf32>
    %cst_87 = arith.constant 9.99999974E-6 : f32
    %190 = vector.broadcast %cst_87 : f32 to vector<32x1xf32>
    %191 = arith.addf %187, %190 : vector<32x1xf32>
    %192 = math.rsqrt %191 : vector<32x1xf32>
    %193 = vector.broadcast %192 : vector<32x1xf32> to vector<32x128xf32>
    %194 = arith.mulf %189, %193 : vector<32x128xf32>
    %195 = vector.broadcast %174 : vector<1x128xf32> to vector<32x128xf32>
    %196 = arith.mulf %194, %195 : vector<32x128xf32>
    %197 = vector.broadcast %176 : vector<1x128xf32> to vector<32x128xf32>
    %198 = arith.addf %196, %197 : vector<32x128xf32>
    %c1_88 = arith.constant 1 : index
    %c0_89 = arith.constant 0 : index
    %c0_90 = arith.constant 0 : index
    %199 = vector.load %arg8[%c1_88, %c0_89, %c0_90] : memref<2x128x384xbf16, #tpu.memory_space<vmem>>, vector<1x128x384xbf16>
    %200 = vector.shape_cast %199 : vector<1x128x384xbf16> to vector<128x384xbf16>
    %c1_91 = arith.constant 1 : index
    %c0_92 = arith.constant 0 : index
    %c0_93 = arith.constant 0 : index
    %201 = vector.load %arg9[%c1_91, %c0_92, %c0_93] : memref<2x1x384xf32, #tpu.memory_space<vmem>>, vector<1x1x384xf32>
    %202 = vector.shape_cast %201 : vector<1x1x384xf32> to vector<1x384xf32>
    %203 = arith.truncf %198 : vector<32x128xf32> to vector<32x128xbf16>
    %cst_94 = arith.constant dense<0.000000e+00> : vector<32x384xf32>
    %204 = tpu.matmul %203, %200, %cst_94 {dimension_numbers = #tpu.dot_dimension_numbers<[1], [0], [0], [1], [0, 0, 1, 1], [], []>} : vector<32x128xbf16>, vector<128x384xbf16>, vector<32x384xf32> -> vector<32x384xf32>
    %205 = vector.broadcast %202 : vector<1x384xf32> to vector<32x384xf32>
    %206 = arith.addf %204, %205 : vector<32x384xf32>
    %207 = vector.extract_strided_slice %206 {offsets = [0, 0], sizes = [32, 64], strides = [1, 1]} : vector<32x384xf32> to vector<32x64xf32>
    %208 = vector.shape_cast %207 : vector<32x64xf32> to vector<4x8x64xf32>
    %209 = vector.extract_strided_slice %206 {offsets = [0, 128], sizes = [32, 64], strides = [1, 1]} : vector<32x384xf32> to vector<32x64xf32>
    %210 = vector.shape_cast %209 : vector<32x64xf32> to vector<4x8x64xf32>
    %211 = vector.extract_strided_slice %206 {offsets = [0, 256], sizes = [32, 64], strides = [1, 1]} : vector<32x384xf32> to vector<32x64xf32>
    %212 = vector.shape_cast %211 : vector<32x64xf32> to vector<4x8x64xf32>
    "tpu.trace_start"() <{level = 10 : i32, message = "bqd,bkd->bqk"}> : () -> ()
    %cst_95 = arith.constant dense<0.000000e+00> : vector<4x8x8xf32>
    %213 = tpu.matmul %208, %210, %cst_95 {dimension_numbers = #tpu.dot_dimension_numbers<[2], [2], [1], [1], [0, 0, 0, 1, 1, 1], [0], [0]>} : vector<4x8x64xf32>, vector<4x8x64xf32>, vector<4x8x8xf32> -> vector<4x8x8xf32>
    "tpu.trace_stop"() : () -> ()
    %cst_96 = arith.constant 1.250000e-01 : f32
    %214 = vector.broadcast %cst_96 : f32 to vector<4x8x8xf32>
    %215 = arith.mulf %213, %214 : vector<4x8x8xf32>
    %cst_97 = arith.constant -1.000000e+30 : f32
    %216 = vector.broadcast %cst_97 : f32 to vector<4x8x8xf32>
    %217 = arith.select %31, %215, %216 : vector<4x8x8xi1>, vector<4x8x8xf32>
    %cst_98 = arith.constant dense<0xFF800000> : vector<4x8xf32>
    %218 = vector.multi_reduction <maximumf>, %217, %cst_98 [2] : vector<4x8x8xf32> to vector<4x8xf32>
    %219 = vector.shape_cast %218 : vector<4x8xf32> to vector<4x8x1xf32>
    %220 = vector.broadcast %219 : vector<4x8x1xf32> to vector<4x8x8xf32>
    %221 = arith.subf %217, %220 : vector<4x8x8xf32>
    %222 = math.exp %221 : vector<4x8x8xf32>
    %cst_99 = arith.constant dense<0.000000e+00> : vector<4x8xf32>
    %223 = vector.multi_reduction <add>, %222, %cst_99 [2] : vector<4x8x8xf32> to vector<4x8xf32>
    %224 = vector.shape_cast %223 : vector<4x8xf32> to vector<4x8x1xf32>
    %225 = tpu.reciprocal %224 {approx = true} : vector<4x8x1xf32> -> vector<4x8x1xf32>
    %226 = vector.broadcast %225 : vector<4x8x1xf32> to vector<4x8x8xf32>
    %227 = arith.mulf %222, %226 : vector<4x8x8xf32>
    "tpu.trace_start"() <{level = 10 : i32, message = "bqk,bkd->bqd"}> : () -> ()
    %cst_100 = arith.constant dense<0.000000e+00> : vector<4x8x64xf32>
    %228 = tpu.matmul %227, %212, %cst_100 {dimension_numbers = #tpu.dot_dimension_numbers<[2], [1], [1], [2], [0, 0, 0, 1, 1, 2], [0], [0]>} : vector<4x8x8xf32>, vector<4x8x64xf32>, vector<4x8x64xf32> -> vector<4x8x64xf32>
    "tpu.trace_stop"() : () -> ()
    %229 = vector.shape_cast %228 : vector<4x8x64xf32> to vector<32x64xf32>
    %230 = vector.extract_strided_slice %206 {offsets = [0, 64], sizes = [32, 64], strides = [1, 1]} : vector<32x384xf32> to vector<32x64xf32>
    %231 = vector.shape_cast %230 : vector<32x64xf32> to vector<4x8x64xf32>
    %232 = vector.extract_strided_slice %206 {offsets = [0, 192], sizes = [32, 64], strides = [1, 1]} : vector<32x384xf32> to vector<32x64xf32>
    %233 = vector.shape_cast %232 : vector<32x64xf32> to vector<4x8x64xf32>
    %234 = vector.extract_strided_slice %206 {offsets = [0, 320], sizes = [32, 64], strides = [1, 1]} : vector<32x384xf32> to vector<32x64xf32>
    %235 = vector.shape_cast %234 : vector<32x64xf32> to vector<4x8x64xf32>
    "tpu.trace_start"() <{level = 10 : i32, message = "bqd,bkd->bqk"}> : () -> ()
    %cst_101 = arith.constant dense<0.000000e+00> : vector<4x8x8xf32>
    %236 = tpu.matmul %231, %233, %cst_101 {dimension_numbers = #tpu.dot_dimension_numbers<[2], [2], [1], [1], [0, 0, 0, 1, 1, 1], [0], [0]>} : vector<4x8x64xf32>, vector<4x8x64xf32>, vector<4x8x8xf32> -> vector<4x8x8xf32>
    "tpu.trace_stop"() : () -> ()
    %cst_102 = arith.constant 1.250000e-01 : f32
    %237 = vector.broadcast %cst_102 : f32 to vector<4x8x8xf32>
    %238 = arith.mulf %236, %237 : vector<4x8x8xf32>
    %cst_103 = arith.constant -1.000000e+30 : f32
    %239 = vector.broadcast %cst_103 : f32 to vector<4x8x8xf32>
    %240 = arith.select %31, %238, %239 : vector<4x8x8xi1>, vector<4x8x8xf32>
    %cst_104 = arith.constant dense<0xFF800000> : vector<4x8xf32>
    %241 = vector.multi_reduction <maximumf>, %240, %cst_104 [2] : vector<4x8x8xf32> to vector<4x8xf32>
    %242 = vector.shape_cast %241 : vector<4x8xf32> to vector<4x8x1xf32>
    %243 = vector.broadcast %242 : vector<4x8x1xf32> to vector<4x8x8xf32>
    %244 = arith.subf %240, %243 : vector<4x8x8xf32>
    %245 = math.exp %244 : vector<4x8x8xf32>
    %cst_105 = arith.constant dense<0.000000e+00> : vector<4x8xf32>
    %246 = vector.multi_reduction <add>, %245, %cst_105 [2] : vector<4x8x8xf32> to vector<4x8xf32>
    %247 = vector.shape_cast %246 : vector<4x8xf32> to vector<4x8x1xf32>
    %248 = tpu.reciprocal %247 {approx = true} : vector<4x8x1xf32> -> vector<4x8x1xf32>
    %249 = vector.broadcast %248 : vector<4x8x1xf32> to vector<4x8x8xf32>
    %250 = arith.mulf %245, %249 : vector<4x8x8xf32>
    "tpu.trace_start"() <{level = 10 : i32, message = "bqk,bkd->bqd"}> : () -> ()
    %cst_106 = arith.constant dense<0.000000e+00> : vector<4x8x64xf32>
    %251 = tpu.matmul %250, %235, %cst_106 {dimension_numbers = #tpu.dot_dimension_numbers<[2], [1], [1], [2], [0, 0, 0, 1, 1, 2], [0], [0]>} : vector<4x8x8xf32>, vector<4x8x64xf32>, vector<4x8x64xf32> -> vector<4x8x64xf32>
    "tpu.trace_stop"() : () -> ()
    %252 = vector.shape_cast %251 : vector<4x8x64xf32> to vector<32x64xf32>
    %253 = tpu.concatenate %229, %252 in 1 : vector<32x64xf32>, vector<32x64xf32> -> vector<32x128xf32>
    %c1_107 = arith.constant 1 : index
    %c0_108 = arith.constant 0 : index
    %c0_109 = arith.constant 0 : index
    %254 = vector.load %arg10[%c1_107, %c0_108, %c0_109] : memref<2x128x128xbf16, #tpu.memory_space<vmem>>, vector<1x128x128xbf16>
    %255 = vector.shape_cast %254 : vector<1x128x128xbf16> to vector<128x128xbf16>
    %c1_110 = arith.constant 1 : index
    %c0_111 = arith.constant 0 : index
    %c0_112 = arith.constant 0 : index
    %256 = vector.load %arg11[%c1_110, %c0_111, %c0_112] : memref<2x1x128xf32, #tpu.memory_space<vmem>>, vector<1x1x128xf32>
    %257 = vector.shape_cast %256 : vector<1x1x128xf32> to vector<1x128xf32>
    %258 = arith.truncf %253 : vector<32x128xf32> to vector<32x128xbf16>
    %cst_113 = arith.constant dense<0.000000e+00> : vector<32x128xf32>
    %259 = tpu.matmul %258, %255, %cst_113 {dimension_numbers = #tpu.dot_dimension_numbers<[1], [0], [0], [1], [0, 0, 1, 1], [], []>} : vector<32x128xbf16>, vector<128x128xbf16>, vector<32x128xf32> -> vector<32x128xf32>
    %260 = vector.broadcast %257 : vector<1x128xf32> to vector<32x128xf32>
    %261 = arith.addf %259, %260 : vector<32x128xf32>
    %262 = arith.addf %172, %261 : vector<32x128xf32>
    %c1_114 = arith.constant 1 : index
    %c0_115 = arith.constant 0 : index
    %c0_116 = arith.constant 0 : index
    %263 = vector.load %arg12[%c1_114, %c0_115, %c0_116] : memref<2x1x128xf32, #tpu.memory_space<vmem>>, vector<1x1x128xf32>
    %264 = vector.shape_cast %263 : vector<1x1x128xf32> to vector<1x128xf32>
    %c1_117 = arith.constant 1 : index
    %c0_118 = arith.constant 0 : index
    %c0_119 = arith.constant 0 : index
    %265 = vector.load %arg13[%c1_117, %c0_118, %c0_119] : memref<2x1x128xf32, #tpu.memory_space<vmem>>, vector<1x1x128xf32>
    %266 = vector.shape_cast %265 : vector<1x1x128xf32> to vector<1x128xf32>
    %cst_120 = arith.constant dense<0.000000e+00> : vector<32xf32>
    %267 = vector.multi_reduction <add>, %262, %cst_120 [1] : vector<32x128xf32> to vector<32xf32>
    %268 = vector.shape_cast %267 : vector<32xf32> to vector<32x1xf32>
    %cst_121 = arith.constant 1.280000e+02 : f32
    %269 = vector.broadcast %cst_121 : f32 to vector<32x1xf32>
    %270 = arith.divf %268, %269 : vector<32x1xf32>
    %271 = vector.broadcast %270 : vector<32x1xf32> to vector<32x128xf32>
    %272 = arith.subf %262, %271 : vector<32x128xf32>
    %273 = arith.mulf %272, %272 : vector<32x128xf32>
    %cst_122 = arith.constant dense<0.000000e+00> : vector<32xf32>
    %274 = vector.multi_reduction <add>, %273, %cst_122 [1] : vector<32x128xf32> to vector<32xf32>
    %275 = vector.shape_cast %274 : vector<32xf32> to vector<32x1xf32>
    %cst_123 = arith.constant 1.280000e+02 : f32
    %276 = vector.broadcast %cst_123 : f32 to vector<32x1xf32>
    %277 = arith.divf %275, %276 : vector<32x1xf32>
    %278 = vector.broadcast %270 : vector<32x1xf32> to vector<32x128xf32>
    %279 = arith.subf %262, %278 : vector<32x128xf32>
    %cst_124 = arith.constant 9.99999974E-6 : f32
    %280 = vector.broadcast %cst_124 : f32 to vector<32x1xf32>
    %281 = arith.addf %277, %280 : vector<32x1xf32>
    %282 = math.rsqrt %281 : vector<32x1xf32>
    %283 = vector.broadcast %282 : vector<32x1xf32> to vector<32x128xf32>
    %284 = arith.mulf %279, %283 : vector<32x128xf32>
    %285 = vector.broadcast %264 : vector<1x128xf32> to vector<32x128xf32>
    %286 = arith.mulf %284, %285 : vector<32x128xf32>
    %287 = vector.broadcast %266 : vector<1x128xf32> to vector<32x128xf32>
    %288 = arith.addf %286, %287 : vector<32x128xf32>
    %c1_125 = arith.constant 1 : index
    %c0_126 = arith.constant 0 : index
    %c0_127 = arith.constant 0 : index
    %289 = vector.load %arg14[%c1_125, %c0_126, %c0_127] : memref<2x128x512xbf16, #tpu.memory_space<vmem>>, vector<1x128x512xbf16>
    %290 = vector.shape_cast %289 : vector<1x128x512xbf16> to vector<128x512xbf16>
    %c1_128 = arith.constant 1 : index
    %c0_129 = arith.constant 0 : index
    %c0_130 = arith.constant 0 : index
    %291 = vector.load %arg15[%c1_128, %c0_129, %c0_130] : memref<2x1x512xf32, #tpu.memory_space<vmem>>, vector<1x1x512xf32>
    %292 = vector.shape_cast %291 : vector<1x1x512xf32> to vector<1x512xf32>
    %293 = arith.truncf %288 : vector<32x128xf32> to vector<32x128xbf16>
    %cst_131 = arith.constant dense<0.000000e+00> : vector<32x512xf32>
    %294 = tpu.matmul %293, %290, %cst_131 {dimension_numbers = #tpu.dot_dimension_numbers<[1], [0], [0], [1], [0, 0, 1, 1], [], []>} : vector<32x128xbf16>, vector<128x512xbf16>, vector<32x512xf32> -> vector<32x512xf32>
    %295 = vector.broadcast %292 : vector<1x512xf32> to vector<32x512xf32>
    %296 = arith.addf %294, %295 : vector<32x512xf32>
    %cst_132 = arith.constant 1.702000e+00 : f32
    %297 = vector.broadcast %cst_132 : f32 to vector<32x512xf32>
    %298 = arith.mulf %297, %296 : vector<32x512xf32>
    %299 = arith.negf %298 : vector<32x512xf32>
    %300 = math.exp %299 : vector<32x512xf32>
    %cst_133 = arith.constant 1.000000e+00 : f32
    %301 = vector.broadcast %cst_133 : f32 to vector<32x512xf32>
    %302 = arith.addf %301, %300 : vector<32x512xf32>
    %303 = arith.divf %301, %302 : vector<32x512xf32>
    %304 = arith.mulf %296, %303 : vector<32x512xf32>
    %c1_134 = arith.constant 1 : index
    %c0_135 = arith.constant 0 : index
    %c0_136 = arith.constant 0 : index
    %305 = vector.load %arg16[%c1_134, %c0_135, %c0_136] : memref<2x512x128xbf16, #tpu.memory_space<vmem>>, vector<1x512x128xbf16>
    %306 = vector.shape_cast %305 : vector<1x512x128xbf16> to vector<512x128xbf16>
    %c1_137 = arith.constant 1 : index
    %c0_138 = arith.constant 0 : index
    %c0_139 = arith.constant 0 : index
    %307 = vector.load %arg17[%c1_137, %c0_138, %c0_139] : memref<2x1x128xf32, #tpu.memory_space<vmem>>, vector<1x1x128xf32>
    %308 = vector.shape_cast %307 : vector<1x1x128xf32> to vector<1x128xf32>
    %309 = arith.truncf %304 : vector<32x512xf32> to vector<32x512xbf16>
    %cst_140 = arith.constant dense<0.000000e+00> : vector<32x128xf32>
    %310 = tpu.matmul %309, %306, %cst_140 {dimension_numbers = #tpu.dot_dimension_numbers<[1], [0], [0], [1], [0, 0, 1, 1], [], []>} : vector<32x512xbf16>, vector<512x128xbf16>, vector<32x128xf32> -> vector<32x128xf32>
    %311 = vector.broadcast %308 : vector<1x128xf32> to vector<32x128xf32>
    %312 = arith.addf %310, %311 : vector<32x128xf32>
    %313 = arith.addf %262, %312 : vector<32x128xf32>
    %314 = vector.shape_cast %313 : vector<32x128xf32> to vector<4x8x128xf32>
    %315 = vector.extract_strided_slice %314 {offsets = [0, 0, 0], sizes = [4, 1, 128], strides = [1, 1, 1]} : vector<4x8x128xf32> to vector<4x1x128xf32>
    %316 = vector.shape_cast %315 : vector<4x1x128xf32> to vector<4x128xf32>
    %c0_141 = arith.constant 0 : index
    %c0_142 = arith.constant 0 : index
    %317 = vector.load %arg18[%c0_141, %c0_142] : memref<1x128xf32, #tpu.memory_space<vmem>>, vector<1x128xf32>
    %c0_143 = arith.constant 0 : index
    %c0_144 = arith.constant 0 : index
    %318 = vector.load %arg19[%c0_143, %c0_144] : memref<1x128xf32, #tpu.memory_space<vmem>>, vector<1x128xf32>
    %cst_145 = arith.constant dense<0.000000e+00> : vector<4xf32>
    %319 = vector.multi_reduction <add>, %316, %cst_145 [1] : vector<4x128xf32> to vector<4xf32>
    %320 = vector.shape_cast %319 : vector<4xf32> to vector<4x1xf32>
    %cst_146 = arith.constant 1.280000e+02 : f32
    %321 = vector.broadcast %cst_146 : f32 to vector<4x1xf32>
    %322 = arith.divf %320, %321 : vector<4x1xf32>
    %323 = vector.broadcast %322 : vector<4x1xf32> to vector<4x128xf32>
    %324 = arith.subf %316, %323 : vector<4x128xf32>
    %325 = arith.mulf %324, %324 : vector<4x128xf32>
    %cst_147 = arith.constant dense<0.000000e+00> : vector<4xf32>
    %326 = vector.multi_reduction <add>, %325, %cst_147 [1] : vector<4x128xf32> to vector<4xf32>
    %327 = vector.shape_cast %326 : vector<4xf32> to vector<4x1xf32>
    %cst_148 = arith.constant 1.280000e+02 : f32
    %328 = vector.broadcast %cst_148 : f32 to vector<4x1xf32>
    %329 = arith.divf %327, %328 : vector<4x1xf32>
    %330 = vector.broadcast %322 : vector<4x1xf32> to vector<4x128xf32>
    %331 = arith.subf %316, %330 : vector<4x128xf32>
    %cst_149 = arith.constant 9.99999974E-6 : f32
    %332 = vector.broadcast %cst_149 : f32 to vector<4x1xf32>
    %333 = arith.addf %329, %332 : vector<4x1xf32>
    %334 = math.rsqrt %333 : vector<4x1xf32>
    %335 = vector.broadcast %334 : vector<4x1xf32> to vector<4x128xf32>
    %336 = arith.mulf %331, %335 : vector<4x128xf32>
    %337 = vector.broadcast %317 : vector<1x128xf32> to vector<4x128xf32>
    %338 = arith.mulf %336, %337 : vector<4x128xf32>
    %339 = vector.broadcast %318 : vector<1x128xf32> to vector<4x128xf32>
    %340 = arith.addf %338, %339 : vector<4x128xf32>
    %c0_150 = arith.constant 0 : index
    %c0_151 = arith.constant 0 : index
    %341 = vector.load %arg20[%c0_150, %c0_151] : memref<128x128xbf16, #tpu.memory_space<vmem>>, vector<128x128xbf16>
    %342 = arith.truncf %340 : vector<4x128xf32> to vector<4x128xbf16>
    %cst_152 = arith.constant dense<0.000000e+00> : vector<4x128xf32>
    %343 = tpu.matmul %342, %341, %cst_152 {dimension_numbers = #tpu.dot_dimension_numbers<[1], [0], [0], [1], [0, 0, 1, 1], [], []>} : vector<4x128xbf16>, vector<128x128xbf16>, vector<4x128xf32> -> vector<4x128xf32>
    %c0_153 = arith.constant 0 : index
    %c0_154 = arith.constant 0 : index
    %344 = vector.load %arg21[%c0_153, %c0_154] : memref<4x128xf32, #tpu.memory_space<vmem>>, vector<4x128xf32>
    tpu.vector_store %arg21[%c0_153, %c0_154], %343 {strides = array<i32>} : memref<4x128xf32, #tpu.memory_space<vmem>>, vector<4x128xf32>,
    return
  }
  func.func @transform_0(%arg0: i32) -> (i32, i32) {
    %c0_i32 = arith.constant 0 : i32
    %c0_i32_0 = arith.constant 0 : i32
    return %arg0, %c0_i32 : i32, i32
  }
  func.func @transform_1(%arg0: i32) -> (i32, i32) {
    %c0_i32 = arith.constant 0 : i32
    %c0_i32_0 = arith.constant 0 : i32
    %c0_i32_1 = arith.constant 0 : i32
    return %c0_i32, %c0_i32_0 : i32, i32
  }
  func.func @transform_2(%arg0: i32) -> (i32, i32) {
    %c0_i32 = arith.constant 0 : i32
    %c0_i32_0 = arith.constant 0 : i32
    %c0_i32_1 = arith.constant 0 : i32
    return %c0_i32, %c0_i32_0 : i32, i32
  }
  func.func @transform_3(%arg0: i32) -> (i32, i32) {
    %c0_i32 = arith.constant 0 : i32
    %c0_i32_0 = arith.constant 0 : i32
    %c0_i32_1 = arith.constant 0 : i32
    return %c0_i32, %c0_i32_0 : i32, i32
  }
  func.func @transform_4(%arg0: i32) -> (i32, i32) {
    %c0_i32 = arith.constant 0 : i32
    %c0_i32_0 = arith.constant 0 : i32
    %c0_i32_1 = arith.constant 0 : i32
    return %c0_i32, %c0_i32_0 : i32, i32
  }
  func.func @transform_5(%arg0: i32) -> (i32, i32, i32) {
    %c0_i32 = arith.constant 0 : i32
    %c0_i32_0 = arith.constant 0 : i32
    %c0_i32_1 = arith.constant 0 : i32
    %c0_i32_2 = arith.constant 0 : i32
    return %c0_i32, %c0_i32_0, %c0_i32_1 : i32, i32, i32
  }
  func.func @transform_6(%arg0: i32) -> (i32, i32, i32) {
    %c0_i32 = arith.constant 0 : i32
    %c0_i32_0 = arith.constant 0 : i32
    %c0_i32_1 = arith.constant 0 : i32
    %c0_i32_2 = arith.constant 0 : i32
    return %c0_i32, %c0_i32_0, %c0_i32_1 : i32, i32, i32
  }
  func.func @transform_7(%arg0: i32) -> (i32, i32, i32) {
    %c0_i32 = arith.constant 0 : i32
    %c0_i32_0 = arith.constant 0 : i32
    %c0_i32_1 = arith.constant 0 : i32
    %c0_i32_2 = arith.constant 0 : i32
    return %c0_i32, %c0_i32_0, %c0_i32_1 : i32, i32, i32
  }
  func.func @transform_8(%arg0: i32) -> (i32, i32, i32) {
    %c0_i32 = arith.constant 0 : i32
    %c0_i32_0 = arith.constant 0 : i32
    %c0_i32_1 = arith.constant 0 : i32
    %c0_i32_2 = arith.constant 0 : i32
    return %c0_i32, %c0_i32_0, %c0_i32_1 : i32, i32, i32
  }
  func.func @transform_9(%arg0: i32) -> (i32, i32, i32) {
    %c0_i32 = arith.constant 0 : i32
    %c0_i32_0 = arith.constant 0 : i32
    %c0_i32_1 = arith.constant 0 : i32
    %c0_i32_2 = arith.constant 0 : i32
    return %c0_i32, %c0_i32_0, %c0_i32_1 : i32, i32, i32
  }
  func.func @transform_10(%arg0: i32) -> (i32, i32, i32) {
    %c0_i32 = arith.constant 0 : i32
    %c0_i32_0 = arith.constant 0 : i32
    %c0_i32_1 = arith.constant 0 : i32
    %c0_i32_2 = arith.constant 0 : i32
    return %c0_i32, %c0_i32_0, %c0_i32_1 : i32, i32, i32
  }
  func.func @transform_11(%arg0: i32) -> (i32, i32, i32) {
    %c0_i32 = arith.constant 0 : i32
    %c0_i32_0 = arith.constant 0 : i32
    %c0_i32_1 = arith.constant 0 : i32
    %c0_i32_2 = arith.constant 0 : i32
    return %c0_i32, %c0_i32_0, %c0_i32_1 : i32, i32, i32
  }
  func.func @transform_12(%arg0: i32) -> (i32, i32, i32) {
    %c0_i32 = arith.constant 0 : i32
    %c0_i32_0 = arith.constant 0 : i32
    %c0_i32_1 = arith.constant 0 : i32
    %c0_i32_2 = arith.constant 0 : i32
    return %c0_i32, %c0_i32_0, %c0_i32_1 : i32, i32, i32
  }
  func.func @transform_13(%arg0: i32) -> (i32, i32, i32) {
    %c0_i32 = arith.constant 0 : i32
    %c0_i32_0 = arith.constant 0 : i32
    %c0_i32_1 = arith.constant 0 : i32
    %c0_i32_2 = arith.constant 0 : i32
    return %c0_i32, %c0_i32_0, %c0_i32_1 : i32, i32, i32
  }
  func.func @transform_14(%arg0: i32) -> (i32, i32, i32) {
    %c0_i32 = arith.constant 0 : i32
    %c0_i32_0 = arith.constant 0 : i32
    %c0_i32_1 = arith.constant 0 : i32
    %c0_i32_2 = arith.constant 0 : i32
    return %c0_i32, %c0_i32_0, %c0_i32_1 : i32, i32, i32
  }
  func.func @transform_15(%arg0: i32) -> (i32, i32, i32) {
    %c0_i32 = arith.constant 0 : i32
    %c0_i32_0 = arith.constant 0 : i32
    %c0_i32_1 = arith.constant 0 : i32
    %c0_i32_2 = arith.constant 0 : i32
    return %c0_i32, %c0_i32_0, %c0_i32_1 : i32, i32, i32
  }
  func.func @transform_16(%arg0: i32) -> (i32, i32, i32) {
    %c0_i32 = arith.constant 0 : i32
    %c0_i32_0 = arith.constant 0 : i32
    %c0_i32_1 = arith.constant 0 : i32
    %c0_i32_2 = arith.constant 0 : i32
    return %c0_i32, %c0_i32_0, %c0_i32_1 : i32, i32, i32
  }
  func.func @transform_17(%arg0: i32) -> (i32, i32) {
    %c0_i32 = arith.constant 0 : i32
    %c0_i32_0 = arith.constant 0 : i32
    %c0_i32_1 = arith.constant 0 : i32
    return %c0_i32, %c0_i32_0 : i32, i32
  }
  func.func @transform_18(%arg0: i32) -> (i32, i32) {
    %c0_i32 = arith.constant 0 : i32
    %c0_i32_0 = arith.constant 0 : i32
    %c0_i32_1 = arith.constant 0 : i32
    return %c0_i32, %c0_i32_0 : i32, i32
  }
  func.func @transform_19(%arg0: i32) -> (i32, i32) {
    %c0_i32 = arith.constant 0 : i32
    %c0_i32_0 = arith.constant 0 : i32
    %c0_i32_1 = arith.constant 0 : i32
    return %c0_i32, %c0_i32_0 : i32, i32
  }
  func.func @transform_20(%arg0: i32) -> (i32, i32) {
    %c0_i32 = arith.constant 0 : i32
    %c0_i32_0 = arith.constant 0 : i32
    return %arg0, %c0_i32 : i32, i32
  }
}

</mosaic_0001>

<llo_original>
// kernel: image_clip_forward.1
$region0: #{image_clip_forward.1}
  #allocation0 [shape = 'u32[]', space=smem, size = 0x4, offset = 0x4, fixed_abs, tag = 'smem constant byte address 0x4 - core index']
  #allocation1 [shape = 'u32[72,128]{1,0:T(1,128)}', space=vmem, size = 0x9000, scoped, tag = 'internal scratch']
  %s0 = inlined_call_operand.vmem [shape: bf16[32,768], index: 0, kind: input, shape index: {}]
  %s1 = inlined_call_operand.vmem [shape: f32[32,128], index: 1, kind: input, shape index: {}]
  %s2 = inlined_call_operand.vmem [shape: bf16[768,128], index: 2, kind: input, shape index: {}]
  %s3 = inlined_call_operand.vmem [shape: f32[1,128], index: 3, kind: input, shape index: {}]
  %s4 = inlined_call_operand.vmem [shape: f32[1,128], index: 4, kind: input, shape index: {}]
  %s5 = inlined_call_operand.vmem [shape: f32[2,1,128], index: 5, kind: input, shape index: {}]
  %s6 = inlined_call_operand.vmem [shape: f32[2,1,128], index: 6, kind: input, shape index: {}]
  %s7 = inlined_call_operand.vmem [shape: bf16[2,128,384], index: 7, kind: input, shape index: {}]
  %s8 = inlined_call_operand.vmem [shape: f32[2,1,384], index: 8, kind: input, shape index: {}]
  %s9 = inlined_call_operand.vmem [shape: bf16[2,128,128], index: 9, kind: input, shape index: {}]
  %s10 = inlined_call_operand.vmem [shape: f32[2,1,128], index: 10, kind: input, shape index: {}]
  %s11 = inlined_call_operand.vmem [shape: f32[2,1,128], index: 11, kind: input, shape index: {}]
  %s12 = inlined_call_operand.vmem [shape: f32[2,1,128], index: 12, kind: input, shape index: {}]
  %s13 = inlined_call_operand.vmem [shape: bf16[2,128,512], index: 13, kind: input, shape index: {}]
  %s14 = inlined_call_operand.vmem [shape: f32[2,1,512], index: 14, kind: input, shape index: {}]
  %s15 = inlined_call_operand.vmem [shape: bf16[2,512,128], index: 15, kind: input, shape index: {}]
  %s16 = inlined_call_operand.vmem [shape: f32[2,1,128], index: 16, kind: input, shape index: {}]
  %s17 = inlined_call_operand.vmem [shape: f32[1,128], index: 17, kind: input, shape index: {}]
  %s18 = inlined_call_operand.vmem [shape: f32[1,128], index: 18, kind: input, shape index: {}]
  %s19 = inlined_call_operand.vmem [shape: bf16[128,128], index: 19, kind: input, shape index: {}]
  %s20 = inlined_call_operand.vmem [shape: f32[4,128], index: 20, kind: output, shape index: {}]
  %s21 = sld [smem:[#allocation0]]
  $region90: #{image_clip_forward.1} parent=0
    _
  %s23 = ssub.s32 1, %s21
  %s24 = scalar_select 0, %s23, %s21
  // Predicated region
  $region2: #{image_clip_forward.1} parent=0 // pred_check
    _
  $region3: #{image_clip_forward.1} parent=0 // pred_check_branch
    %26 = sbr.rel (0) target = $region5
  $region4: #{image_clip_forward.1} parent=0 // pred_region
    _
  $region5: #{image_clip_forward.1} parent=0 // pred_fallthru
    _
  // Predicated region
  $region6: #{image_clip_forward.1} parent=0 // pred_check
    _
  $region7: #{image_clip_forward.1} parent=0 // pred_check_branch
    %28 = sbr.rel (0) target = $region9
  $region8: #{image_clip_forward.1} parent=0 // pred_region
    _
  $region9: #{image_clip_forward.1} parent=0 // pred_fallthru
    _
  // Predicated region
  $region10: #{image_clip_forward.1} parent=0 // pred_check
    _
  $region11: #{image_clip_forward.1} parent=0 // pred_check_branch
    %30 = sbr.rel (0) target = $region13
  $region12: #{image_clip_forward.1} parent=0 // pred_region
    _
  $region13: #{image_clip_forward.1} parent=0 // pred_fallthru
    _
  // Predicated region
  $region14: #{image_clip_forward.1} parent=0 // pred_check
    _
  $region15: #{image_clip_forward.1} parent=0 // pred_check_branch
    %32 = sbr.rel (0) target = $region17
  $region16: #{image_clip_forward.1} parent=0 // pred_region
    _
  $region17: #{image_clip_forward.1} parent=0 // pred_fallthru
    _
  // Predicated region
  $region18: #{image_clip_forward.1} parent=0 // pred_check
    _
  $region19: #{image_clip_forward.1} parent=0 // pred_check_branch
    %34 = sbr.rel (0) target = $region21
  $region20: #{image_clip_forward.1} parent=0 // pred_region
    _
  $region21: #{image_clip_forward.1} parent=0 // pred_fallthru
    _
  // Predicated region
  $region22: #{image_clip_forward.1} parent=0 // pred_check
    _
  $region23: #{image_clip_forward.1} parent=0 // pred_check_branch
    %36 = sbr.rel (0) target = $region25
  $region24: #{image_clip_forward.1} parent=0 // pred_region
    _
  $region25: #{image_clip_forward.1} parent=0 // pred_fallthru
    _
  // Predicated region
  $region26: #{image_clip_forward.1} parent=0 // pred_check
    _
  $region27: #{image_clip_forward.1} parent=0 // pred_check_branch
    %38 = sbr.rel (0) target = $region29
  $region28: #{image_clip_forward.1} parent=0 // pred_region
    _
  $region29: #{image_clip_forward.1} parent=0 // pred_fallthru
    _
  // Predicated region
  $region30: #{image_clip_forward.1} parent=0 // pred_check
    _
  $region31: #{image_clip_forward.1} parent=0 // pred_check_branch
    %40 = sbr.rel (0) target = $region33
  $region32: #{image_clip_forward.1} parent=0 // pred_region
    _
  $region33: #{image_clip_forward.1} parent=0 // pred_fallthru
    _
  // Predicated region
  $region34: #{image_clip_forward.1} parent=0 // pred_check
    _
  $region35: #{image_clip_forward.1} parent=0 // pred_check_branch
    %42 = sbr.rel (0) target = $region37
  $region36: #{image_clip_forward.1} parent=0 // pred_region
    _
  $region37: #{image_clip_forward.1} parent=0 // pred_fallthru
    _
  // Predicated region
  $region38: #{image_clip_forward.1} parent=0 // pred_check
    _
  $region39: #{image_clip_forward.1} parent=0 // pred_check_branch
    %44 = sbr.rel (0) target = $region41
  $region40: #{image_clip_forward.1} parent=0 // pred_region
    _
  $region41: #{image_clip_forward.1} parent=0 // pred_fallthru
    _
  // Predicated region
  $region42: #{image_clip_forward.1} parent=0 // pred_check
    _
  $region43: #{image_clip_forward.1} parent=0 // pred_check_branch
    %46 = sbr.rel (0) target = $region45
  $region44: #{image_clip_forward.1} parent=0 // pred_region
    _
  $region45: #{image_clip_forward.1} parent=0 // pred_fallthru
    _
  // Predicated region
  $region46: #{image_clip_forward.1} parent=0 // pred_check
    _
  $region47: #{image_clip_forward.1} parent=0 // pred_check_branch
    %48 = sbr.rel (0) target = $region49
  $region48: #{image_clip_forward.1} parent=0 // pred_region
    _
  $region49: #{image_clip_forward.1} parent=0 // pred_fallthru
    _
  // Predicated region
  $region50: #{image_clip_forward.1} parent=0 // pred_check
    _
  $region51: #{image_clip_forward.1} parent=0 // pred_check_branch
    %50 = sbr.rel (0) target = $region53
  $region52: #{image_clip_forward.1} parent=0 // pred_region
    _
  $region53: #{image_clip_forward.1} parent=0 // pred_fallthru
    _
  // Predicated region
  $region54: #{image_clip_forward.1} parent=0 // pred_check
    _
  $region55: #{image_clip_forward.1} parent=0 // pred_check_branch
    %52 = sbr.rel (0) target = $region57
  $region56: #{image_clip_forward.1} parent=0 // pred_region
    _
  $region57: #{image_clip_forward.1} parent=0 // pred_fallthru
    _
  // Predicated region
  $region58: #{image_clip_forward.1} parent=0 // pred_check
    _
  $region59: #{image_clip_forward.1} parent=0 // pred_check_branch
    %54 = sbr.rel (0) target = $region61
  $region60: #{image_clip_forward.1} parent=0 // pred_region
    _
  $region61: #{image_clip_forward.1} parent=0 // pred_fallthru
    _
  // Predicated region
  $region62: #{image_clip_forward.1} parent=0 // pred_check
    _
  $region63: #{image_clip_forward.1} parent=0 // pred_check_branch
    %56 = sbr.rel (0) target = $region65
  $region64: #{image_clip_forward.1} parent=0 // pred_region
    _
  $region65: #{image_clip_forward.1} parent=0 // pred_fallthru
    _
  // Predicated region
  $region66: #{image_clip_forward.1} parent=0 // pred_check
    _
  $region67: #{image_clip_forward.1} parent=0 // pred_check_branch
    %58 = sbr.rel (0) target = $region69
  $region68: #{image_clip_forward.1} parent=0 // pred_region
    _
  $region69: #{image_clip_forward.1} parent=0 // pred_fallthru
    _
  // Predicated region
  $region70: #{image_clip_forward.1} parent=0 // pred_check
    _
  $region71: #{image_clip_forward.1} parent=0 // pred_check_branch
    %60 = sbr.rel (0) target = $region73
  $region72: #{image_clip_forward.1} parent=0 // pred_region
    _
  $region73: #{image_clip_forward.1} parent=0 // pred_fallthru
    _
  // Predicated region
  $region74: #{image_clip_forward.1} parent=0 // pred_check
    _
  $region75: #{image_clip_forward.1} parent=0 // pred_check_branch
    %62 = sbr.rel (0) target = $region77
  $region76: #{image_clip_forward.1} parent=0 // pred_region
    _
  $region77: #{image_clip_forward.1} parent=0 // pred_fallthru
    _
  // Predicated region
  $region78: #{image_clip_forward.1} parent=0 // pred_check
    _
  $region79: #{image_clip_forward.1} parent=0 // pred_check_branch
    %64 = sbr.rel (0) target = $region81
  $region80: #{image_clip_forward.1} parent=0 // pred_region
    _
  $region81: #{image_clip_forward.1} parent=0 // pred_fallthru
    _
  %v65 = vld [vmem:[%s0] sm:$0xff]
  %v66 = vld [vmem:[%s0 + $0x8] sm:$0xff]
  %v67 = vld [vmem:[%s0 + $0x10] sm:$0xff]
  %v68 = vld [vmem:[%s0 + $0x18] sm:$0xff]
  %v69 = vld [vmem:[%s0 + $0x20] sm:$0xff]
  %v70 = vld [vmem:[%s0 + $0x28] sm:$0xff]
  %v71 = vld [vmem:[%s0 + $0x30] sm:$0xff]
  %v72 = vld [vmem:[%s0 + $0x38] sm:$0xff]
  %v73 = vld [vmem:[%s0 + $0x40] sm:$0xff]
  %v74 = vld [vmem:[%s0 + $0x48] sm:$0xff]
  %v75 = vld [vmem:[%s0 + $0x50] sm:$0xff]
  %v76 = vld [vmem:[%s0 + $0x58] sm:$0xff]
  %v77 = vld [vmem:[%s2] sm:$0xf]
  %v78 = vld [vmem:[%s2 + $0x4] sm:$0xf]
  %v79 = vld [vmem:[%s2 + $0x8] sm:$0xf]
  %v80 = vld [vmem:[%s2 + $0xc] sm:$0xf]
  %v81 = vld [vmem:[%s2 + $0x10] sm:$0xf]
  %v82 = vld [vmem:[%s2 + $0x14] sm:$0xf]
  %v83 = vld [vmem:[%s2 + $0x18] sm:$0xf]
  %v84 = vld [vmem:[%s2 + $0x1c] sm:$0xf]
  %v85 = vld [vmem:[%s2 + $0x20] sm:$0xf]
  %v86 = vld [vmem:[%s2 + $0x24] sm:$0xf]
  %v87 = vld [vmem:[%s2 + $0x28] sm:$0xf]
  %v88 = vld [vmem:[%s2 + $0x2c] sm:$0xf]
  %v89 = vld [vmem:[%s2 + $0x30] sm:$0xf]
  %v90 = vld [vmem:[%s2 + $0x34] sm:$0xf]
  %v91 = vld [vmem:[%s2 + $0x38] sm:$0xf]
  %v92 = vld [vmem:[%s2 + $0x3c] sm:$0xf]
  %v93 = vld [vmem:[%s2 + $0x40] sm:$0xf]
  %v94 = vld [vmem:[%s2 + $0x44] sm:$0xf]
  %v95 = vld [vmem:[%s2 + $0x48] sm:$0xf]
  %v96 = vld [vmem:[%s2 + $0x4c] sm:$0xf]
  %v97 = vld [vmem:[%s2 + $0x50] sm:$0xf]
  %v98 = vld [vmem:[%s2 + $0x54] sm:$0xf]
  %v99 = vld [vmem:[%s2 + $0x58] sm:$0xf]
  %v100 = vld [vmem:[%s2 + $0x5c] sm:$0xf]
  %v101 = vld [vmem:[%s2 + $0x60] sm:$0xf]
  %v102 = vld [vmem:[%s2 + $0x64] sm:$0xf]
  %v103 = vld [vmem:[%s2 + $0x68] sm:$0xf]
  %v104 = vld [vmem:[%s2 + $0x6c] sm:$0xf]
  %v105 = vld [vmem:[%s2 + $0x70] sm:$0xf]
  %v106 = vld [vmem:[%s2 + $0x74] sm:$0xf]
  %v107 = vld [vmem:[%s2 + $0x78] sm:$0xf]
  %v108 = vld [vmem:[%s2 + $0x7c] sm:$0xf]
  %v109 = vld [vmem:[%s2 + $0x80] sm:$0xf]
  %v110 = vld [vmem:[%s2 + $0x84] sm:$0xf]
  %v111 = vld [vmem:[%s2 + $0x88] sm:$0xf]
  %v112 = vld [vmem:[%s2 + $0x8c] sm:$0xf]
  %v113 = vld [vmem:[%s2 + $0x90] sm:$0xf]
  %v114 = vld [vmem:[%s2 + $0x94] sm:$0xf]
  %v115 = vld [vmem:[%s2 + $0x98] sm:$0xf]
  %v116 = vld [vmem:[%s2 + $0x9c] sm:$0xf]
  %v117 = vld [vmem:[%s2 + $0xa0] sm:$0xf]
  %v118 = vld [vmem:[%s2 + $0xa4] sm:$0xf]
  %v119 = vld [vmem:[%s2 + $0xa8] sm:$0xf]
  %v120 = vld [vmem:[%s2 + $0xac] sm:$0xf]
  %v121 = vld [vmem:[%s2 + $0xb0] sm:$0xf]
  %v122 = vld [vmem:[%s2 + $0xb4] sm:$0xf]
  %v123 = vld [vmem:[%s2 + $0xb8] sm:$0xf]
  %v124 = vld [vmem:[%s2 + $0xbc] sm:$0xf]
  %v125 = vld [vmem:[%s2 + $0xc0] sm:$0xf]
  %v126 = vld [vmem:[%s2 + $0xc4] sm:$0xf]
  %v127 = vld [vmem:[%s2 + $0xc8] sm:$0xf]
  %v128 = vld [vmem:[%s2 + $0xcc] sm:$0xf]
  %v129 = vld [vmem:[%s2 + $0xd0] sm:$0xf]
  %v130 = vld [vmem:[%s2 + $0xd4] sm:$0xf]
  %v131 = vld [vmem:[%s2 + $0xd8] sm:$0xf]
  %v132 = vld [vmem:[%s2 + $0xdc] sm:$0xf]
  %v133 = vld [vmem:[%s2 + $0xe0] sm:$0xf]
  %v134 = vld [vmem:[%s2 + $0xe4] sm:$0xf]
  %v135 = vld [vmem:[%s2 + $0xe8] sm:$0xf]
  %v136 = vld [vmem:[%s2 + $0xec] sm:$0xf]
  %v137 = vld [vmem:[%s2 + $0xf0] sm:$0xf]
  %v138 = vld [vmem:[%s2 + $0xf4] sm:$0xf]
  %v139 = vld [vmem:[%s2 + $0xf8] sm:$0xf]
  %v140 = vld [vmem:[%s2 + $0xfc] sm:$0xf]
  %v141 = vld [vmem:[%s2 + $0x100] sm:$0xf]
  %v142 = vld [vmem:[%s2 + $0x104] sm:$0xf]
  %v143 = vld [vmem:[%s2 + $0x108] sm:$0xf]
  %v144 = vld [vmem:[%s2 + $0x10c] sm:$0xf]
  %v145 = vld [vmem:[%s2 + $0x110] sm:$0xf]
  %v146 = vld [vmem:[%s2 + $0x114] sm:$0xf]
  %v147 = vld [vmem:[%s2 + $0x118] sm:$0xf]
  %v148 = vld [vmem:[%s2 + $0x11c] sm:$0xf]
  %v149 = vld [vmem:[%s2 + $0x120] sm:$0xf]
  %v150 = vld [vmem:[%s2 + $0x124] sm:$0xf]
  %v151 = vld [vmem:[%s2 + $0x128] sm:$0xf]
  %v152 = vld [vmem:[%s2 + $0x12c] sm:$0xf]
  %v153 = vld [vmem:[%s2 + $0x130] sm:$0xf]
  %v154 = vld [vmem:[%s2 + $0x134] sm:$0xf]
  %v155 = vld [vmem:[%s2 + $0x138] sm:$0xf]
  %v156 = vld [vmem:[%s2 + $0x13c] sm:$0xf]
  %v157 = vld [vmem:[%s2 + $0x140] sm:$0xf]
  %v158 = vld [vmem:[%s2 + $0x144] sm:$0xf]
  %v159 = vld [vmem:[%s2 + $0x148] sm:$0xf]
  %v160 = vld [vmem:[%s2 + $0x14c] sm:$0xf]
  %v161 = vld [vmem:[%s2 + $0x150] sm:$0xf]
  %v162 = vld [vmem:[%s2 + $0x154] sm:$0xf]
  %v163 = vld [vmem:[%s2 + $0x158] sm:$0xf]
  %v164 = vld [vmem:[%s2 + $0x15c] sm:$0xf]
  %v165 = vld [vmem:[%s2 + $0x160] sm:$0xf]
  %v166 = vld [vmem:[%s2 + $0x164] sm:$0xf]
  %v167 = vld [vmem:[%s2 + $0x168] sm:$0xf]
  %v168 = vld [vmem:[%s2 + $0x16c] sm:$0xf]
  %v169 = vld [vmem:[%s2 + $0x170] sm:$0xf]
  %v170 = vld [vmem:[%s2 + $0x174] sm:$0xf]
  %v171 = vld [vmem:[%s2 + $0x178] sm:$0xf]
  %v172 = vld [vmem:[%s2 + $0x17c] sm:$0xf]
  %v173 = vld [vmem:[%s1] sm:$0xff]
  %v174 = vld [vmem:[%s1 + $0x8] sm:$0xff]
  %v175 = vld [vmem:[%s1 + $0x10] sm:$0xff]
  %v176 = vld [vmem:[%s1 + $0x18] sm:$0xff]
  %v189 = vunpack.c.l.b16 %v65
  %v190 = vunpack.c.h.b16 %v65
  %v191 = vunpack.c.l.b16 %v66
  %v192 = vunpack.c.h.b16 %v66
  %v193 = vunpack.c.l.b16 %v67
  %v194 = vunpack.c.h.b16 %v67
  %v195 = vunpack.c.l.b16 %v68
  %v196 = vunpack.c.h.b16 %v68
  %v197 = vunpack.c.l.b16 %v69
  %v198 = vunpack.c.h.b16 %v69
  %v199 = vunpack.c.l.b16 %v70
  %v200 = vunpack.c.h.b16 %v70
  %v201 = vunpack.c.l.b16 %v71
  %v202 = vunpack.c.h.b16 %v71
  %v203 = vunpack.c.l.b16 %v72
  %v204 = vunpack.c.h.b16 %v72
  %v205 = vunpack.c.l.b16 %v73
  %v206 = vunpack.c.h.b16 %v73
  %v207 = vunpack.c.l.b16 %v74
  %v208 = vunpack.c.h.b16 %v74
  %v209 = vunpack.c.l.b16 %v75
  %v210 = vunpack.c.h.b16 %v75
  %v211 = vunpack.c.l.b16 %v76
  %v212 = vunpack.c.h.b16 %v76
  %v213 = vpack.c.b16 %v195, %v189
  %v214 = vpack.c.b16 %v196, %v190
  %v215 = vpack.c.b16 %v197, %v191
  %v216 = vpack.c.b16 %v198, %v192
  %v217 = vpack.c.b16 %v199, %v193
  %v218 = vpack.c.b16 %v200, %v194
  %v219 = vpack.c.b16 %v207, %v201
  %v220 = vpack.c.b16 %v208, %v202
  %v221 = vpack.c.b16 %v209, %v203
  %v222 = vpack.c.b16 %v210, %v204
  %v223 = vpack.c.b16 %v211, %v205
  %v224 = vpack.c.b16 %v212, %v206
  %v333 = vunpack.c.l.b16 %v77
  %v334 = vunpack.c.l.b16 %v78
  %v335 = vunpack.c.l.b16 %v79
  %v336 = vunpack.c.l.b16 %v80
  %v337 = vunpack.c.l.b16 %v81
  %v338 = vunpack.c.l.b16 %v82
  %v339 = vunpack.c.l.b16 %v83
  %v340 = vunpack.c.l.b16 %v84
  %v341 = vunpack.c.l.b16 %v85
  %v342 = vunpack.c.l.b16 %v86
  %v343 = vunpack.c.l.b16 %v87
  %v344 = vunpack.c.l.b16 %v88
  %v345 = vunpack.c.l.b16 %v89
  %v346 = vunpack.c.l.b16 %v90
  %v347 = vunpack.c.l.b16 %v91
  %v348 = vunpack.c.l.b16 %v92
  %v349 = vunpack.c.l.b16 %v93
  %v350 = vunpack.c.l.b16 %v94
  %v351 = vunpack.c.l.b16 %v95
  %v352 = vunpack.c.l.b16 %v96
  %v353 = vunpack.c.l.b16 %v97
  %v354 = vunpack.c.l.b16 %v98
  %v355 = vunpack.c.l.b16 %v99
  %v356 = vunpack.c.l.b16 %v100
  %v357 = vunpack.c.l.b16 %v101
  %v358 = vunpack.c.l.b16 %v102
  %v359 = vunpack.c.l.b16 %v103
  %v360 = vunpack.c.l.b16 %v104
  %v361 = vunpack.c.l.b16 %v105
  %v362 = vunpack.c.l.b16 %v106
  %v363 = vunpack.c.l.b16 %v107
  %v364 = vunpack.c.l.b16 %v108
  %v365 = vunpack.c.l.b16 %v109
  %v366 = vunpack.c.l.b16 %v110
  %v367 = vunpack.c.l.b16 %v111
  %v368 = vunpack.c.l.b16 %v112
  %v369 = vunpack.c.l.b16 %v113
  %v370 = vunpack.c.l.b16 %v114
  %v371 = vunpack.c.l.b16 %v115
  %v372 = vunpack.c.l.b16 %v116
  %v373 = vunpack.c.l.b16 %v117
  %v374 = vunpack.c.l.b16 %v118
  %v375 = vunpack.c.l.b16 %v119
  %v376 = vunpack.c.l.b16 %v120
  %v377 = vunpack.c.l.b16 %v121
  %v378 = vunpack.c.l.b16 %v122
  %v379 = vunpack.c.l.b16 %v123
  %v380 = vunpack.c.l.b16 %v124
  %v381 = vunpack.c.l.b16 %v125
  %v382 = vunpack.c.l.b16 %v126
  %v383 = vunpack.c.l.b16 %v127
  %v384 = vunpack.c.l.b16 %v128
  %v385 = vunpack.c.l.b16 %v129
  %v386 = vunpack.c.l.b16 %v130
  %v387 = vunpack.c.l.b16 %v131
  %v388 = vunpack.c.l.b16 %v132
  %v389 = vunpack.c.l.b16 %v133
  %v390 = vunpack.c.l.b16 %v134
  %v391 = vunpack.c.l.b16 %v135
  %v392 = vunpack.c.l.b16 %v136
  %v393 = vunpack.c.l.b16 %v137
  %v394 = vunpack.c.l.b16 %v138
  %v395 = vunpack.c.l.b16 %v139
  %v396 = vunpack.c.l.b16 %v140
  %v397 = vunpack.c.l.b16 %v141
  %v398 = vunpack.c.l.b16 %v142
  %v399 = vunpack.c.l.b16 %v143
  %v400 = vunpack.c.l.b16 %v144
  %v401 = vunpack.c.l.b16 %v145
  %v402 = vunpack.c.l.b16 %v146
  %v403 = vunpack.c.l.b16 %v147
  %v404 = vunpack.c.l.b16 %v148
  %v405 = vunpack.c.l.b16 %v149
  %v406 = vunpack.c.l.b16 %v150
  %v407 = vunpack.c.l.b16 %v151
  %v408 = vunpack.c.l.b16 %v152
  %v409 = vunpack.c.l.b16 %v153
  %v410 = vunpack.c.l.b16 %v154
  %v411 = vunpack.c.l.b16 %v155
  %v412 = vunpack.c.l.b16 %v156
  %v413 = vunpack.c.l.b16 %v157
  %v414 = vunpack.c.l.b16 %v158
  %v415 = vunpack.c.l.b16 %v159
  %v416 = vunpack.c.l.b16 %v160
  %v417 = vunpack.c.l.b16 %v161
  %v418 = vunpack.c.l.b16 %v162
  %v419 = vunpack.c.l.b16 %v163
  %v420 = vunpack.c.l.b16 %v164
  %v421 = vunpack.c.l.b16 %v165
  %v422 = vunpack.c.l.b16 %v166
  %v423 = vunpack.c.l.b16 %v167
  %v424 = vunpack.c.l.b16 %v168
  %v425 = vunpack.c.l.b16 %v169
  %v426 = vunpack.c.l.b16 %v170
  %v427 = vunpack.c.l.b16 %v171
  %v428 = vunpack.c.l.b16 %v172
  %v429 = vpack.c.b16 %v334, %v333
  %v430 = vpack.c.b16 %v336, %v335
  %v431 = vpack.c.b16 %v338, %v337
  %v432 = vpack.c.b16 %v340, %v339
  %v433 = vpack.c.b16 %v342, %v341
  %v434 = vpack.c.b16 %v344, %v343
  %v435 = vpack.c.b16 %v346, %v345
  %v436 = vpack.c.b16 %v348, %v347
  %v437 = vpack.c.b16 %v350, %v349
  %v438 = vpack.c.b16 %v352, %v351
  %v439 = vpack.c.b16 %v354, %v353
  %v440 = vpack.c.b16 %v356, %v355
  %v441 = vpack.c.b16 %v358, %v357
  %v442 = vpack.c.b16 %v360, %v359
  %v443 = vpack.c.b16 %v362, %v361
  %v444 = vpack.c.b16 %v364, %v363
  %v445 = vpack.c.b16 %v366, %v365
  %v446 = vpack.c.b16 %v368, %v367
  %v447 = vpack.c.b16 %v370, %v369
  %v448 = vpack.c.b16 %v372, %v371
  %v449 = vpack.c.b16 %v374, %v373
  %v450 = vpack.c.b16 %v376, %v375
  %v451 = vpack.c.b16 %v378, %v377
  %v452 = vpack.c.b16 %v380, %v379
  %v453 = vpack.c.b16 %v382, %v381
  %v454 = vpack.c.b16 %v384, %v383
  %v455 = vpack.c.b16 %v386, %v385
  %v456 = vpack.c.b16 %v388, %v387
  %v457 = vpack.c.b16 %v390, %v389
  %v458 = vpack.c.b16 %v392, %v391
  %v459 = vpack.c.b16 %v394, %v393
  %v460 = vpack.c.b16 %v396, %v395
  %v461 = vpack.c.b16 %v398, %v397
  %v462 = vpack.c.b16 %v400, %v399
  %v463 = vpack.c.b16 %v402, %v401
  %v464 = vpack.c.b16 %v404, %v403
  %v465 = vpack.c.b16 %v406, %v405
  %v466 = vpack.c.b16 %v408, %v407
  %v467 = vpack.c.b16 %v410, %v409
  %v468 = vpack.c.b16 %v412, %v411
  %v469 = vpack.c.b16 %v414, %v413
  %v470 = vpack.c.b16 %v416, %v415
  %v471 = vpack.c.b16 %v418, %v417
  %v472 = vpack.c.b16 %v420, %v419
  %v473 = vpack.c.b16 %v422, %v421
  %v474 = vpack.c.b16 %v424, %v423
  %v475 = vpack.c.b16 %v426, %v425
  %v476 = vpack.c.b16 %v428, %v427
  %525 = vmatpush.bf16.msra.mxu0 %v436
  %526 = vmatpush.bf16.msra.mxu0 %v435
  %527 = vmatpush.bf16.msra.mxu0 %v434
  %528 = vmatpush.bf16.msra.mxu0 %v433
  %529 = vmatpush.bf16.msra.mxu0 %v432
  %530 = vmatpush.bf16.msra.mxu0 %v431
  %531 = vmatpush.bf16.msra.mxu0 %v430
  %532 = vmatpush.bf16.msra.mxu0 %v429
  %533 = vmatmul.bf16.gmra.mxu0 %v213
  %v534 = vpop.f32.mrf.mxu0
  %v535 = vadd.f32 %v173, %v534
  %v536 = vpop.f32.mrf.mxu0
  %v537 = vadd.f32 %v174, %v536
  %538 = vmatmul.bf16.gmra.mxu0 %v219
  %v539 = vpop.f32.mrf.mxu0
  %v540 = vadd.f32 %v175, %v539
  %v541 = vpop.f32.mrf.mxu0
  %v542 = vadd.f32 %v176, %v541
  %543 = vdwg.mxu0
  %544 = vmatpush.bf16.msra.mxu0 %v444
  %545 = vmatpush.bf16.msra.mxu0 %v443
  %546 = vmatpush.bf16.msra.mxu0 %v442
  %547 = vmatpush.bf16.msra.mxu0 %v441
  %548 = vmatpush.bf16.msra.mxu0 %v440
  %549 = vmatpush.bf16.msra.mxu0 %v439
  %550 = vmatpush.bf16.msra.mxu0 %v438
  %551 = vmatpush.bf16.msra.mxu0 %v437
  %552 = vmatmul.bf16.gmra.mxu0 %v214
  %v553 = vpop.f32.mrf.mxu0
  %v554 = vadd.f32 %v535, %v553
  %v555 = vpop.f32.mrf.mxu0
  %v556 = vadd.f32 %v537, %v555
  %557 = vmatmul.bf16.gmra.mxu0 %v220
  %v558 = vpop.f32.mrf.mxu0
  %v559 = vadd.f32 %v540, %v558
  %v560 = vpop.f32.mrf.mxu0
  %v561 = vadd.f32 %v542, %v560
  %562 = vdwg.mxu0
  %563 = vmatpush.bf16.msra.mxu0 %v452
  %564 = vmatpush.bf16.msra.mxu0 %v451
  %565 = vmatpush.bf16.msra.mxu0 %v450
  %566 = vmatpush.bf16.msra.mxu0 %v449
  %567 = vmatpush.bf16.msra.mxu0 %v448
  %568 = vmatpush.bf16.msra.mxu0 %v447
  %569 = vmatpush.bf16.msra.mxu0 %v446
  %570 = vmatpush.bf16.msra.mxu0 %v445
  %571 = vmatmul.bf16.gmra.mxu0 %v215
  %v572 = vpop.f32.mrf.mxu0
  %v573 = vadd.f32 %v554, %v572
  %v574 = vpop.f32.mrf.mxu0
  %v575 = vadd.f32 %v556, %v574
  %576 = vmatmul.bf16.gmra.mxu0 %v221
  %v577 = vpop.f32.mrf.mxu0
  %v578 = vadd.f32 %v559, %v577
  %v579 = vpop.f32.mrf.mxu0
  %v580 = vadd.f32 %v561, %v579
  %581 = vdwg.mxu0
  %582 = vmatpush.bf16.msra.mxu0 %v460
  %583 = vmatpush.bf16.msra.mxu0 %v459
  %584 = vmatpush.bf16.msra.mxu0 %v458
  %585 = vmatpush.bf16.msra.mxu0 %v457
  %586 = vmatpush.bf16.msra.mxu0 %v456
  %587 = vmatpush.bf16.msra.mxu0 %v455
  %588 = vmatpush.bf16.msra.mxu0 %v454
  %589 = vmatpush.bf16.msra.mxu0 %v453
  %590 = vmatmul.bf16.gmra.mxu0 %v216
  %v591 = vpop.f32.mrf.mxu0
  %v592 = vadd.f32 %v573, %v591
  %v593 = vpop.f32.mrf.mxu0
  %v594 = vadd.f32 %v575, %v593
  %595 = vmatmul.bf16.gmra.mxu0 %v222
  %v596 = vpop.f32.mrf.mxu0
  %v597 = vadd.f32 %v578, %v596
  %v598 = vpop.f32.mrf.mxu0
  %v599 = vadd.f32 %v580, %v598
  %600 = vdwg.mxu0
  %601 = vmatpush.bf16.msra.mxu0 %v468
  %602 = vmatpush.bf16.msra.mxu0 %v467
  %603 = vmatpush.bf16.msra.mxu0 %v466
  %604 = vmatpush.bf16.msra.mxu0 %v465
  %605 = vmatpush.bf16.msra.mxu0 %v464
  %606 = vmatpush.bf16.msra.mxu0 %v463
  %607 = vmatpush.bf16.msra.mxu0 %v462
  %608 = vmatpush.bf16.msra.mxu0 %v461
  %609 = vmatmul.bf16.gmra.mxu0 %v217
  %v610 = vpop.f32.mrf.mxu0
  %v611 = vadd.f32 %v592, %v610
  %v612 = vpop.f32.mrf.mxu0
  %v613 = vadd.f32 %v594, %v612
  %614 = vmatmul.bf16.gmra.mxu0 %v223
  %v615 = vpop.f32.mrf.mxu0
  %v616 = vadd.f32 %v597, %v615
  %v617 = vpop.f32.mrf.mxu0
  %v618 = vadd.f32 %v599, %v617
  %619 = vdwg.mxu0
  %620 = vmatpush.bf16.msra.mxu0 %v476
  %621 = vmatpush.bf16.msra.mxu0 %v475
  %622 = vmatpush.bf16.msra.mxu0 %v474
  %623 = vmatpush.bf16.msra.mxu0 %v473
  %624 = vmatpush.bf16.msra.mxu0 %v472
  %625 = vmatpush.bf16.msra.mxu0 %v471
  %626 = vmatpush.bf16.msra.mxu0 %v470
  %627 = vmatpush.bf16.msra.mxu0 %v469
  %628 = vmatmul.bf16.gmra.mxu0 %v218
  %v629 = vpop.f32.mrf.mxu0
  %v630 = vadd.f32 %v611, %v629
  %v631 = vpop.f32.mrf.mxu0
  %v632 = vadd.f32 %v613, %v631
  %633 = vmatmul.bf16.gmra.mxu0 %v224
  %v634 = vpop.f32.mrf.mxu0
  %v635 = vadd.f32 %v616, %v634
  %v636 = vpop.f32.mrf.mxu0
  %v637 = vadd.f32 %v618, %v636
  %638 = vdwg.mxu0
  %v639 = vld [vmem:[%s3] sm:$0x1]
  %v640 = vld [vmem:[%s4] sm:$0x1]
  %641 = vadd.xlane.f32.xlu0 %v630
  %v642 = vpop.xlane.xlu0 %641
  %643 = vadd.xlane.f32.xlu0 %v632
  %v644 = vpop.xlane.xlu0 %643
  %645 = vadd.xlane.f32.xlu0 %v635
  %v646 = vpop.xlane.xlu0 %645
  %647 = vadd.xlane.f32.xlu0 %v637
  %v648 = vpop.xlane.xlu0 %647
  %v649 = vrcp.pop 128.0
  %v650 = vmul.f32 128.0, %v649
  %v651 = vsub.f32 1.0, %v650
  %v652 = vmul.f32 %v649, %v651
  %v653 = vadd.f32 %v649, %v652
  %vm654 = vweird.f32 %v649
  %v655 = vsel %vm654, %v649, %v653
  %v656 = vmul.f32 %v642, %v655
  %v657 = vmul.f32 %v644, %v655
  %v658 = vmul.f32 %v646, %v655
  %v659 = vmul.f32 %v648, %v655
  %v660 = vsub.f32 %v630, %v656
  %v661 = vsub.f32 %v632, %v657
  %v662 = vsub.f32 %v635, %v658
  %v663 = vsub.f32 %v637, %v659
  %v664 = vmul.f32 %v660, %v660
  %v665 = vmul.f32 %v661, %v661
  %v666 = vmul.f32 %v662, %v662
  %v667 = vmul.f32 %v663, %v663
  %668 = vadd.xlane.f32.xlu0 %v664
  %v669 = vpop.xlane.xlu0 %668
  %670 = vadd.xlane.f32.xlu0 %v665
  %v671 = vpop.xlane.xlu0 %670
  %672 = vadd.xlane.f32.xlu0 %v666
  %v673 = vpop.xlane.xlu0 %672
  %674 = vadd.xlane.f32.xlu0 %v667
  %v675 = vpop.xlane.xlu0 %674
  %v676 = vmul.f32 %v669, %v655
  %v677 = vmul.f32 %v671, %v655
  %v678 = vmul.f32 %v673, %v655
  %v679 = vmul.f32 %v675, %v655
  %v680 = vadd.f32 %v676, 1e-05
  %v681 = vadd.f32 %v677, 1e-05
  %v682 = vadd.f32 %v678, 1e-05
  %v683 = vadd.f32 %v679, 1e-05
  %v684 = vrsqrt.pop %v680
  %v685 = vmul.f32 %v684, %v680
  %v686 = vmul.f32 %v685, %v684
  %v687 = vmul.f32 0.5, %v686
  %v688 = vsub.f32 1.5, %v687
  %v689 = vmul.f32 %v684, %v688
  %vm690 = vweird.f32 %v680
  %vm691 = vweird.f32 %v684
  %vm692 = vmor %vm690, %vm691
  %v693 = vsel %vm692, %v684, %v689
  %v694 = vrsqrt.pop %v681
  %v695 = vmul.f32 %v694, %v681
  %v696 = vmul.f32 %v695, %v694
  %v697 = vmul.f32 0.5, %v696
  %v698 = vsub.f32 1.5, %v697
  %v699 = vmul.f32 %v694, %v698
  %vm700 = vweird.f32 %v681
  %vm701 = vweird.f32 %v694
  %vm702 = vmor %vm700, %vm701
  %v703 = vsel %vm702, %v694, %v699
  %v704 = vrsqrt.pop %v682
  %v705 = vmul.f32 %v704, %v682
  %v706 = vmul.f32 %v705, %v704
  %v707 = vmul.f32 0.5, %v706
  %v708 = vsub.f32 1.5, %v707
  %v709 = vmul.f32 %v704, %v708
  %vm710 = vweird.f32 %v682
  %vm711 = vweird.f32 %v704
  %vm712 = vmor %vm710, %vm711
  %v713 = vsel %vm712, %v704, %v709
  %v714 = vrsqrt.pop %v683
  %v715 = vmul.f32 %v714, %v683
  %v716 = vmul.f32 %v715, %v714
  %v717 = vmul.f32 0.5, %v716
  %v718 = vsub.f32 1.5, %v717
  %v719 = vmul.f32 %v714, %v718
  %vm720 = vweird.f32 %v683
  %vm721 = vweird.f32 %v714
  %vm722 = vmor %vm720, %vm721
  %v723 = vsel %vm722, %v714, %v719
  %v724 = vmul.f32 %v660, %v693
  %v725 = vmul.f32 %v661, %v703
  %v726 = vmul.f32 %v662, %v713
  %v727 = vmul.f32 %v663, %v723
  %v729 = vperm.slane %v639, 0
  %v731 = vmul.f32 %v724, %v729
  %v732 = vmul.f32 %v725, %v729
  %v733 = vmul.f32 %v726, %v729
  %v734 = vmul.f32 %v727, %v729
  %v736 = vperm.slane %v640, 0
  %v738 = vadd.f32 %v731, %v736
  %v739 = vadd.f32 %v732, %v736
  %v740 = vadd.f32 %v733, %v736
  %v741 = vadd.f32 %v734, %v736
  %v742 = vlaneseq
  %v743 = vand.u32 %v742, 127
  %vm744 = vcmp.lt.s32.totalorder %v743, 5
  %v745 = vld [vmem:[%s5] sm:$0x1]
  %v746 = vld [vmem:[%s6] sm:$0x1]
  %747 = vadd.xlane.f32.xlu0 %v738
  %v748 = vpop.xlane.xlu0 %747
  %749 = vadd.xlane.f32.xlu0 %v739
  %v750 = vpop.xlane.xlu0 %749
  %751 = vadd.xlane.f32.xlu0 %v740
  %v752 = vpop.xlane.xlu0 %751
  %753 = vadd.xlane.f32.xlu0 %v741
  %v754 = vpop.xlane.xlu0 %753
  %v755 = vmul.f32 %v748, %v655
  %v756 = vmul.f32 %v750, %v655
  %v757 = vmul.f32 %v752, %v655
  %v758 = vmul.f32 %v754, %v655
  %v759 = vsub.f32 %v738, %v755
  %v760 = vsub.f32 %v739, %v756
  %v761 = vsub.f32 %v740, %v757
  %v762 = vsub.f32 %v741, %v758
  %v763 = vmul.f32 %v759, %v759
  %v764 = vmul.f32 %v760, %v760
  %v765 = vmul.f32 %v761, %v761
  %v766 = vmul.f32 %v762, %v762
  %767 = vadd.xlane.f32.xlu0 %v763
  %v768 = vpop.xlane.xlu0 %767
  %769 = vadd.xlane.f32.xlu0 %v764
  %v770 = vpop.xlane.xlu0 %769
  %771 = vadd.xlane.f32.xlu0 %v765
  %v772 = vpop.xlane.xlu0 %771
  %773 = vadd.xlane.f32.xlu0 %v766
  %v774 = vpop.xlane.xlu0 %773
  %v775 = vmul.f32 %v768, %v655
  %v776 = vmul.f32 %v770, %v655
  %v777 = vmul.f32 %v772, %v655
  %v778 = vmul.f32 %v774, %v655
  %v779 = vadd.f32 %v775, 1e-05
  %v780 = vadd.f32 %v776, 1e-05
  %v781 = vadd.f32 %v777, 1e-05
  %v782 = vadd.f32 %v778, 1e-05
  %v783 = vrsqrt.pop %v779
  %v784 = vmul.f32 %v783, %v779
  %v785 = vmul.f32 %v784, %v783
  %v786 = vmul.f32 0.5, %v785
  %v787 = vsub.f32 1.5, %v786
  %v788 = vmul.f32 %v783, %v787
  %vm789 = vweird.f32 %v779
  %vm790 = vweird.f32 %v783
  %vm791 = vmor %vm789, %vm790
  %v792 = vsel %vm791, %v783, %v788
  %v793 = vrsqrt.pop %v780
  %v794 = vmul.f32 %v793, %v780
  %v795 = vmul.f32 %v794, %v793
  %v796 = vmul.f32 0.5, %v795
  %v797 = vsub.f32 1.5, %v796
  %v798 = vmul.f32 %v793, %v797
  %vm799 = vweird.f32 %v780
  %vm800 = vweird.f32 %v793
  %vm801 = vmor %vm799, %vm800
  %v802 = vsel %vm801, %v793, %v798
  %v803 = vrsqrt.pop %v781
  %v804 = vmul.f32 %v803, %v781
  %v805 = vmul.f32 %v804, %v803
  %v806 = vmul.f32 0.5, %v805
  %v807 = vsub.f32 1.5, %v806
  %v808 = vmul.f32 %v803, %v807
  %vm809 = vweird.f32 %v781
  %vm810 = vweird.f32 %v803
  %vm811 = vmor %vm809, %vm810
  %v812 = vsel %vm811, %v803, %v808
  %v813 = vrsqrt.pop %v782
  %v814 = vmul.f32 %v813, %v782
  %v815 = vmul.f32 %v814, %v813
  %v816 = vmul.f32 0.5, %v815
  %v817 = vsub.f32 1.5, %v816
  %v818 = vmul.f32 %v813, %v817
  %vm819 = vweird.f32 %v782
  %vm820 = vweird.f32 %v813
  %vm821 = vmor %vm819, %vm820
  %v822 = vsel %vm821, %v813, %v818
  %v823 = vmul.f32 %v759, %v792
  %v824 = vmul.f32 %v760, %v802
  %v825 = vmul.f32 %v761, %v812
  %v826 = vmul.f32 %v762, %v822
  %v828 = vperm.slane %v745, 0
  %v830 = vmul.f32 %v823, %v828
  %v831 = vmul.f32 %v824, %v828
  %v832 = vmul.f32 %v825, %v828
  %v833 = vmul.f32 %v826, %v828
  %v835 = vperm.slane %v746, 0
  %v837 = vadd.f32 %v830, %v835
  %v838 = vadd.f32 %v831, %v835
  %v839 = vadd.f32 %v832, %v835
  %v840 = vadd.f32 %v833, %v835
  %v841 = vld [vmem:[%s7] sm:$0xff]
  %v842 = vld [vmem:[%s7 + $0x8] sm:$0xf]
  %v843 = vld [vmem:[%s7 + $0xc] sm:$0xff]
  %v844 = vld [vmem:[%s7 + $0x14] sm:$0xf]
  %v845 = vld [vmem:[%s7 + $0x18] sm:$0xff]
  %v846 = vld [vmem:[%s7 + $0x20] sm:$0xf]
  %v847 = vld [vmem:[%s7 + $0x24] sm:$0xff]
  %v848 = vld [vmem:[%s7 + $0x2c] sm:$0xf]
  %v849 = vld [vmem:[%s7 + $0x30] sm:$0xff]
  %v850 = vld [vmem:[%s7 + $0x38] sm:$0xf]
  %v851 = vld [vmem:[%s7 + $0x3c] sm:$0xff]
  %v852 = vld [vmem:[%s7 + $0x44] sm:$0xf]
  %v853 = vld [vmem:[%s7 + $0x48] sm:$0xff]
  %v854 = vld [vmem:[%s7 + $0x50] sm:$0xf]
  %v855 = vld [vmem:[%s7 + $0x54] sm:$0xff]
  %v856 = vld [vmem:[%s7 + $0x5c] sm:$0xf]
  %v857 = vld [vmem:[%s7 + $0x60] sm:$0xff]
  %v858 = vld [vmem:[%s7 + $0x68] sm:$0xf]
  %v859 = vld [vmem:[%s7 + $0x6c] sm:$0xff]
  %v860 = vld [vmem:[%s7 + $0x74] sm:$0xf]
  %v861 = vld [vmem:[%s7 + $0x78] sm:$0xff]
  %v862 = vld [vmem:[%s7 + $0x80] sm:$0xf]
  %v863 = vld [vmem:[%s7 + $0x84] sm:$0xff]
  %v864 = vld [vmem:[%s7 + $0x8c] sm:$0xf]
  %v865 = vld [vmem:[%s7 + $0x90] sm:$0xff]
  %v866 = vld [vmem:[%s7 + $0x98] sm:$0xf]
  %v867 = vld [vmem:[%s7 + $0x9c] sm:$0xff]
  %v868 = vld [vmem:[%s7 + $0xa4] sm:$0xf]
  %v869 = vld [vmem:[%s7 + $0xa8] sm:$0xff]
  %v870 = vld [vmem:[%s7 + $0xb0] sm:$0xf]
  %v871 = vld [vmem:[%s7 + $0xb4] sm:$0xff]
  %v872 = vld [vmem:[%s7 + $0xbc] sm:$0xf]
  %v873 = vld [vmem:[%s8] sm:$0x7]
  %v874 = vpack.c.bf16 %v838, %v837
  %v875 = vpack.c.bf16 %v840, %v839
  %v877 = vperm.slane %v873, 0
  %v878 = vperm.slane %v873, 1
  %v879 = vperm.slane %v873, 2
  %v915 = vunpack.c.l.b16 %v841
  %v916 = vunpack.c.h.b16 %v841
  %v917 = vunpack.c.l.b16 %v842
  %v918 = vunpack.c.l.b16 %v843
  %v919 = vunpack.c.h.b16 %v843
  %v920 = vunpack.c.l.b16 %v844
  %v921 = vunpack.c.l.b16 %v845
  %v922 = vunpack.c.h.b16 %v845
  %v923 = vunpack.c.l.b16 %v846
  %v924 = vunpack.c.l.b16 %v847
  %v925 = vunpack.c.h.b16 %v847
  %v926 = vunpack.c.l.b16 %v848
  %v927 = vunpack.c.l.b16 %v849
  %v928 = vunpack.c.h.b16 %v849
  %v929 = vunpack.c.l.b16 %v850
  %v930 = vunpack.c.l.b16 %v851
  %v931 = vunpack.c.h.b16 %v851
  %v932 = vunpack.c.l.b16 %v852
  %v933 = vunpack.c.l.b16 %v853
  %v934 = vunpack.c.h.b16 %v853
  %v935 = vunpack.c.l.b16 %v854
  %v936 = vunpack.c.l.b16 %v855
  %v937 = vunpack.c.h.b16 %v855
  %v938 = vunpack.c.l.b16 %v856
  %v939 = vunpack.c.l.b16 %v857
  %v940 = vunpack.c.h.b16 %v857
  %v941 = vunpack.c.l.b16 %v858
  %v942 = vunpack.c.l.b16 %v859
  %v943 = vunpack.c.h.b16 %v859
  %v944 = vunpack.c.l.b16 %v860
  %v945 = vunpack.c.l.b16 %v861
  %v946 = vunpack.c.h.b16 %v861
  %v947 = vunpack.c.l.b16 %v862
  %v948 = vunpack.c.l.b16 %v863
  %v949 = vunpack.c.h.b16 %v863
  %v950 = vunpack.c.l.b16 %v864
  %v951 = vunpack.c.l.b16 %v865
  %v952 = vunpack.c.h.b16 %v865
  %v953 = vunpack.c.l.b16 %v866
  %v954 = vunpack.c.l.b16 %v867
  %v955 = vunpack.c.h.b16 %v867
  %v956 = vunpack.c.l.b16 %v868
  %v957 = vunpack.c.l.b16 %v869
  %v958 = vunpack.c.h.b16 %v869
  %v959 = vunpack.c.l.b16 %v870
  %v960 = vunpack.c.l.b16 %v871
  %v961 = vunpack.c.h.b16 %v871
  %v962 = vunpack.c.l.b16 %v872
  %v963 = vpack.c.b16 %v918, %v915
  %v964 = vpack.c.b16 %v919, %v916
  %v965 = vpack.c.b16 %v920, %v917
  %v966 = vpack.c.b16 %v924, %v921
  %v967 = vpack.c.b16 %v925, %v922
  %v968 = vpack.c.b16 %v926, %v923
  %v969 = vpack.c.b16 %v930, %v927
  %v970 = vpack.c.b16 %v931, %v928
  %v971 = vpack.c.b16 %v932, %v929
  %v972 = vpack.c.b16 %v936, %v933
  %v973 = vpack.c.b16 %v937, %v934
  %v974 = vpack.c.b16 %v938, %v935
  %v975 = vpack.c.b16 %v942, %v939
  %v976 = vpack.c.b16 %v943, %v940
  %v977 = vpack.c.b16 %v944, %v941
  %v978 = vpack.c.b16 %v948, %v945
  %v979 = vpack.c.b16 %v949, %v946
  %v980 = vpack.c.b16 %v950, %v947
  %v981 = vpack.c.b16 %v954, %v951
  %v982 = vpack.c.b16 %v955, %v952
  %v983 = vpack.c.b16 %v956, %v953
  %v984 = vpack.c.b16 %v960, %v957
  %v985 = vpack.c.b16 %v961, %v958
  %v986 = vpack.c.b16 %v962, %v959
  %1011 = vmatpush.bf16.msra.mxu0 %v984
  %1012 = vmatpush.bf16.msra.mxu0 %v981
  %1013 = vmatpush.bf16.msra.mxu0 %v978
  %1014 = vmatpush.bf16.msra.mxu0 %v975
  %1015 = vmatpush.bf16.msra.mxu0 %v972
  %1016 = vmatpush.bf16.msra.mxu0 %v969
  %1017 = vmatpush.bf16.msra.mxu0 %v966
  %1018 = vmatpush.bf16.msra.mxu0 %v963
  %1019 = vmatmul.bf16.gmra.mxu0 %v874
  %v1020 = vpop.f32.mrf.mxu0
  %v1021 = vadd.f32 %v877, %v1020
  %v1022 = vpop.f32.mrf.mxu0
  %v1023 = vadd.f32 %v877, %v1022
  %1024 = vmatmul.bf16.gmra.mxu0 %v875
  %v1025 = vpop.f32.mrf.mxu0
  %v1026 = vadd.f32 %v877, %v1025
  %v1027 = vpop.f32.mrf.mxu0
  %v1028 = vadd.f32 %v877, %v1027
  %1029 = vdwg.mxu0
  %1030 = vmatpush.bf16.msra.mxu0 %v985
  %1031 = vmatpush.bf16.msra.mxu0 %v982
  %1032 = vmatpush.bf16.msra.mxu0 %v979
  %1033 = vmatpush.bf16.msra.mxu0 %v976
  %1034 = vmatpush.bf16.msra.mxu0 %v973
  %1035 = vmatpush.bf16.msra.mxu0 %v970
  %1036 = vmatpush.bf16.msra.mxu0 %v967
  %1037 = vmatpush.bf16.msra.mxu0 %v964
  %1038 = vmatmul.bf16.gmra.mxu0 %v874
  %v1039 = vpop.f32.mrf.mxu0
  %v1040 = vadd.f32 %v878, %v1039
  %v1041 = vpop.f32.mrf.mxu0
  %v1042 = vadd.f32 %v878, %v1041
  %1043 = vmatmul.bf16.gmra.mxu0 %v875
  %v1044 = vpop.f32.mrf.mxu0
  %v1045 = vadd.f32 %v878, %v1044
  %v1046 = vpop.f32.mrf.mxu0
  %v1047 = vadd.f32 %v878, %v1046
  %1048 = vdwg.mxu0
  %1049 = vmatpush.bf16.msra.mxu0 %v986
  %1050 = vmatpush.bf16.msra.mxu0 %v983
  %1051 = vmatpush.bf16.msra.mxu0 %v980
  %1052 = vmatpush.bf16.msra.mxu0 %v977
  %1053 = vmatpush.bf16.msra.mxu0 %v974
  %1054 = vmatpush.bf16.msra.mxu0 %v971
  %1055 = vmatpush.bf16.msra.mxu0 %v968
  %1056 = vmatpush.bf16.msra.mxu0 %v965
  %1057 = vmatmul.bf16.gmra.mxu0 %v874
  %v1058 = vpop.f32.mrf.mxu0
  %v1059 = vadd.f32 %v879, %v1058
  %v1060 = vpop.f32.mrf.mxu0
  %v1061 = vadd.f32 %v879, %v1060
  %1062 = vmatmul.bf16.gmra.mxu0 %v875
  %v1063 = vpop.f32.mrf.mxu0
  %v1064 = vadd.f32 %v879, %v1063
  %v1065 = vpop.f32.mrf.mxu0
  %v1066 = vadd.f32 %v879, %v1065
  %1067 = vdwg.mxu0
  %vm1068 = vcmask 523264
  %v1070 = vsel %vm1068, %v1021, 0
  %v1073 = vsel %vm1068, %v1040, 0
  %1075 = vmatpush.xpose.msra.mxu0 0.0
  %1076 = vmatpush.xpose.msra.mxu0 0.0
  %1077 = vmatpush.xpose.msra.mxu0 0.0
  %1078 = vmatpush.xpose.msra.mxu0 0.0
  %1079 = vmatpush.xpose.msra.mxu0 0.0
  %1080 = vmatpush.xpose.msra.mxu0 0.0
  %1081 = vmatpush.xpose.msra.mxu0 0.0
  %1082 = vmatpush.xpose.msra.mxu0 0.0
  %1083 = vmatpush.xpose.msra.mxu0 0.0
  %1084 = vmatpush.xpose.msra.mxu0 0.0
  %1085 = vmatpush.xpose.msra.mxu0 0.0
  %1086 = vmatpush.xpose.msra.mxu0 0.0
  %1087 = vmatpush.xpose.msra.mxu0 0.0
  %1088 = vmatpush.xpose.msra.mxu0 0.0
  %1089 = vmatpush.xpose.msra.mxu0 0.0
  %1090 = vmatpush.xpose.msra.mxu0 %v1073
  %1091 = vmatmul.f32.gmra.mxu0 %v1070
  %v1092 = vpop.f32.mrf.mxu0
  %v1093 = vadd.f32 0.0, %v1092
  %1094 = vdwg.mxu0
  %v1096 = vsel %vm1068, %v1023, 0
  %v1099 = vsel %vm1068, %v1042, 0
  %1101 = vmatpush.xpose.msra.mxu0 0.0
  %1102 = vmatpush.xpose.msra.mxu0 0.0
  %1103 = vmatpush.xpose.msra.mxu0 0.0
  %1104 = vmatpush.xpose.msra.mxu0 0.0
  %1105 = vmatpush.xpose.msra.mxu0 0.0
  %1106 = vmatpush.xpose.msra.mxu0 0.0
  %1107 = vmatpush.xpose.msra.mxu0 0.0
  %1108 = vmatpush.xpose.msra.mxu0 0.0
  %1109 = vmatpush.xpose.msra.mxu0 0.0
  %1110 = vmatpush.xpose.msra.mxu0 0.0
  %1111 = vmatpush.xpose.msra.mxu0 0.0
  %1112 = vmatpush.xpose.msra.mxu0 0.0
  %1113 = vmatpush.xpose.msra.mxu0 0.0
  %1114 = vmatpush.xpose.msra.mxu0 0.0
  %1115 = vmatpush.xpose.msra.mxu0 0.0
  %1116 = vmatpush.xpose.msra.mxu0 %v1099
  %1117 = vmatmul.f32.gmra.mxu0 %v1096
  %v1118 = vpop.f32.mrf.mxu0
  %v1119 = vadd.f32 0.0, %v1118
  %1120 = vdwg.mxu0
  %v1122 = vsel %vm1068, %v1026, 0
  %v1125 = vsel %vm1068, %v1045, 0
  %1127 = vmatpush.xpose.msra.mxu0 0.0
  %1128 = vmatpush.xpose.msra.mxu0 0.0
  %1129 = vmatpush.xpose.msra.mxu0 0.0
  %1130 = vmatpush.xpose.msra.mxu0 0.0
  %1131 = vmatpush.xpose.msra.mxu0 0.0
  %1132 = vmatpush.xpose.msra.mxu0 0.0
  %1133 = vmatpush.xpose.msra.mxu0 0.0
  %1134 = vmatpush.xpose.msra.mxu0 0.0
  %1135 = vmatpush.xpose.msra.mxu0 0.0
  %1136 = vmatpush.xpose.msra.mxu0 0.0
  %1137 = vmatpush.xpose.msra.mxu0 0.0
  %1138 = vmatpush.xpose.msra.mxu0 0.0
  %1139 = vmatpush.xpose.msra.mxu0 0.0
  %1140 = vmatpush.xpose.msra.mxu0 0.0
  %1141 = vmatpush.xpose.msra.mxu0 0.0
  %1142 = vmatpush.xpose.msra.mxu0 %v1125
  %1143 = vmatmul.f32.gmra.mxu0 %v1122
  %v1144 = vpop.f32.mrf.mxu0
  %v1145 = vadd.f32 0.0, %v1144
  %1146 = vdwg.mxu0
  %v1148 = vsel %vm1068, %v1028, 0
  %v1151 = vsel %vm1068, %v1047, 0
  %1153 = vmatpush.xpose.msra.mxu0 0.0
  %1154 = vmatpush.xpose.msra.mxu0 0.0
  %1155 = vmatpush.xpose.msra.mxu0 0.0
  %1156 = vmatpush.xpose.msra.mxu0 0.0
  %1157 = vmatpush.xpose.msra.mxu0 0.0
  %1158 = vmatpush.xpose.msra.mxu0 0.0
  %1159 = vmatpush.xpose.msra.mxu0 0.0
  %1160 = vmatpush.xpose.msra.mxu0 0.0
  %1161 = vmatpush.xpose.msra.mxu0 0.0
  %1162 = vmatpush.xpose.msra.mxu0 0.0
  %1163 = vmatpush.xpose.msra.mxu0 0.0
  %1164 = vmatpush.xpose.msra.mxu0 0.0
  %1165 = vmatpush.xpose.msra.mxu0 0.0
  %1166 = vmatpush.xpose.msra.mxu0 0.0
  %1167 = vmatpush.xpose.msra.mxu0 0.0
  %1168 = vmatpush.xpose.msra.mxu0 %v1151
  %1169 = vmatmul.f32.gmra.mxu0 %v1148
  %v1170 = vpop.f32.mrf.mxu0
  %v1171 = vadd.f32 0.0, %v1170
  %1172 = vdwg.mxu0
  %v1173 = vmul.f32 %v1093, 0.125
  %v1174 = vmul.f32 %v1119, 0.125
  %v1175 = vmul.f32 %v1145, 0.125
  %v1176 = vmul.f32 %v1171, 0.125
  %v1177 = vsel %vm744, %v1173, -1e+30
  %v1178 = vsel %vm744, %v1174, -1e+30
  %v1179 = vsel %vm744, %v1175, -1e+30
  %v1180 = vsel %vm744, %v1176, -1e+30
  %vm1181 = vcmask 64512
  %v1182 = vsel %vm1181, %v1177, -inf
  %1183 = vmax.xlane.f32.xlu0 %v1182
  %v1184 = vpop.xlane.xlu0 %1183
  %v1185 = vsel %vm1181, %v1178, -inf
  %1186 = vmax.xlane.f32.xlu0 %v1185
  %v1187 = vpop.xlane.xlu0 %1186
  %v1188 = vsel %vm1181, %v1179, -inf
  %1189 = vmax.xlane.f32.xlu0 %v1188
  %v1190 = vpop.xlane.xlu0 %1189
  %v1191 = vsel %vm1181, %v1180, -inf
  %1192 = vmax.xlane.f32.xlu0 %v1191
  %v1193 = vpop.xlane.xlu0 %1192
  %v1194 = vsub.f32 %v1177, %v1184
  %v1195 = vsub.f32 %v1178, %v1187
  %v1196 = vsub.f32 %v1179, %v1190
  %v1197 = vsub.f32 %v1180, %v1193
  %v1198 = vmul.f32 %v1194, 1.442695
  %v1199 = vpow.pop %v1198
  %v1200 = vmul.f32 %v1195, 1.442695
  %v1201 = vpow.pop %v1200
  %v1202 = vmul.f32 %v1196, 1.442695
  %v1203 = vpow.pop %v1202
  %v1204 = vmul.f32 %v1197, 1.442695
  %v1205 = vpow.pop %v1204
  %v1206 = vsel %vm1181, %v1199, 0.0
  %1207 = vadd.xlane.f32.xlu0 %v1206
  %v1208 = vpop.xlane.xlu0 %1207
  %v1209 = vsel %vm1181, %v1201, 0.0
  %1210 = vadd.xlane.f32.xlu0 %v1209
  %v1211 = vpop.xlane.xlu0 %1210
  %v1212 = vsel %vm1181, %v1203, 0.0
  %1213 = vadd.xlane.f32.xlu0 %v1212
  %v1214 = vpop.xlane.xlu0 %1213
  %v1215 = vsel %vm1181, %v1205, 0.0
  %1216 = vadd.xlane.f32.xlu0 %v1215
  %v1217 = vpop.xlane.xlu0 %1216
  %v1218 = vrcp.pop %v1208
  %v1219 = vrcp.pop %v1211
  %v1220 = vrcp.pop %v1214
  %v1221 = vrcp.pop %v1217
  %v1222 = vmul.f32 %v1199, %v1218
  %v1223 = vmul.f32 %v1201, %v1219
  %v1224 = vmul.f32 %v1203, %v1220
  %v1225 = vmul.f32 %v1205, %v1221
  %v1227 = vsel %vm1181, %v1222, 0
  %1229 = vmatpush.msra.mxu0 0.0
  %1230 = vmatpush.msra.mxu0 0.0
  %1231 = vmatpush.msra.mxu0 0.0
  %1232 = vmatpush.msra.mxu0 0.0
  %1233 = vmatpush.msra.mxu0 0.0
  %1234 = vmatpush.msra.mxu0 0.0
  %1235 = vmatpush.msra.mxu0 0.0
  %1236 = vmatpush.msra.mxu0 0.0
  %1237 = vmatpush.msra.mxu0 0.0
  %1238 = vmatpush.msra.mxu0 0.0
  %1239 = vmatpush.msra.mxu0 0.0
  %1240 = vmatpush.msra.mxu0 0.0
  %1241 = vmatpush.msra.mxu0 0.0
  %1242 = vmatpush.msra.mxu0 0.0
  %1243 = vmatpush.msra.mxu0 0.0
  %1244 = vmatpush.msra.mxu0 %v1059
  %1245 = vmatmul.f32.gmra.mxu0 %v1227
  %v1246 = vpop.f32.mrf.mxu0
  %v1247 = vadd.f32 0.0, %v1246
  %1248 = vdwg.mxu0
  %v1250 = vsel %vm1181, %v1223, 0
  %1252 = vmatpush.msra.mxu0 0.0
  %1253 = vmatpush.msra.mxu0 0.0
  %1254 = vmatpush.msra.mxu0 0.0
  %1255 = vmatpush.msra.mxu0 0.0
  %1256 = vmatpush.msra.mxu0 0.0
  %1257 = vmatpush.msra.mxu0 0.0
  %1258 = vmatpush.msra.mxu0 0.0
  %1259 = vmatpush.msra.mxu0 0.0
  %1260 = vmatpush.msra.mxu0 0.0
  %1261 = vmatpush.msra.mxu0 0.0
  %1262 = vmatpush.msra.mxu0 0.0
  %1263 = vmatpush.msra.mxu0 0.0
  %1264 = vmatpush.msra.mxu0 0.0
  %1265 = vmatpush.msra.mxu0 0.0
  %1266 = vmatpush.msra.mxu0 0.0
  %1267 = vmatpush.msra.mxu0 %v1061
  %1268 = vmatmul.f32.gmra.mxu0 %v1250
  %v1269 = vpop.f32.mrf.mxu0
  %v1270 = vadd.f32 0.0, %v1269
  %1271 = vdwg.mxu0
  %v1273 = vsel %vm1181, %v1224, 0
  %1275 = vmatpush.msra.mxu0 0.0
  %1276 = vmatpush.msra.mxu0 0.0
  %1277 = vmatpush.msra.mxu0 0.0
  %1278 = vmatpush.msra.mxu0 0.0
  %1279 = vmatpush.msra.mxu0 0.0
  %1280 = vmatpush.msra.mxu0 0.0
  %1281 = vmatpush.msra.mxu0 0.0
  %1282 = vmatpush.msra.mxu0 0.0
  %1283 = vmatpush.msra.mxu0 0.0
  %1284 = vmatpush.msra.mxu0 0.0
  %1285 = vmatpush.msra.mxu0 0.0
  %1286 = vmatpush.msra.mxu0 0.0
  %1287 = vmatpush.msra.mxu0 0.0
  %1288 = vmatpush.msra.mxu0 0.0
  %1289 = vmatpush.msra.mxu0 0.0
  %1290 = vmatpush.msra.mxu0 %v1064
  %1291 = vmatmul.f32.gmra.mxu0 %v1273
  %v1292 = vpop.f32.mrf.mxu0
  %v1293 = vadd.f32 0.0, %v1292
  %1294 = vdwg.mxu0
  %v1296 = vsel %vm1181, %v1225, 0
  %1298 = vmatpush.msra.mxu0 0.0
  %1299 = vmatpush.msra.mxu0 0.0
  %1300 = vmatpush.msra.mxu0 0.0
  %1301 = vmatpush.msra.mxu0 0.0
  %1302 = vmatpush.msra.mxu0 0.0
  %1303 = vmatpush.msra.mxu0 0.0
  %1304 = vmatpush.msra.mxu0 0.0
  %1305 = vmatpush.msra.mxu0 0.0
  %1306 = vmatpush.msra.mxu0 0.0
  %1307 = vmatpush.msra.mxu0 0.0
  %1308 = vmatpush.msra.mxu0 0.0
  %1309 = vmatpush.msra.mxu0 0.0
  %1310 = vmatpush.msra.mxu0 0.0
  %1311 = vmatpush.msra.mxu0 0.0
  %1312 = vmatpush.msra.mxu0 0.0
  %1313 = vmatpush.msra.mxu0 %v1066
  %1314 = vmatmul.f32.gmra.mxu0 %v1296
  %v1315 = vpop.f32.mrf.mxu0
  %v1316 = vadd.f32 0.0, %v1315
  %1317 = vdwg.mxu0
  %1318 = vrot.lane.b32.xlu0 %v1021, 64
  %v1319 = vpop.permute.xlu0 %1318
  %1320 = vrot.lane.b32.xlu0 %v1040, 64
  %v1321 = vpop.permute.xlu0 %1320
  %v1322 = vsel %vm1068, %v1319, 0
  %v1324 = vsel %vm1068, %v1321, 0
  %1326 = vmatpush.xpose.msra.mxu0 0.0
  %1327 = vmatpush.xpose.msra.mxu0 0.0
  %1328 = vmatpush.xpose.msra.mxu0 0.0
  %1329 = vmatpush.xpose.msra.mxu0 0.0
  %1330 = vmatpush.xpose.msra.mxu0 0.0
  %1331 = vmatpush.xpose.msra.mxu0 0.0
  %1332 = vmatpush.xpose.msra.mxu0 0.0
  %1333 = vmatpush.xpose.msra.mxu0 0.0
  %1334 = vmatpush.xpose.msra.mxu0 0.0
  %1335 = vmatpush.xpose.msra.mxu0 0.0
  %1336 = vmatpush.xpose.msra.mxu0 0.0
  %1337 = vmatpush.xpose.msra.mxu0 0.0
  %1338 = vmatpush.xpose.msra.mxu0 0.0
  %1339 = vmatpush.xpose.msra.mxu0 0.0
  %1340 = vmatpush.xpose.msra.mxu0 0.0
  %1341 = vmatpush.xpose.msra.mxu0 %v1324
  %1342 = vmatmul.f32.gmra.mxu0 %v1322
  %v1343 = vpop.f32.mrf.mxu0
  %v1344 = vadd.f32 0.0, %v1343
  %1345 = vdwg.mxu0
  %1346 = vrot.lane.b32.xlu0 %v1023, 64
  %v1347 = vpop.permute.xlu0 %1346
  %1348 = vrot.lane.b32.xlu0 %v1042, 64
  %v1349 = vpop.permute.xlu0 %1348
  %v1350 = vsel %vm1068, %v1347, 0
  %v1352 = vsel %vm1068, %v1349, 0
  %1354 = vmatpush.xpose.msra.mxu0 0.0
  %1355 = vmatpush.xpose.msra.mxu0 0.0
  %1356 = vmatpush.xpose.msra.mxu0 0.0
  %1357 = vmatpush.xpose.msra.mxu0 0.0
  %1358 = vmatpush.xpose.msra.mxu0 0.0
  %1359 = vmatpush.xpose.msra.mxu0 0.0
  %1360 = vmatpush.xpose.msra.mxu0 0.0
  %1361 = vmatpush.xpose.msra.mxu0 0.0
  %1362 = vmatpush.xpose.msra.mxu0 0.0
  %1363 = vmatpush.xpose.msra.mxu0 0.0
  %1364 = vmatpush.xpose.msra.mxu0 0.0
  %1365 = vmatpush.xpose.msra.mxu0 0.0
  %1366 = vmatpush.xpose.msra.mxu0 0.0
  %1367 = vmatpush.xpose.msra.mxu0 0.0
  %1368 = vmatpush.xpose.msra.mxu0 0.0
  %1369 = vmatpush.xpose.msra.mxu0 %v1352
  %1370 = vmatmul.f32.gmra.mxu0 %v1350
  %v1371 = vpop.f32.mrf.mxu0
  %v1372 = vadd.f32 0.0, %v1371
  %1373 = vdwg.mxu0
  %1374 = vrot.lane.b32.xlu0 %v1026, 64
  %v1375 = vpop.permute.xlu0 %1374
  %1376 = vrot.lane.b32.xlu0 %v1045, 64
  %v1377 = vpop.permute.xlu0 %1376
  %v1378 = vsel %vm1068, %v1375, 0
  %v1380 = vsel %vm1068, %v1377, 0
  %1382 = vmatpush.xpose.msra.mxu0 0.0
  %1383 = vmatpush.xpose.msra.mxu0 0.0
  %1384 = vmatpush.xpose.msra.mxu0 0.0
  %1385 = vmatpush.xpose.msra.mxu0 0.0
  %1386 = vmatpush.xpose.msra.mxu0 0.0
  %1387 = vmatpush.xpose.msra.mxu0 0.0
  %1388 = vmatpush.xpose.msra.mxu0 0.0
  %1389 = vmatpush.xpose.msra.mxu0 0.0
  %1390 = vmatpush.xpose.msra.mxu0 0.0
  %1391 = vmatpush.xpose.msra.mxu0 0.0
  %1392 = vmatpush.xpose.msra.mxu0 0.0
  %1393 = vmatpush.xpose.msra.mxu0 0.0
  %1394 = vmatpush.xpose.msra.mxu0 0.0
  %1395 = vmatpush.xpose.msra.mxu0 0.0
  %1396 = vmatpush.xpose.msra.mxu0 0.0
  %1397 = vmatpush.xpose.msra.mxu0 %v1380
  %1398 = vmatmul.f32.gmra.mxu0 %v1378
  %v1399 = vpop.f32.mrf.mxu0
  %v1400 = vadd.f32 0.0, %v1399
  %1401 = vdwg.mxu0
  %1402 = vrot.lane.b32.xlu0 %v1028, 64
  %v1403 = vpop.permute.xlu0 %1402
  %1404 = vrot.lane.b32.xlu0 %v1047, 64
  %v1405 = vpop.permute.xlu0 %1404
  %v1406 = vsel %vm1068, %v1403, 0
  %v1408 = vsel %vm1068, %v1405, 0
  %1410 = vmatpush.xpose.msra.mxu0 0.0
  %1411 = vmatpush.xpose.msra.mxu0 0.0
  %1412 = vmatpush.xpose.msra.mxu0 0.0
  %1413 = vmatpush.xpose.msra.mxu0 0.0
  %1414 = vmatpush.xpose.msra.mxu0 0.0
  %1415 = vmatpush.xpose.msra.mxu0 0.0
  %1416 = vmatpush.xpose.msra.mxu0 0.0
  %1417 = vmatpush.xpose.msra.mxu0 0.0
  %1418 = vmatpush.xpose.msra.mxu0 0.0
  %1419 = vmatpush.xpose.msra.mxu0 0.0
  %1420 = vmatpush.xpose.msra.mxu0 0.0
  %1421 = vmatpush.xpose.msra.mxu0 0.0
  %1422 = vmatpush.xpose.msra.mxu0 0.0
  %1423 = vmatpush.xpose.msra.mxu0 0.0
  %1424 = vmatpush.xpose.msra.mxu0 0.0
  %1425 = vmatpush.xpose.msra.mxu0 %v1408
  %1426 = vmatmul.f32.gmra.mxu0 %v1406
  %v1427 = vpop.f32.mrf.mxu0
  %v1428 = vadd.f32 0.0, %v1427
  %1429 = vdwg.mxu0
  %v1430 = vmul.f32 %v1344, 0.125
  %v1431 = vmul.f32 %v1372, 0.125
  %v1432 = vmul.f32 %v1400, 0.125
  %v1433 = vmul.f32 %v1428, 0.125
  %v1434 = vsel %vm744, %v1430, -1e+30
  %v1435 = vsel %vm744, %v1431, -1e+30
  %v1436 = vsel %vm744, %v1432, -1e+30
  %v1437 = vsel %vm744, %v1433, -1e+30
  %v1438 = vsel %vm1181, %v1434, -inf
  %1439 = vmax.xlane.f32.xlu0 %v1438
  %v1440 = vpop.xlane.xlu0 %1439
  %v1441 = vsel %vm1181, %v1435, -inf
  %1442 = vmax.xlane.f32.xlu0 %v1441
  %v1443 = vpop.xlane.xlu0 %1442
  %v1444 = vsel %vm1181, %v1436, -inf
  %1445 = vmax.xlane.f32.xlu0 %v1444
  %v1446 = vpop.xlane.xlu0 %1445
  %v1447 = vsel %vm1181, %v1437, -inf
  %1448 = vmax.xlane.f32.xlu0 %v1447
  %v1449 = vpop.xlane.xlu0 %1448
  %v1450 = vsub.f32 %v1434, %v1440
  %v1451 = vsub.f32 %v1435, %v1443
  %v1452 = vsub.f32 %v1436, %v1446
  %v1453 = vsub.f32 %v1437, %v1449
  %v1454 = vmul.f32 %v1450, 1.442695
  %v1455 = vpow.pop %v1454
  %v1456 = vmul.f32 %v1451, 1.442695
  %v1457 = vpow.pop %v1456
  %v1458 = vmul.f32 %v1452, 1.442695
  %v1459 = vpow.pop %v1458
  %v1460 = vmul.f32 %v1453, 1.442695
  %v1461 = vpow.pop %v1460
  %v1462 = vsel %vm1181, %v1455, 0.0
  %1463 = vadd.xlane.f32.xlu0 %v1462
  %v1464 = vpop.xlane.xlu0 %1463
  %v1465 = vsel %vm1181, %v1457, 0.0
  %1466 = vadd.xlane.f32.xlu0 %v1465
  %v1467 = vpop.xlane.xlu0 %1466
  %v1468 = vsel %vm1181, %v1459, 0.0
  %1469 = vadd.xlane.f32.xlu0 %v1468
  %v1470 = vpop.xlane.xlu0 %1469
  %v1471 = vsel %vm1181, %v1461, 0.0
  %1472 = vadd.xlane.f32.xlu0 %v1471
  %v1473 = vpop.xlane.xlu0 %1472
  %v1474 = vrcp.pop %v1464
  %v1475 = vrcp.pop %v1467
  %v1476 = vrcp.pop %v1470
  %v1477 = vrcp.pop %v1473
  %v1478 = vmul.f32 %v1455, %v1474
  %v1479 = vmul.f32 %v1457, %v1475
  %v1480 = vmul.f32 %v1459, %v1476
  %v1481 = vmul.f32 %v1461, %v1477
  %1483 = vrot.lane.b32.xlu0 %v1059, 64
  %v1484 = vpop.permute.xlu0 %1483
  %v1487 = vsel %vm1181, %v1478, 0
  %1489 = vmatpush.msra.mxu0 0.0
  %1490 = vmatpush.msra.mxu0 0.0
  %1491 = vmatpush.msra.mxu0 0.0
  %1492 = vmatpush.msra.mxu0 0.0
  %1493 = vmatpush.msra.mxu0 0.0
  %1494 = vmatpush.msra.mxu0 0.0
  %1495 = vmatpush.msra.mxu0 0.0
  %1496 = vmatpush.msra.mxu0 0.0
  %1497 = vmatpush.msra.mxu0 0.0
  %1498 = vmatpush.msra.mxu0 0.0
  %1499 = vmatpush.msra.mxu0 0.0
  %1500 = vmatpush.msra.mxu0 0.0
  %1501 = vmatpush.msra.mxu0 0.0
  %1502 = vmatpush.msra.mxu0 0.0
  %1503 = vmatpush.msra.mxu0 0.0
  %1504 = vmatpush.msra.mxu0 %v1484
  %1505 = vmatmul.f32.gmra.mxu0 %v1487
  %v1506 = vpop.f32.mrf.mxu0
  %v1507 = vadd.f32 0.0, %v1506
  %1508 = vdwg.mxu0
  %1510 = vrot.lane.b32.xlu0 %v1061, 64
  %v1511 = vpop.permute.xlu0 %1510
  %v1514 = vsel %vm1181, %v1479, 0
  %1516 = vmatpush.msra.mxu0 0.0
  %1517 = vmatpush.msra.mxu0 0.0
  %1518 = vmatpush.msra.mxu0 0.0
  %1519 = vmatpush.msra.mxu0 0.0
  %1520 = vmatpush.msra.mxu0 0.0
  %1521 = vmatpush.msra.mxu0 0.0
  %1522 = vmatpush.msra.mxu0 0.0
  %1523 = vmatpush.msra.mxu0 0.0
  %1524 = vmatpush.msra.mxu0 0.0
  %1525 = vmatpush.msra.mxu0 0.0
  %1526 = vmatpush.msra.mxu0 0.0
  %1527 = vmatpush.msra.mxu0 0.0
  %1528 = vmatpush.msra.mxu0 0.0
  %1529 = vmatpush.msra.mxu0 0.0
  %1530 = vmatpush.msra.mxu0 0.0
  %1531 = vmatpush.msra.mxu0 %v1511
  %1532 = vmatmul.f32.gmra.mxu0 %v1514
  %v1533 = vpop.f32.mrf.mxu0
  %v1534 = vadd.f32 0.0, %v1533
  %1535 = vdwg.mxu0
  %1537 = vrot.lane.b32.xlu0 %v1064, 64
  %v1538 = vpop.permute.xlu0 %1537
  %v1541 = vsel %vm1181, %v1480, 0
  %1543 = vmatpush.msra.mxu0 0.0
  %1544 = vmatpush.msra.mxu0 0.0
  %1545 = vmatpush.msra.mxu0 0.0
  %1546 = vmatpush.msra.mxu0 0.0
  %1547 = vmatpush.msra.mxu0 0.0
  %1548 = vmatpush.msra.mxu0 0.0
  %1549 = vmatpush.msra.mxu0 0.0
  %1550 = vmatpush.msra.mxu0 0.0
  %1551 = vmatpush.msra.mxu0 0.0
  %1552 = vmatpush.msra.mxu0 0.0
  %1553 = vmatpush.msra.mxu0 0.0
  %1554 = vmatpush.msra.mxu0 0.0
  %1555 = vmatpush.msra.mxu0 0.0
  %1556 = vmatpush.msra.mxu0 0.0
  %1557 = vmatpush.msra.mxu0 0.0
  %1558 = vmatpush.msra.mxu0 %v1538
  %1559 = vmatmul.f32.gmra.mxu0 %v1541
  %v1560 = vpop.f32.mrf.mxu0
  %v1561 = vadd.f32 0.0, %v1560
  %1562 = vdwg.mxu0
  %1564 = vrot.lane.b32.xlu0 %v1066, 64
  %v1565 = vpop.permute.xlu0 %1564
  %v1568 = vsel %vm1181, %v1481, 0
  %1570 = vmatpush.msra.mxu0 0.0
  %1571 = vmatpush.msra.mxu0 0.0
  %1572 = vmatpush.msra.mxu0 0.0
  %1573 = vmatpush.msra.mxu0 0.0
  %1574 = vmatpush.msra.mxu0 0.0
  %1575 = vmatpush.msra.mxu0 0.0
  %1576 = vmatpush.msra.mxu0 0.0
  %1577 = vmatpush.msra.mxu0 0.0
  %1578 = vmatpush.msra.mxu0 0.0
  %1579 = vmatpush.msra.mxu0 0.0
  %1580 = vmatpush.msra.mxu0 0.0
  %1581 = vmatpush.msra.mxu0 0.0
  %1582 = vmatpush.msra.mxu0 0.0
  %1583 = vmatpush.msra.mxu0 0.0
  %1584 = vmatpush.msra.mxu0 0.0
  %1585 = vmatpush.msra.mxu0 %v1565
  %1586 = vmatmul.f32.gmra.mxu0 %v1568
  %v1587 = vpop.f32.mrf.mxu0
  %v1588 = vadd.f32 0.0, %v1587
  %1589 = vdwg.mxu0
  %1594 = vrot.lane.b32.xlu0 %v1507, 64
  %v1595 = vpop.permute.xlu0 %1594
  %1596 = vrot.lane.b32.xlu0 %v1534, 64
  %v1597 = vpop.permute.xlu0 %1596
  %1598 = vrot.lane.b32.xlu0 %v1561, 64
  %v1599 = vpop.permute.xlu0 %1598
  %1600 = vrot.lane.b32.xlu0 %v1588, 64
  %v1601 = vpop.permute.xlu0 %1600
  %v1606 = vsel %vm1068, %v1247, %v1595
  %v1607 = vsel %vm1068, %v1270, %v1597
  %v1608 = vsel %vm1068, %v1293, %v1599
  %v1609 = vsel %vm1068, %v1316, %v1601
  %v1610 = vld [vmem:[%s9] sm:$0xf]
  %v1611 = vld [vmem:[%s9 + $0x4] sm:$0xf]
  %v1612 = vld [vmem:[%s9 + $0x8] sm:$0xf]
  %v1613 = vld [vmem:[%s9 + $0xc] sm:$0xf]
  %v1614 = vld [vmem:[%s9 + $0x10] sm:$0xf]
  %v1615 = vld [vmem:[%s9 + $0x14] sm:$0xf]
  %v1616 = vld [vmem:[%s9 + $0x18] sm:$0xf]
  %v1617 = vld [vmem:[%s9 + $0x1c] sm:$0xf]
  %v1618 = vld [vmem:[%s9 + $0x20] sm:$0xf]
  %v1619 = vld [vmem:[%s9 + $0x24] sm:$0xf]
  %v1620 = vld [vmem:[%s9 + $0x28] sm:$0xf]
  %v1621 = vld [vmem:[%s9 + $0x2c] sm:$0xf]
  %v1622 = vld [vmem:[%s9 + $0x30] sm:$0xf]
  %v1623 = vld [vmem:[%s9 + $0x34] sm:$0xf]
  %v1624 = vld [vmem:[%s9 + $0x38] sm:$0xf]
  %v1625 = vld [vmem:[%s9 + $0x3c] sm:$0xf]
  %v1626 = vld [vmem:[%s10] sm:$0x1]
  %v1627 = vpack.c.bf16 %v1607, %v1606
  %v1628 = vpack.c.bf16 %v1609, %v1608
  %v1630 = vperm.slane %v1626, 0
  %v1648 = vunpack.c.l.b16 %v1610
  %v1649 = vunpack.c.l.b16 %v1611
  %v1650 = vunpack.c.l.b16 %v1612
  %v1651 = vunpack.c.l.b16 %v1613
  %v1652 = vunpack.c.l.b16 %v1614
  %v1653 = vunpack.c.l.b16 %v1615
  %v1654 = vunpack.c.l.b16 %v1616
  %v1655 = vunpack.c.l.b16 %v1617
  %v1656 = vunpack.c.l.b16 %v1618
  %v1657 = vunpack.c.l.b16 %v1619
  %v1658 = vunpack.c.l.b16 %v1620
  %v1659 = vunpack.c.l.b16 %v1621
  %v1660 = vunpack.c.l.b16 %v1622
  %v1661 = vunpack.c.l.b16 %v1623
  %v1662 = vunpack.c.l.b16 %v1624
  %v1663 = vunpack.c.l.b16 %v1625
  %v1664 = vpack.c.b16 %v1649, %v1648
  %v1665 = vpack.c.b16 %v1651, %v1650
  %v1666 = vpack.c.b16 %v1653, %v1652
  %v1667 = vpack.c.b16 %v1655, %v1654
  %v1668 = vpack.c.b16 %v1657, %v1656
  %v1669 = vpack.c.b16 %v1659, %v1658
  %v1670 = vpack.c.b16 %v1661, %v1660
  %v1671 = vpack.c.b16 %v1663, %v1662
  %1680 = vmatpush.bf16.msra.mxu0 %v1671
  %1681 = vmatpush.bf16.msra.mxu0 %v1670
  %1682 = vmatpush.bf16.msra.mxu0 %v1669
  %1683 = vmatpush.bf16.msra.mxu0 %v1668
  %1684 = vmatpush.bf16.msra.mxu0 %v1667
  %1685 = vmatpush.bf16.msra.mxu0 %v1666
  %1686 = vmatpush.bf16.msra.mxu0 %v1665
  %1687 = vmatpush.bf16.msra.mxu0 %v1664
  %1688 = vmatmul.bf16.gmra.mxu0 %v1627
  %v1689 = vpop.f32.mrf.mxu0
  %v1690 = vadd.f32 %v1630, %v1689
  %v1691 = vpop.f32.mrf.mxu0
  %v1692 = vadd.f32 %v1630, %v1691
  %1693 = vmatmul.bf16.gmra.mxu0 %v1628
  %v1694 = vpop.f32.mrf.mxu0
  %v1695 = vadd.f32 %v1630, %v1694
  %v1696 = vpop.f32.mrf.mxu0
  %v1697 = vadd.f32 %v1630, %v1696
  %1698 = vdwg.mxu0
  %v1699 = vadd.f32 %v738, %v1690
  %v1700 = vadd.f32 %v739, %v1692
  %v1701 = vadd.f32 %v740, %v1695
  %v1702 = vadd.f32 %v741, %v1697
  %v1703 = vld [vmem:[%s11] sm:$0x1]
  %v1704 = vld [vmem:[%s12] sm:$0x1]
  %1705 = vadd.xlane.f32.xlu0 %v1699
  %v1706 = vpop.xlane.xlu0 %1705
  %1707 = vadd.xlane.f32.xlu0 %v1700
  %v1708 = vpop.xlane.xlu0 %1707
  %1709 = vadd.xlane.f32.xlu0 %v1701
  %v1710 = vpop.xlane.xlu0 %1709
  %1711 = vadd.xlane.f32.xlu0 %v1702
  %v1712 = vpop.xlane.xlu0 %1711
  %v1713 = vmul.f32 %v1706, %v655
  %v1714 = vmul.f32 %v1708, %v655
  %v1715 = vmul.f32 %v1710, %v655
  %v1716 = vmul.f32 %v1712, %v655
  %v1717 = vsub.f32 %v1699, %v1713
  %v1718 = vsub.f32 %v1700, %v1714
  %v1719 = vsub.f32 %v1701, %v1715
  %v1720 = vsub.f32 %v1702, %v1716
  %v1721 = vmul.f32 %v1717, %v1717
  %v1722 = vmul.f32 %v1718, %v1718
  %v1723 = vmul.f32 %v1719, %v1719
  %v1724 = vmul.f32 %v1720, %v1720
  %1725 = vadd.xlane.f32.xlu0 %v1721
  %v1726 = vpop.xlane.xlu0 %1725
  %1727 = vadd.xlane.f32.xlu0 %v1722
  %v1728 = vpop.xlane.xlu0 %1727
  %1729 = vadd.xlane.f32.xlu0 %v1723
  %v1730 = vpop.xlane.xlu0 %1729
  %1731 = vadd.xlane.f32.xlu0 %v1724
  %v1732 = vpop.xlane.xlu0 %1731
  %v1733 = vmul.f32 %v1726, %v655
  %v1734 = vmul.f32 %v1728, %v655
  %v1735 = vmul.f32 %v1730, %v655
  %v1736 = vmul.f32 %v1732, %v655
  %v1737 = vadd.f32 %v1733, 1e-05
  %v1738 = vadd.f32 %v1734, 1e-05
  %v1739 = vadd.f32 %v1735, 1e-05
  %v1740 = vadd.f32 %v1736, 1e-05
  %v1741 = vrsqrt.pop %v1737
  %v1742 = vmul.f32 %v1741, %v1737
  %v1743 = vmul.f32 %v1742, %v1741
  %v1744 = vmul.f32 0.5, %v1743
  %v1745 = vsub.f32 1.5, %v1744
  %v1746 = vmul.f32 %v1741, %v1745
  %vm1747 = vweird.f32 %v1737
  %vm1748 = vweird.f32 %v1741
  %vm1749 = vmor %vm1747, %vm1748
  %v1750 = vsel %vm1749, %v1741, %v1746
  %v1751 = vrsqrt.pop %v1738
  %v1752 = vmul.f32 %v1751, %v1738
  %v1753 = vmul.f32 %v1752, %v1751
  %v1754 = vmul.f32 0.5, %v1753
  %v1755 = vsub.f32 1.5, %v1754
  %v1756 = vmul.f32 %v1751, %v1755
  %vm1757 = vweird.f32 %v1738
  %vm1758 = vweird.f32 %v1751
  %vm1759 = vmor %vm1757, %vm1758
  %v1760 = vsel %vm1759, %v1751, %v1756
  %v1761 = vrsqrt.pop %v1739
  %v1762 = vmul.f32 %v1761, %v1739
  %v1763 = vmul.f32 %v1762, %v1761
  %v1764 = vmul.f32 0.5, %v1763
  %v1765 = vsub.f32 1.5, %v1764
  %v1766 = vmul.f32 %v1761, %v1765
  %vm1767 = vweird.f32 %v1739
  %vm1768 = vweird.f32 %v1761
  %vm1769 = vmor %vm1767, %vm1768
  %v1770 = vsel %vm1769, %v1761, %v1766
  %v1771 = vrsqrt.pop %v1740
  %v1772 = vmul.f32 %v1771, %v1740
  %v1773 = vmul.f32 %v1772, %v1771
  %v1774 = vmul.f32 0.5, %v1773
  %v1775 = vsub.f32 1.5, %v1774
  %v1776 = vmul.f32 %v1771, %v1775
  %vm1777 = vweird.f32 %v1740
  %vm1778 = vweird.f32 %v1771
  %vm1779 = vmor %vm1777, %vm1778
  %v1780 = vsel %vm1779, %v1771, %v1776
  %v1781 = vmul.f32 %v1717, %v1750
  %v1782 = vmul.f32 %v1718, %v1760
  %v1783 = vmul.f32 %v1719, %v1770
  %v1784 = vmul.f32 %v1720, %v1780
  %v1786 = vperm.slane %v1703, 0
  %v1788 = vmul.f32 %v1781, %v1786
  %v1789 = vmul.f32 %v1782, %v1786
  %v1790 = vmul.f32 %v1783, %v1786
  %v1791 = vmul.f32 %v1784, %v1786
  %v1793 = vperm.slane %v1704, 0
  %v1795 = vadd.f32 %v1788, %v1793
  %v1796 = vadd.f32 %v1789, %v1793
  %v1797 = vadd.f32 %v1790, %v1793
  %v1798 = vadd.f32 %v1791, %v1793
  %v1799 = vld [vmem:[%s13] sm:$0xff]
  %v1800 = vld [vmem:[%s13 + $0x8] sm:$0xff]
  %v1801 = vld [vmem:[%s13 + $0x10] sm:$0xff]
  %v1802 = vld [vmem:[%s13 + $0x18] sm:$0xff]
  %v1803 = vld [vmem:[%s13 + $0x20] sm:$0xff]
  %v1804 = vld [vmem:[%s13 + $0x28] sm:$0xff]
  %v1805 = vld [vmem:[%s13 + $0x30] sm:$0xff]
  %v1806 = vld [vmem:[%s13 + $0x38] sm:$0xff]
  %v1807 = vld [vmem:[%s13 + $0x40] sm:$0xff]
  %v1808 = vld [vmem:[%s13 + $0x48] sm:$0xff]
  %v1809 = vld [vmem:[%s13 + $0x50] sm:$0xff]
  %v1810 = vld [vmem:[%s13 + $0x58] sm:$0xff]
  %v1811 = vld [vmem:[%s13 + $0x60] sm:$0xff]
  %v1812 = vld [vmem:[%s13 + $0x68] sm:$0xff]
  %v1813 = vld [vmem:[%s13 + $0x70] sm:$0xff]
  %v1814 = vld [vmem:[%s13 + $0x78] sm:$0xff]
  %v1815 = vld [vmem:[%s13 + $0x80] sm:$0xff]
  %v1816 = vld [vmem:[%s13 + $0x88] sm:$0xff]
  %v1817 = vld [vmem:[%s13 + $0x90] sm:$0xff]
  %v1818 = vld [vmem:[%s13 + $0x98] sm:$0xff]
  %v1819 = vld [vmem:[%s13 + $0xa0] sm:$0xff]
  %v1820 = vld [vmem:[%s13 + $0xa8] sm:$0xff]
  %v1821 = vld [vmem:[%s13 + $0xb0] sm:$0xff]
  %v1822 = vld [vmem:[%s13 + $0xb8] sm:$0xff]
  %v1823 = vld [vmem:[%s13 + $0xc0] sm:$0xff]
  %v1824 = vld [vmem:[%s13 + $0xc8] sm:$0xff]
  %v1825 = vld [vmem:[%s13 + $0xd0] sm:$0xff]
  %v1826 = vld [vmem:[%s13 + $0xd8] sm:$0xff]
  %v1827 = vld [vmem:[%s13 + $0xe0] sm:$0xff]
  %v1828 = vld [vmem:[%s13 + $0xe8] sm:$0xff]
  %v1829 = vld [vmem:[%s13 + $0xf0] sm:$0xff]
  %v1830 = vld [vmem:[%s13 + $0xf8] sm:$0xff]
  %v1831 = vld [vmem:[%s14] sm:$0xf]
  %v1832 = vpack.c.bf16 %v1796, %v1795
  %v1833 = vpack.c.bf16 %v1798, %v1797
  %v1835 = vperm.slane %v1831, 0
  %v1836 = vperm.slane %v1831, 1
  %v1837 = vperm.slane %v1831, 2
  %v1838 = vperm.slane %v1831, 3
  %v1875 = vunpack.c.l.b16 %v1799
  %v1876 = vunpack.c.h.b16 %v1799
  %v1877 = vunpack.c.l.b16 %v1800
  %v1878 = vunpack.c.h.b16 %v1800
  %v1879 = vunpack.c.l.b16 %v1801
  %v1880 = vunpack.c.h.b16 %v1801
  %v1881 = vunpack.c.l.b16 %v1802
  %v1882 = vunpack.c.h.b16 %v1802
  %v1883 = vunpack.c.l.b16 %v1803
  %v1884 = vunpack.c.h.b16 %v1803
  %v1885 = vunpack.c.l.b16 %v1804
  %v1886 = vunpack.c.h.b16 %v1804
  %v1887 = vunpack.c.l.b16 %v1805
  %v1888 = vunpack.c.h.b16 %v1805
  %v1889 = vunpack.c.l.b16 %v1806
  %v1890 = vunpack.c.h.b16 %v1806
  %v1891 = vunpack.c.l.b16 %v1807
  %v1892 = vunpack.c.h.b16 %v1807
  %v1893 = vunpack.c.l.b16 %v1808
  %v1894 = vunpack.c.h.b16 %v1808
  %v1895 = vunpack.c.l.b16 %v1809
  %v1896 = vunpack.c.h.b16 %v1809
  %v1897 = vunpack.c.l.b16 %v1810
  %v1898 = vunpack.c.h.b16 %v1810
  %v1899 = vunpack.c.l.b16 %v1811
  %v1900 = vunpack.c.h.b16 %v1811
  %v1901 = vunpack.c.l.b16 %v1812
  %v1902 = vunpack.c.h.b16 %v1812
  %v1903 = vunpack.c.l.b16 %v1813
  %v1904 = vunpack.c.h.b16 %v1813
  %v1905 = vunpack.c.l.b16 %v1814
  %v1906 = vunpack.c.h.b16 %v1814
  %v1907 = vunpack.c.l.b16 %v1815
  %v1908 = vunpack.c.h.b16 %v1815
  %v1909 = vunpack.c.l.b16 %v1816
  %v1910 = vunpack.c.h.b16 %v1816
  %v1911 = vunpack.c.l.b16 %v1817
  %v1912 = vunpack.c.h.b16 %v1817
  %v1913 = vunpack.c.l.b16 %v1818
  %v1914 = vunpack.c.h.b16 %v1818
  %v1915 = vunpack.c.l.b16 %v1819
  %v1916 = vunpack.c.h.b16 %v1819
  %v1917 = vunpack.c.l.b16 %v1820
  %v1918 = vunpack.c.h.b16 %v1820
  %v1919 = vunpack.c.l.b16 %v1821
  %v1920 = vunpack.c.h.b16 %v1821
  %v1921 = vunpack.c.l.b16 %v1822
  %v1922 = vunpack.c.h.b16 %v1822
  %v1923 = vunpack.c.l.b16 %v1823
  %v1924 = vunpack.c.h.b16 %v1823
  %v1925 = vunpack.c.l.b16 %v1824
  %v1926 = vunpack.c.h.b16 %v1824
  %v1927 = vunpack.c.l.b16 %v1825
  %v1928 = vunpack.c.h.b16 %v1825
  %v1929 = vunpack.c.l.b16 %v1826
  %v1930 = vunpack.c.h.b16 %v1826
  %v1931 = vunpack.c.l.b16 %v1827
  %v1932 = vunpack.c.h.b16 %v1827
  %v1933 = vunpack.c.l.b16 %v1828
  %v1934 = vunpack.c.h.b16 %v1828
  %v1935 = vunpack.c.l.b16 %v1829
  %v1936 = vunpack.c.h.b16 %v1829
  %v1937 = vunpack.c.l.b16 %v1830
  %v1938 = vunpack.c.h.b16 %v1830
  %v1939 = vpack.c.b16 %v1879, %v1875
  %v1940 = vpack.c.b16 %v1880, %v1876
  %v1941 = vpack.c.b16 %v1881, %v1877
  %v1942 = vpack.c.b16 %v1882, %v1878
  %v1943 = vpack.c.b16 %v1887, %v1883
  %v1944 = vpack.c.b16 %v1888, %v1884
  %v1945 = vpack.c.b16 %v1889, %v1885
  %v1946 = vpack.c.b16 %v1890, %v1886
  %v1947 = vpack.c.b16 %v1895, %v1891
  %v1948 = vpack.c.b16 %v1896, %v1892
  %v1949 = vpack.c.b16 %v1897, %v1893
  %v1950 = vpack.c.b16 %v1898, %v1894
  %v1951 = vpack.c.b16 %v1903, %v1899
  %v1952 = vpack.c.b16 %v1904, %v1900
  %v1953 = vpack.c.b16 %v1905, %v1901
  %v1954 = vpack.c.b16 %v1906, %v1902
  %v1955 = vpack.c.b16 %v1911, %v1907
  %v1956 = vpack.c.b16 %v1912, %v1908
  %v1957 = vpack.c.b16 %v1913, %v1909
  %v1958 = vpack.c.b16 %v1914, %v1910
  %v1959 = vpack.c.b16 %v1919, %v1915
  %v1960 = vpack.c.b16 %v1920, %v1916
  %v1961 = vpack.c.b16 %v1921, %v1917
  %v1962 = vpack.c.b16 %v1922, %v1918
  %v1963 = vpack.c.b16 %v1927, %v1923
  %v1964 = vpack.c.b16 %v1928, %v1924
  %v1965 = vpack.c.b16 %v1929, %v1925
  %v1966 = vpack.c.b16 %v1930, %v1926
  %v1967 = vpack.c.b16 %v1935, %v1931
  %v1968 = vpack.c.b16 %v1936, %v1932
  %v1969 = vpack.c.b16 %v1937, %v1933
  %v1970 = vpack.c.b16 %v1938, %v1934
  %2003 = vmatpush.bf16.msra.mxu0 %v1967
  %2004 = vmatpush.bf16.msra.mxu0 %v1963
  %2005 = vmatpush.bf16.msra.mxu0 %v1959
  %2006 = vmatpush.bf16.msra.mxu0 %v1955
  %2007 = vmatpush.bf16.msra.mxu0 %v1951
  %2008 = vmatpush.bf16.msra.mxu0 %v1947
  %2009 = vmatpush.bf16.msra.mxu0 %v1943
  %2010 = vmatpush.bf16.msra.mxu0 %v1939
  %2011 = vmatmul.bf16.gmra.mxu0 %v1832
  %v2012 = vpop.f32.mrf.mxu0
  %v2013 = vadd.f32 %v1835, %v2012
  %v2014 = vpop.f32.mrf.mxu0
  %v2015 = vadd.f32 %v1835, %v2014
  %2016 = vmatmul.bf16.gmra.mxu0 %v1833
  %v2017 = vpop.f32.mrf.mxu0
  %v2018 = vadd.f32 %v1835, %v2017
  %v2019 = vpop.f32.mrf.mxu0
  %v2020 = vadd.f32 %v1835, %v2019
  %2021 = vdwg.mxu0
  %2022 = vmatpush.bf16.msra.mxu0 %v1968
  %2023 = vmatpush.bf16.msra.mxu0 %v1964
  %2024 = vmatpush.bf16.msra.mxu0 %v1960
  %2025 = vmatpush.bf16.msra.mxu0 %v1956
  %2026 = vmatpush.bf16.msra.mxu0 %v1952
  %2027 = vmatpush.bf16.msra.mxu0 %v1948
  %2028 = vmatpush.bf16.msra.mxu0 %v1944
  %2029 = vmatpush.bf16.msra.mxu0 %v1940
  %2030 = vmatmul.bf16.gmra.mxu0 %v1832
  %v2031 = vpop.f32.mrf.mxu0
  %v2032 = vadd.f32 %v1836, %v2031
  %v2033 = vpop.f32.mrf.mxu0
  %v2034 = vadd.f32 %v1836, %v2033
  %2035 = vmatmul.bf16.gmra.mxu0 %v1833
  %v2036 = vpop.f32.mrf.mxu0
  %v2037 = vadd.f32 %v1836, %v2036
  %v2038 = vpop.f32.mrf.mxu0
  %v2039 = vadd.f32 %v1836, %v2038
  %2040 = vdwg.mxu0
  %2041 = vmatpush.bf16.msra.mxu0 %v1969
  %2042 = vmatpush.bf16.msra.mxu0 %v1965
  %2043 = vmatpush.bf16.msra.mxu0 %v1961
  %2044 = vmatpush.bf16.msra.mxu0 %v1957
  %2045 = vmatpush.bf16.msra.mxu0 %v1953
  %2046 = vmatpush.bf16.msra.mxu0 %v1949
  %2047 = vmatpush.bf16.msra.mxu0 %v1945
  %2048 = vmatpush.bf16.msra.mxu0 %v1941
  %2049 = vmatmul.bf16.gmra.mxu0 %v1832
  %v2050 = vpop.f32.mrf.mxu0
  %v2051 = vadd.f32 %v1837, %v2050
  %v2052 = vpop.f32.mrf.mxu0
  %v2053 = vadd.f32 %v1837, %v2052
  %2054 = vmatmul.bf16.gmra.mxu0 %v1833
  %v2055 = vpop.f32.mrf.mxu0
  %v2056 = vadd.f32 %v1837, %v2055
  %v2057 = vpop.f32.mrf.mxu0
  %v2058 = vadd.f32 %v1837, %v2057
  %2059 = vdwg.mxu0
  %2060 = vmatpush.bf16.msra.mxu0 %v1970
  %2061 = vmatpush.bf16.msra.mxu0 %v1966
  %2062 = vmatpush.bf16.msra.mxu0 %v1962
  %2063 = vmatpush.bf16.msra.mxu0 %v1958
  %2064 = vmatpush.bf16.msra.mxu0 %v1954
  %2065 = vmatpush.bf16.msra.mxu0 %v1950
  %2066 = vmatpush.bf16.msra.mxu0 %v1946
  %2067 = vmatpush.bf16.msra.mxu0 %v1942
  %2068 = vmatmul.bf16.gmra.mxu0 %v1832
  %v2069 = vpop.f32.mrf.mxu0
  %v2070 = vadd.f32 %v1838, %v2069
  %v2071 = vpop.f32.mrf.mxu0
  %v2072 = vadd.f32 %v1838, %v2071
  %2073 = vmatmul.bf16.gmra.mxu0 %v1833
  %v2074 = vpop.f32.mrf.mxu0
  %v2075 = vadd.f32 %v1838, %v2074
  %v2076 = vpop.f32.mrf.mxu0
  %v2077 = vadd.f32 %v1838, %v2076
  %2078 = vdwg.mxu0
  %v2079 = vmul.f32 %v2013, 1.702
  %v2080 = vmul.f32 %v2032, 1.702
  %v2081 = vmul.f32 %v2051, 1.702
  %v2082 = vmul.f32 %v2070, 1.702
  %v2083 = vmul.f32 %v2015, 1.702
  %v2084 = vmul.f32 %v2034, 1.702
  %v2085 = vmul.f32 %v2053, 1.702
  %v2086 = vmul.f32 %v2072, 1.702
  %v2087 = vmul.f32 %v2018, 1.702
  %v2088 = vmul.f32 %v2037, 1.702
  %v2089 = vmul.f32 %v2056, 1.702
  %v2090 = vmul.f32 %v2075, 1.702
  %v2091 = vmul.f32 %v2020, 1.702
  %v2092 = vmul.f32 %v2039, 1.702
  %v2093 = vmul.f32 %v2058, 1.702
  %v2094 = vmul.f32 %v2077, 1.702
  %v2095 = vxor.u32 %v2079, 2147483648
  %v2096 = vxor.u32 %v2080, 2147483648
  %v2097 = vxor.u32 %v2081, 2147483648
  %v2098 = vxor.u32 %v2082, 2147483648
  %v2099 = vxor.u32 %v2083, 2147483648
  %v2100 = vxor.u32 %v2084, 2147483648
  %v2101 = vxor.u32 %v2085, 2147483648
  %v2102 = vxor.u32 %v2086, 2147483648
  %v2103 = vxor.u32 %v2087, 2147483648
  %v2104 = vxor.u32 %v2088, 2147483648
  %v2105 = vxor.u32 %v2089, 2147483648
  %v2106 = vxor.u32 %v2090, 2147483648
  %v2107 = vxor.u32 %v2091, 2147483648
  %v2108 = vxor.u32 %v2092, 2147483648
  %v2109 = vxor.u32 %v2093, 2147483648
  %v2110 = vxor.u32 %v2094, 2147483648
  %v2111 = vmul.f32 %v2095, 1.442695
  %v2112 = vpow.pop %v2111
  %v2113 = vmul.f32 %v2096, 1.442695
  %v2114 = vpow.pop %v2113
  %v2115 = vmul.f32 %v2097, 1.442695
  %v2116 = vpow.pop %v2115
  %v2117 = vmul.f32 %v2098, 1.442695
  %v2118 = vpow.pop %v2117
  %v2119 = vmul.f32 %v2099, 1.442695
  %v2120 = vpow.pop %v2119
  %v2121 = vmul.f32 %v2100, 1.442695
  %v2122 = vpow.pop %v2121
  %v2123 = vmul.f32 %v2101, 1.442695
  %v2124 = vpow.pop %v2123
  %v2125 = vmul.f32 %v2102, 1.442695
  %v2126 = vpow.pop %v2125
  %v2127 = vmul.f32 %v2103, 1.442695
  %v2128 = vpow.pop %v2127
  %v2129 = vmul.f32 %v2104, 1.442695
  %v2130 = vpow.pop %v2129
  %v2131 = vmul.f32 %v2105, 1.442695
  %v2132 = vpow.pop %v2131
  %v2133 = vmul.f32 %v2106, 1.442695
  %v2134 = vpow.pop %v2133
  %v2135 = vmul.f32 %v2107, 1.442695
  %v2136 = vpow.pop %v2135
  %v2137 = vmul.f32 %v2108, 1.442695
  %v2138 = vpow.pop %v2137
  %v2139 = vmul.f32 %v2109, 1.442695
  %v2140 = vpow.pop %v2139
  %v2141 = vmul.f32 %v2110, 1.442695
  %v2142 = vpow.pop %v2141
  %v2143 = vadd.f32 %v2112, 1.0
  %v2144 = vadd.f32 %v2114, 1.0
  %v2145 = vadd.f32 %v2116, 1.0
  %v2146 = vadd.f32 %v2118, 1.0
  %v2147 = vadd.f32 %v2120, 1.0
  %v2148 = vadd.f32 %v2122, 1.0
  %v2149 = vadd.f32 %v2124, 1.0
  %v2150 = vadd.f32 %v2126, 1.0
  %v2151 = vadd.f32 %v2128, 1.0
  %v2152 = vadd.f32 %v2130, 1.0
  %v2153 = vadd.f32 %v2132, 1.0
  %v2154 = vadd.f32 %v2134, 1.0
  %v2155 = vadd.f32 %v2136, 1.0
  %v2156 = vadd.f32 %v2138, 1.0
  %v2157 = vadd.f32 %v2140, 1.0
  %v2158 = vadd.f32 %v2142, 1.0
  %v2159 = vrcp.pop %v2143
  %v2160 = vmul.f32 %v2143, %v2159
  %v2161 = vsub.f32 1.0, %v2160
  %v2162 = vmul.f32 %v2159, %v2161
  %v2163 = vadd.f32 %v2159, %v2162
  %vm2164 = vweird.f32 %v2143
  %vm2165 = vweird.f32 %v2159
  %vm2166 = vmor %vm2164, %vm2165
  %v2167 = vsel %vm2166, %v2159, %v2163
  %v2168 = vand.u32 2147483647, %v2143
  %vm2169 = vcmp.eq.f32.partialorder %v2168, 8.507059e+37
  %v2170 = vand.u32 %v2143, 2147483648
  %v2171 = vor.u32 1.1754944e-38, %v2170
  %v2172 = vsel %vm2169, %v2171, %v2167
  %v2173 = vmul.f32 1.0, %v2172
  %v2174 = vrcp.pop %v2144
  %v2175 = vmul.f32 %v2144, %v2174
  %v2176 = vsub.f32 1.0, %v2175
  %v2177 = vmul.f32 %v2174, %v2176
  %v2178 = vadd.f32 %v2174, %v2177
  %vm2179 = vweird.f32 %v2144
  %vm2180 = vweird.f32 %v2174
  %vm2181 = vmor %vm2179, %vm2180
  %v2182 = vsel %vm2181, %v2174, %v2178
  %v2183 = vand.u32 2147483647, %v2144
  %vm2184 = vcmp.eq.f32.partialorder %v2183, 8.507059e+37
  %v2185 = vand.u32 %v2144, 2147483648
  %v2186 = vor.u32 1.1754944e-38, %v2185
  %v2187 = vsel %vm2184, %v2186, %v2182
  %v2188 = vmul.f32 1.0, %v2187
  %v2189 = vrcp.pop %v2145
  %v2190 = vmul.f32 %v2145, %v2189
  %v2191 = vsub.f32 1.0, %v2190
  %v2192 = vmul.f32 %v2189, %v2191
  %v2193 = vadd.f32 %v2189, %v2192
  %vm2194 = vweird.f32 %v2145
  %vm2195 = vweird.f32 %v2189
  %vm2196 = vmor %vm2194, %vm2195
  %v2197 = vsel %vm2196, %v2189, %v2193
  %v2198 = vand.u32 2147483647, %v2145
  %vm2199 = vcmp.eq.f32.partialorder %v2198, 8.507059e+37
  %v2200 = vand.u32 %v2145, 2147483648
  %v2201 = vor.u32 1.1754944e-38, %v2200
  %v2202 = vsel %vm2199, %v2201, %v2197
  %v2203 = vmul.f32 1.0, %v2202
  %v2204 = vrcp.pop %v2146
  %v2205 = vmul.f32 %v2146, %v2204
  %v2206 = vsub.f32 1.0, %v2205
  %v2207 = vmul.f32 %v2204, %v2206
  %v2208 = vadd.f32 %v2204, %v2207
  %vm2209 = vweird.f32 %v2146
  %vm2210 = vweird.f32 %v2204
  %vm2211 = vmor %vm2209, %vm2210
  %v2212 = vsel %vm2211, %v2204, %v2208
  %v2213 = vand.u32 2147483647, %v2146
  %vm2214 = vcmp.eq.f32.partialorder %v2213, 8.507059e+37
  %v2215 = vand.u32 %v2146, 2147483648
  %v2216 = vor.u32 1.1754944e-38, %v2215
  %v2217 = vsel %vm2214, %v2216, %v2212
  %v2218 = vmul.f32 1.0, %v2217
  %v2219 = vrcp.pop %v2147
  %v2220 = vmul.f32 %v2147, %v2219
  %v2221 = vsub.f32 1.0, %v2220
  %v2222 = vmul.f32 %v2219, %v2221
  %v2223 = vadd.f32 %v2219, %v2222
  %vm2224 = vweird.f32 %v2147
  %vm2225 = vweird.f32 %v2219
  %vm2226 = vmor %vm2224, %vm2225
  %v2227 = vsel %vm2226, %v2219, %v2223
  %v2228 = vand.u32 2147483647, %v2147
  %vm2229 = vcmp.eq.f32.partialorder %v2228, 8.507059e+37
  %v2230 = vand.u32 %v2147, 2147483648
  %v2231 = vor.u32 1.1754944e-38, %v2230
  %v2232 = vsel %vm2229, %v2231, %v2227
  %v2233 = vmul.f32 1.0, %v2232
  %v2234 = vrcp.pop %v2148
  %v2235 = vmul.f32 %v2148, %v2234
  %v2236 = vsub.f32 1.0, %v2235
  %v2237 = vmul.f32 %v2234, %v2236
  %v2238 = vadd.f32 %v2234, %v2237
  %vm2239 = vweird.f32 %v2148
  %vm2240 = vweird.f32 %v2234
  %vm2241 = vmor %vm2239, %vm2240
  %v2242 = vsel %vm2241, %v2234, %v2238
  %v2243 = vand.u32 2147483647, %v2148
  %vm2244 = vcmp.eq.f32.partialorder %v2243, 8.507059e+37
  %v2245 = vand.u32 %v2148, 2147483648
  %v2246 = vor.u32 1.1754944e-38, %v2245
  %v2247 = vsel %vm2244, %v2246, %v2242
  %v2248 = vmul.f32 1.0, %v2247
  %v2249 = vrcp.pop %v2149
  %v2250 = vmul.f32 %v2149, %v2249
  %v2251 = vsub.f32 1.0, %v2250
  %v2252 = vmul.f32 %v2249, %v2251
  %v2253 = vadd.f32 %v2249, %v2252
  %vm2254 = vweird.f32 %v2149
  %vm2255 = vweird.f32 %v2249
  %vm2256 = vmor %vm2254, %vm2255
  %v2257 = vsel %vm2256, %v2249, %v2253
  %v2258 = vand.u32 2147483647, %v2149
  %vm2259 = vcmp.eq.f32.partialorder %v2258, 8.507059e+37
  %v2260 = vand.u32 %v2149, 2147483648
  %v2261 = vor.u32 1.1754944e-38, %v2260
  %v2262 = vsel %vm2259, %v2261, %v2257
  %v2263 = vmul.f32 1.0, %v2262
  %v2264 = vrcp.pop %v2150
  %v2265 = vmul.f32 %v2150, %v2264
  %v2266 = vsub.f32 1.0, %v2265
  %v2267 = vmul.f32 %v2264, %v2266
  %v2268 = vadd.f32 %v2264, %v2267
  %vm2269 = vweird.f32 %v2150
  %vm2270 = vweird.f32 %v2264
  %vm2271 = vmor %vm2269, %vm2270
  %v2272 = vsel %vm2271, %v2264, %v2268
  %v2273 = vand.u32 2147483647, %v2150
  %vm2274 = vcmp.eq.f32.partialorder %v2273, 8.507059e+37
  %v2275 = vand.u32 %v2150, 2147483648
  %v2276 = vor.u32 1.1754944e-38, %v2275
  %v2277 = vsel %vm2274, %v2276, %v2272
  %v2278 = vmul.f32 1.0, %v2277
  %v2279 = vrcp.pop %v2151
  %v2280 = vmul.f32 %v2151, %v2279
  %v2281 = vsub.f32 1.0, %v2280
  %v2282 = vmul.f32 %v2279, %v2281
  %v2283 = vadd.f32 %v2279, %v2282
  %vm2284 = vweird.f32 %v2151
  %vm2285 = vweird.f32 %v2279
  %vm2286 = vmor %vm2284, %vm2285
  %v2287 = vsel %vm2286, %v2279, %v2283
  %v2288 = vand.u32 2147483647, %v2151
  %vm2289 = vcmp.eq.f32.partialorder %v2288, 8.507059e+37
  %v2290 = vand.u32 %v2151, 2147483648
  %v2291 = vor.u32 1.1754944e-38, %v2290
  %v2292 = vsel %vm2289, %v2291, %v2287
  %v2293 = vmul.f32 1.0, %v2292
  %v2294 = vrcp.pop %v2152
  %v2295 = vmul.f32 %v2152, %v2294
  %v2296 = vsub.f32 1.0, %v2295
  %v2297 = vmul.f32 %v2294, %v2296
  %v2298 = vadd.f32 %v2294, %v2297
  %vm2299 = vweird.f32 %v2152
  %vm2300 = vweird.f32 %v2294
  %vm2301 = vmor %vm2299, %vm2300
  %v2302 = vsel %vm2301, %v2294, %v2298
  %v2303 = vand.u32 2147483647, %v2152
  %vm2304 = vcmp.eq.f32.partialorder %v2303, 8.507059e+37
  %v2305 = vand.u32 %v2152, 2147483648
  %v2306 = vor.u32 1.1754944e-38, %v2305
  %v2307 = vsel %vm2304, %v2306, %v2302
  %v2308 = vmul.f32 1.0, %v2307
  %v2309 = vrcp.pop %v2153
  %v2310 = vmul.f32 %v2153, %v2309
  %v2311 = vsub.f32 1.0, %v2310
  %v2312 = vmul.f32 %v2309, %v2311
  %v2313 = vadd.f32 %v2309, %v2312
  %vm2314 = vweird.f32 %v2153
  %vm2315 = vweird.f32 %v2309
  %vm2316 = vmor %vm2314, %vm2315
  %v2317 = vsel %vm2316, %v2309, %v2313
  %v2318 = vand.u32 2147483647, %v2153
  %vm2319 = vcmp.eq.f32.partialorder %v2318, 8.507059e+37
  %v2320 = vand.u32 %v2153, 2147483648
  %v2321 = vor.u32 1.1754944e-38, %v2320
  %v2322 = vsel %vm2319, %v2321, %v2317
  %v2323 = vmul.f32 1.0, %v2322
  %v2324 = vrcp.pop %v2154
  %v2325 = vmul.f32 %v2154, %v2324
  %v2326 = vsub.f32 1.0, %v2325
  %v2327 = vmul.f32 %v2324, %v2326
  %v2328 = vadd.f32 %v2324, %v2327
  %vm2329 = vweird.f32 %v2154
  %vm2330 = vweird.f32 %v2324
  %vm2331 = vmor %vm2329, %vm2330
  %v2332 = vsel %vm2331, %v2324, %v2328
  %v2333 = vand.u32 2147483647, %v2154
  %vm2334 = vcmp.eq.f32.partialorder %v2333, 8.507059e+37
  %v2335 = vand.u32 %v2154, 2147483648
  %v2336 = vor.u32 1.1754944e-38, %v2335
  %v2337 = vsel %vm2334, %v2336, %v2332
  %v2338 = vmul.f32 1.0, %v2337
  %v2339 = vrcp.pop %v2155
  %v2340 = vmul.f32 %v2155, %v2339
  %v2341 = vsub.f32 1.0, %v2340
  %v2342 = vmul.f32 %v2339, %v2341
  %v2343 = vadd.f32 %v2339, %v2342
  %vm2344 = vweird.f32 %v2155
  %vm2345 = vweird.f32 %v2339
  %vm2346 = vmor %vm2344, %vm2345
  %v2347 = vsel %vm2346, %v2339, %v2343
  %v2348 = vand.u32 2147483647, %v2155
  %vm2349 = vcmp.eq.f32.partialorder %v2348, 8.507059e+37
  %v2350 = vand.u32 %v2155, 2147483648
  %v2351 = vor.u32 1.1754944e-38, %v2350
  %v2352 = vsel %vm2349, %v2351, %v2347
  %v2353 = vmul.f32 1.0, %v2352
  %v2354 = vrcp.pop %v2156
  %v2355 = vmul.f32 %v2156, %v2354
  %v2356 = vsub.f32 1.0, %v2355
  %v2357 = vmul.f32 %v2354, %v2356
  %v2358 = vadd.f32 %v2354, %v2357
  %vm2359 = vweird.f32 %v2156
  %vm2360 = vweird.f32 %v2354
  %vm2361 = vmor %vm2359, %vm2360
  %v2362 = vsel %vm2361, %v2354, %v2358
  %v2363 = vand.u32 2147483647, %v2156
  %vm2364 = vcmp.eq.f32.partialorder %v2363, 8.507059e+37
  %v2365 = vand.u32 %v2156, 2147483648
  %v2366 = vor.u32 1.1754944e-38, %v2365
  %v2367 = vsel %vm2364, %v2366, %v2362
  %v2368 = vmul.f32 1.0, %v2367
  %v2369 = vrcp.pop %v2157
  %v2370 = vmul.f32 %v2157, %v2369
  %v2371 = vsub.f32 1.0, %v2370
  %v2372 = vmul.f32 %v2369, %v2371
  %v2373 = vadd.f32 %v2369, %v2372
  %vm2374 = vweird.f32 %v2157
  %vm2375 = vweird.f32 %v2369
  %vm2376 = vmor %vm2374, %vm2375
  %v2377 = vsel %vm2376, %v2369, %v2373
  %v2378 = vand.u32 2147483647, %v2157
  %vm2379 = vcmp.eq.f32.partialorder %v2378, 8.507059e+37
  %v2380 = vand.u32 %v2157, 2147483648
  %v2381 = vor.u32 1.1754944e-38, %v2380
  %v2382 = vsel %vm2379, %v2381, %v2377
  %v2383 = vmul.f32 1.0, %v2382
  %v2384 = vrcp.pop %v2158
  %v2385 = vmul.f32 %v2158, %v2384
  %v2386 = vsub.f32 1.0, %v2385
  %v2387 = vmul.f32 %v2384, %v2386
  %v2388 = vadd.f32 %v2384, %v2387
  %vm2389 = vweird.f32 %v2158
  %vm2390 = vweird.f32 %v2384
  %vm2391 = vmor %vm2389, %vm2390
  %v2392 = vsel %vm2391, %v2384, %v2388
  %v2393 = vand.u32 2147483647, %v2158
  %vm2394 = vcmp.eq.f32.partialorder %v2393, 8.507059e+37
  %v2395 = vand.u32 %v2158, 2147483648
  %v2396 = vor.u32 1.1754944e-38, %v2395
  %v2397 = vsel %vm2394, %v2396, %v2392
  %v2398 = vmul.f32 1.0, %v2397
  %v2399 = vmul.f32 %v2013, %v2173
  %v2400 = vmul.f32 %v2032, %v2188
  %v2401 = vmul.f32 %v2051, %v2203
  %v2402 = vmul.f32 %v2070, %v2218
  %v2403 = vmul.f32 %v2015, %v2233
  %v2404 = vmul.f32 %v2034, %v2248
  %v2405 = vmul.f32 %v2053, %v2263
  %v2406 = vmul.f32 %v2072, %v2278
  %v2407 = vmul.f32 %v2018, %v2293
  %v2408 = vmul.f32 %v2037, %v2308
  %v2409 = vmul.f32 %v2056, %v2323
  %v2410 = vmul.f32 %v2075, %v2338
  %v2411 = vmul.f32 %v2020, %v2353
  %v2412 = vmul.f32 %v2039, %v2368
  %v2413 = vmul.f32 %v2058, %v2383
  %v2414 = vmul.f32 %v2077, %v2398
  %v2415 = vld [vmem:[%s15] sm:$0xf]
  %v2416 = vld [vmem:[%s15 + $0x4] sm:$0xf]
  %v2417 = vld [vmem:[%s15 + $0x8] sm:$0xf]
  %v2418 = vld [vmem:[%s15 + $0xc] sm:$0xf]
  %v2419 = vld [vmem:[%s15 + $0x10] sm:$0xf]
  %v2420 = vld [vmem:[%s15 + $0x14] sm:$0xf]
  %v2421 = vld [vmem:[%s15 + $0x18] sm:$0xf]
  %v2422 = vld [vmem:[%s15 + $0x1c] sm:$0xf]
  %v2423 = vld [vmem:[%s15 + $0x20] sm:$0xf]
  %v2424 = vld [vmem:[%s15 + $0x24] sm:$0xf]
  %v2425 = vld [vmem:[%s15 + $0x28] sm:$0xf]
  %v2426 = vld [vmem:[%s15 + $0x2c] sm:$0xf]
  %v2427 = vld [vmem:[%s15 + $0x30] sm:$0xf]
  %v2428 = vld [vmem:[%s15 + $0x34] sm:$0xf]
  %v2429 = vld [vmem:[%s15 + $0x38] sm:$0xf]
  %v2430 = vld [vmem:[%s15 + $0x3c] sm:$0xf]
  %v2431 = vld [vmem:[%s15 + $0x40] sm:$0xf]
  %v2432 = vld [vmem:[%s15 + $0x44] sm:$0xf]
  %v2433 = vld [vmem:[%s15 + $0x48] sm:$0xf]
  %v2434 = vld [vmem:[%s15 + $0x4c] sm:$0xf]
  %v2435 = vld [vmem:[%s15 + $0x50] sm:$0xf]
  %v2436 = vld [vmem:[%s15 + $0x54] sm:$0xf]
  %v2437 = vld [vmem:[%s15 + $0x58] sm:$0xf]
  %v2438 = vld [vmem:[%s15 + $0x5c] sm:$0xf]
  %v2439 = vld [vmem:[%s15 + $0x60] sm:$0xf]
  %v2440 = vld [vmem:[%s15 + $0x64] sm:$0xf]
  %v2441 = vld [vmem:[%s15 + $0x68] sm:$0xf]
  %v2442 = vld [vmem:[%s15 + $0x6c] sm:$0xf]
  %v2443 = vld [vmem:[%s15 + $0x70] sm:$0xf]
  %v2444 = vld [vmem:[%s15 + $0x74] sm:$0xf]
  %v2445 = vld [vmem:[%s15 + $0x78] sm:$0xf]
  %v2446 = vld [vmem:[%s15 + $0x7c] sm:$0xf]
  %v2447 = vld [vmem:[%s15 + $0x80] sm:$0xf]
  %v2448 = vld [vmem:[%s15 + $0x84] sm:$0xf]
  %v2449 = vld [vmem:[%s15 + $0x88] sm:$0xf]
  %v2450 = vld [vmem:[%s15 + $0x8c] sm:$0xf]
  %v2451 = vld [vmem:[%s15 + $0x90] sm:$0xf]
  %v2452 = vld [vmem:[%s15 + $0x94] sm:$0xf]
  %v2453 = vld [vmem:[%s15 + $0x98] sm:$0xf]
  %v2454 = vld [vmem:[%s15 + $0x9c] sm:$0xf]
  %v2455 = vld [vmem:[%s15 + $0xa0] sm:$0xf]
  %v2456 = vld [vmem:[%s15 + $0xa4] sm:$0xf]
  %v2457 = vld [vmem:[%s15 + $0xa8] sm:$0xf]
  %v2458 = vld [vmem:[%s15 + $0xac] sm:$0xf]
  %v2459 = vld [vmem:[%s15 + $0xb0] sm:$0xf]
  %v2460 = vld [vmem:[%s15 + $0xb4] sm:$0xf]
  %v2461 = vld [vmem:[%s15 + $0xb8] sm:$0xf]
  %v2462 = vld [vmem:[%s15 + $0xbc] sm:$0xf]
  %v2463 = vld [vmem:[%s15 + $0xc0] sm:$0xf]
  %v2464 = vld [vmem:[%s15 + $0xc4] sm:$0xf]
  %v2465 = vld [vmem:[%s15 + $0xc8] sm:$0xf]
  %v2466 = vld [vmem:[%s15 + $0xcc] sm:$0xf]
  %v2467 = vld [vmem:[%s15 + $0xd0] sm:$0xf]
  %v2468 = vld [vmem:[%s15 + $0xd4] sm:$0xf]
  %v2469 = vld [vmem:[%s15 + $0xd8] sm:$0xf]
  %v2470 = vld [vmem:[%s15 + $0xdc] sm:$0xf]
  %v2471 = vld [vmem:[%s15 + $0xe0] sm:$0xf]
  %v2472 = vld [vmem:[%s15 + $0xe4] sm:$0xf]
  %v2473 = vld [vmem:[%s15 + $0xe8] sm:$0xf]
  %v2474 = vld [vmem:[%s15 + $0xec] sm:$0xf]
  %v2475 = vld [vmem:[%s15 + $0xf0] sm:$0xf]
  %v2476 = vld [vmem:[%s15 + $0xf4] sm:$0xf]
  %v2477 = vld [vmem:[%s15 + $0xf8] sm:$0xf]
  %v2478 = vld [vmem:[%s15 + $0xfc] sm:$0xf]
  %v2479 = vld [vmem:[%s16] sm:$0x1]
  %v2480 = vpack.c.bf16 %v2403, %v2399
  %v2481 = vpack.c.bf16 %v2404, %v2400
  %v2482 = vpack.c.bf16 %v2405, %v2401
  %v2483 = vpack.c.bf16 %v2406, %v2402
  %v2484 = vpack.c.bf16 %v2411, %v2407
  %v2485 = vpack.c.bf16 %v2412, %v2408
  %v2486 = vpack.c.bf16 %v2413, %v2409
  %v2487 = vpack.c.bf16 %v2414, %v2410
  %v2489 = vperm.slane %v2479, 0
  %v2555 = vunpack.c.l.b16 %v2415
  %v2556 = vunpack.c.l.b16 %v2416
  %v2557 = vunpack.c.l.b16 %v2417
  %v2558 = vunpack.c.l.b16 %v2418
  %v2559 = vunpack.c.l.b16 %v2419
  %v2560 = vunpack.c.l.b16 %v2420
  %v2561 = vunpack.c.l.b16 %v2421
  %v2562 = vunpack.c.l.b16 %v2422
  %v2563 = vunpack.c.l.b16 %v2423
  %v2564 = vunpack.c.l.b16 %v2424
  %v2565 = vunpack.c.l.b16 %v2425
  %v2566 = vunpack.c.l.b16 %v2426
  %v2567 = vunpack.c.l.b16 %v2427
  %v2568 = vunpack.c.l.b16 %v2428
  %v2569 = vunpack.c.l.b16 %v2429
  %v2570 = vunpack.c.l.b16 %v2430
  %v2571 = vunpack.c.l.b16 %v2431
  %v2572 = vunpack.c.l.b16 %v2432
  %v2573 = vunpack.c.l.b16 %v2433
  %v2574 = vunpack.c.l.b16 %v2434
  %v2575 = vunpack.c.l.b16 %v2435
  %v2576 = vunpack.c.l.b16 %v2436
  %v2577 = vunpack.c.l.b16 %v2437
  %v2578 = vunpack.c.l.b16 %v2438
  %v2579 = vunpack.c.l.b16 %v2439
  %v2580 = vunpack.c.l.b16 %v2440
  %v2581 = vunpack.c.l.b16 %v2441
  %v2582 = vunpack.c.l.b16 %v2442
  %v2583 = vunpack.c.l.b16 %v2443
  %v2584 = vunpack.c.l.b16 %v2444
  %v2585 = vunpack.c.l.b16 %v2445
  %v2586 = vunpack.c.l.b16 %v2446
  %v2587 = vunpack.c.l.b16 %v2447
  %v2588 = vunpack.c.l.b16 %v2448
  %v2589 = vunpack.c.l.b16 %v2449
  %v2590 = vunpack.c.l.b16 %v2450
  %v2591 = vunpack.c.l.b16 %v2451
  %v2592 = vunpack.c.l.b16 %v2452
  %v2593 = vunpack.c.l.b16 %v2453
  %v2594 = vunpack.c.l.b16 %v2454
  %v2595 = vunpack.c.l.b16 %v2455
  %v2596 = vunpack.c.l.b16 %v2456
  %v2597 = vunpack.c.l.b16 %v2457
  %v2598 = vunpack.c.l.b16 %v2458
  %v2599 = vunpack.c.l.b16 %v2459
  %v2600 = vunpack.c.l.b16 %v2460
  %v2601 = vunpack.c.l.b16 %v2461
  %v2602 = vunpack.c.l.b16 %v2462
  %v2603 = vunpack.c.l.b16 %v2463
  %v2604 = vunpack.c.l.b16 %v2464
  %v2605 = vunpack.c.l.b16 %v2465
  %v2606 = vunpack.c.l.b16 %v2466
  %v2607 = vunpack.c.l.b16 %v2467
  %v2608 = vunpack.c.l.b16 %v2468
  %v2609 = vunpack.c.l.b16 %v2469
  %v2610 = vunpack.c.l.b16 %v2470
  %v2611 = vunpack.c.l.b16 %v2471
  %v2612 = vunpack.c.l.b16 %v2472
  %v2613 = vunpack.c.l.b16 %v2473
  %v2614 = vunpack.c.l.b16 %v2474
  %v2615 = vunpack.c.l.b16 %v2475
  %v2616 = vunpack.c.l.b16 %v2476
  %v2617 = vunpack.c.l.b16 %v2477
  %v2618 = vunpack.c.l.b16 %v2478
  %v2619 = vpack.c.b16 %v2556, %v2555
  %v2620 = vpack.c.b16 %v2558, %v2557
  %v2621 = vpack.c.b16 %v2560, %v2559
  %v2622 = vpack.c.b16 %v2562, %v2561
  %v2623 = vpack.c.b16 %v2564, %v2563
  %v2624 = vpack.c.b16 %v2566, %v2565
  %v2625 = vpack.c.b16 %v2568, %v2567
  %v2626 = vpack.c.b16 %v2570, %v2569
  %v2627 = vpack.c.b16 %v2572, %v2571
  %v2628 = vpack.c.b16 %v2574, %v2573
  %v2629 = vpack.c.b16 %v2576, %v2575
  %v2630 = vpack.c.b16 %v2578, %v2577
  %v2631 = vpack.c.b16 %v2580, %v2579
  %v2632 = vpack.c.b16 %v2582, %v2581
  %v2633 = vpack.c.b16 %v2584, %v2583
  %v2634 = vpack.c.b16 %v2586, %v2585
  %v2635 = vpack.c.b16 %v2588, %v2587
  %v2636 = vpack.c.b16 %v2590, %v2589
  %v2637 = vpack.c.b16 %v2592, %v2591
  %v2638 = vpack.c.b16 %v2594, %v2593
  %v2639 = vpack.c.b16 %v2596, %v2595
  %v2640 = vpack.c.b16 %v2598, %v2597
  %v2641 = vpack.c.b16 %v2600, %v2599
  %v2642 = vpack.c.b16 %v2602, %v2601
  %v2643 = vpack.c.b16 %v2604, %v2603
  %v2644 = vpack.c.b16 %v2606, %v2605
  %v2645 = vpack.c.b16 %v2608, %v2607
  %v2646 = vpack.c.b16 %v2610, %v2609
  %v2647 = vpack.c.b16 %v2612, %v2611
  %v2648 = vpack.c.b16 %v2614, %v2613
  %v2649 = vpack.c.b16 %v2616, %v2615
  %v2650 = vpack.c.b16 %v2618, %v2617
  %2683 = vmatpush.bf16.msra.mxu0 %v2626
  %2684 = vmatpush.bf16.msra.mxu0 %v2625
  %2685 = vmatpush.bf16.msra.mxu0 %v2624
  %2686 = vmatpush.bf16.msra.mxu0 %v2623
  %2687 = vmatpush.bf16.msra.mxu0 %v2622
  %2688 = vmatpush.bf16.msra.mxu0 %v2621
  %2689 = vmatpush.bf16.msra.mxu0 %v2620
  %2690 = vmatpush.bf16.msra.mxu0 %v2619
  %2691 = vmatmul.bf16.gmra.mxu0 %v2480
  %v2692 = vpop.f32.mrf.mxu0
  %v2693 = vadd.f32 %v2489, %v2692
  %v2694 = vpop.f32.mrf.mxu0
  %v2695 = vadd.f32 %v2489, %v2694
  %2696 = vmatmul.bf16.gmra.mxu0 %v2484
  %v2697 = vpop.f32.mrf.mxu0
  %v2698 = vadd.f32 %v2489, %v2697
  %v2699 = vpop.f32.mrf.mxu0
  %v2700 = vadd.f32 %v2489, %v2699
  %2701 = vdwg.mxu0
  %2702 = vmatpush.bf16.msra.mxu0 %v2634
  %2703 = vmatpush.bf16.msra.mxu0 %v2633
  %2704 = vmatpush.bf16.msra.mxu0 %v2632
  %2705 = vmatpush.bf16.msra.mxu0 %v2631
  %2706 = vmatpush.bf16.msra.mxu0 %v2630
  %2707 = vmatpush.bf16.msra.mxu0 %v2629
  %2708 = vmatpush.bf16.msra.mxu0 %v2628
  %2709 = vmatpush.bf16.msra.mxu0 %v2627
  %2710 = vmatmul.bf16.gmra.mxu0 %v2481
  %v2711 = vpop.f32.mrf.mxu0
  %v2712 = vadd.f32 %v2693, %v2711
  %v2713 = vpop.f32.mrf.mxu0
  %v2714 = vadd.f32 %v2695, %v2713
  %2715 = vmatmul.bf16.gmra.mxu0 %v2485
  %v2716 = vpop.f32.mrf.mxu0
  %v2717 = vadd.f32 %v2698, %v2716
  %v2718 = vpop.f32.mrf.mxu0
  %v2719 = vadd.f32 %v2700, %v2718
  %2720 = vdwg.mxu0
  %2721 = vmatpush.bf16.msra.mxu0 %v2642
  %2722 = vmatpush.bf16.msra.mxu0 %v2641
  %2723 = vmatpush.bf16.msra.mxu0 %v2640
  %2724 = vmatpush.bf16.msra.mxu0 %v2639
  %2725 = vmatpush.bf16.msra.mxu0 %v2638
  %2726 = vmatpush.bf16.msra.mxu0 %v2637
  %2727 = vmatpush.bf16.msra.mxu0 %v2636
  %2728 = vmatpush.bf16.msra.mxu0 %v2635
  %2729 = vmatmul.bf16.gmra.mxu0 %v2482
  %v2730 = vpop.f32.mrf.mxu0
  %v2731 = vadd.f32 %v2712, %v2730
  %v2732 = vpop.f32.mrf.mxu0
  %v2733 = vadd.f32 %v2714, %v2732
  %2734 = vmatmul.bf16.gmra.mxu0 %v2486
  %v2735 = vpop.f32.mrf.mxu0
  %v2736 = vadd.f32 %v2717, %v2735
  %v2737 = vpop.f32.mrf.mxu0
  %v2738 = vadd.f32 %v2719, %v2737
  %2739 = vdwg.mxu0
  %2740 = vmatpush.bf16.msra.mxu0 %v2650
  %2741 = vmatpush.bf16.msra.mxu0 %v2649
  %2742 = vmatpush.bf16.msra.mxu0 %v2648
  %2743 = vmatpush.bf16.msra.mxu0 %v2647
  %2744 = vmatpush.bf16.msra.mxu0 %v2646
  %2745 = vmatpush.bf16.msra.mxu0 %v2645
  %2746 = vmatpush.bf16.msra.mxu0 %v2644
  %2747 = vmatpush.bf16.msra.mxu0 %v2643
  %2748 = vmatmul.bf16.gmra.mxu0 %v2483
  %v2749 = vpop.f32.mrf.mxu0
  %v2750 = vadd.f32 %v2731, %v2749
  %v2751 = vpop.f32.mrf.mxu0
  %v2752 = vadd.f32 %v2733, %v2751
  %2753 = vmatmul.bf16.gmra.mxu0 %v2487
  %v2754 = vpop.f32.mrf.mxu0
  %v2755 = vadd.f32 %v2736, %v2754
  %v2756 = vpop.f32.mrf.mxu0
  %v2757 = vadd.f32 %v2738, %v2756
  %2758 = vdwg.mxu0
  %v2759 = vadd.f32 %v1699, %v2750
  %v2760 = vadd.f32 %v1700, %v2752
  %v2761 = vadd.f32 %v1701, %v2755
  %v2762 = vadd.f32 %v1702, %v2757
  %s2763 = scalar_lea.vmem %s5, 1
  %v2764 = vld [vmem:[%s2763] sm:$0x1]
  %s2765 = scalar_lea.vmem %s6, 1
  %v2766 = vld [vmem:[%s2765] sm:$0x1]
  %2767 = vadd.xlane.f32.xlu0 %v2759
  %v2768 = vpop.xlane.xlu0 %2767
  %2769 = vadd.xlane.f32.xlu0 %v2760
  %v2770 = vpop.xlane.xlu0 %2769
  %2771 = vadd.xlane.f32.xlu0 %v2761
  %v2772 = vpop.xlane.xlu0 %2771
  %2773 = vadd.xlane.f32.xlu0 %v2762
  %v2774 = vpop.xlane.xlu0 %2773
  %v2775 = vmul.f32 %v2768, %v655
  %v2776 = vmul.f32 %v2770, %v655
  %v2777 = vmul.f32 %v2772, %v655
  %v2778 = vmul.f32 %v2774, %v655
  %v2779 = vsub.f32 %v2759, %v2775
  %v2780 = vsub.f32 %v2760, %v2776
  %v2781 = vsub.f32 %v2761, %v2777
  %v2782 = vsub.f32 %v2762, %v2778
  %v2783 = vmul.f32 %v2779, %v2779
  %v2784 = vmul.f32 %v2780, %v2780
  %v2785 = vmul.f32 %v2781, %v2781
  %v2786 = vmul.f32 %v2782, %v2782
  %2787 = vadd.xlane.f32.xlu0 %v2783
  %v2788 = vpop.xlane.xlu0 %2787
  %2789 = vadd.xlane.f32.xlu0 %v2784
  %v2790 = vpop.xlane.xlu0 %2789
  %2791 = vadd.xlane.f32.xlu0 %v2785
  %v2792 = vpop.xlane.xlu0 %2791
  %2793 = vadd.xlane.f32.xlu0 %v2786
  %v2794 = vpop.xlane.xlu0 %2793
  %v2795 = vmul.f32 %v2788, %v655
  %v2796 = vmul.f32 %v2790, %v655
  %v2797 = vmul.f32 %v2792, %v655
  %v2798 = vmul.f32 %v2794, %v655
  %v2799 = vadd.f32 %v2795, 1e-05
  %v2800 = vadd.f32 %v2796, 1e-05
  %v2801 = vadd.f32 %v2797, 1e-05
  %v2802 = vadd.f32 %v2798, 1e-05
  %v2803 = vrsqrt.pop %v2799
  %v2804 = vmul.f32 %v2803, %v2799
  %v2805 = vmul.f32 %v2804, %v2803
  %v2806 = vmul.f32 0.5, %v2805
  %v2807 = vsub.f32 1.5, %v2806
  %v2808 = vmul.f32 %v2803, %v2807
  %vm2809 = vweird.f32 %v2799
  %vm2810 = vweird.f32 %v2803
  %vm2811 = vmor %vm2809, %vm2810
  %v2812 = vsel %vm2811, %v2803, %v2808
  %v2813 = vrsqrt.pop %v2800
  %v2814 = vmul.f32 %v2813, %v2800
  %v2815 = vmul.f32 %v2814, %v2813
  %v2816 = vmul.f32 0.5, %v2815
  %v2817 = vsub.f32 1.5, %v2816
  %v2818 = vmul.f32 %v2813, %v2817
  %vm2819 = vweird.f32 %v2800
  %vm2820 = vweird.f32 %v2813
  %vm2821 = vmor %vm2819, %vm2820
  %v2822 = vsel %vm2821, %v2813, %v2818
  %v2823 = vrsqrt.pop %v2801
  %v2824 = vmul.f32 %v2823, %v2801
  %v2825 = vmul.f32 %v2824, %v2823
  %v2826 = vmul.f32 0.5, %v2825
  %v2827 = vsub.f32 1.5, %v2826
  %v2828 = vmul.f32 %v2823, %v2827
  %vm2829 = vweird.f32 %v2801
  %vm2830 = vweird.f32 %v2823
  %vm2831 = vmor %vm2829, %vm2830
  %v2832 = vsel %vm2831, %v2823, %v2828
  %v2833 = vrsqrt.pop %v2802
  %v2834 = vmul.f32 %v2833, %v2802
  %v2835 = vmul.f32 %v2834, %v2833
  %v2836 = vmul.f32 0.5, %v2835
  %v2837 = vsub.f32 1.5, %v2836
  %v2838 = vmul.f32 %v2833, %v2837
  %vm2839 = vweird.f32 %v2802
  %vm2840 = vweird.f32 %v2833
  %vm2841 = vmor %vm2839, %vm2840
  %v2842 = vsel %vm2841, %v2833, %v2838
  %v2843 = vmul.f32 %v2779, %v2812
  %v2844 = vmul.f32 %v2780, %v2822
  %v2845 = vmul.f32 %v2781, %v2832
  %v2846 = vmul.f32 %v2782, %v2842
  %v2848 = vperm.slane %v2764, 0
  %v2850 = vmul.f32 %v2843, %v2848
  %v2851 = vmul.f32 %v2844, %v2848
  %v2852 = vmul.f32 %v2845, %v2848
  %v2853 = vmul.f32 %v2846, %v2848
  %v2855 = vperm.slane %v2766, 0
  %v2857 = vadd.f32 %v2850, %v2855
  %v2858 = vadd.f32 %v2851, %v2855
  %v2859 = vadd.f32 %v2852, %v2855
  %v2860 = vadd.f32 %v2853, %v2855
  %s2861 = scalar_lea.vmem %s7, 192
  %v2862 = vld [vmem:[%s2861] sm:$0xff]
  %v2863 = vld [vmem:[%s2861 + $0x8] sm:$0xf]
  %v2864 = vld [vmem:[%s2861 + $0xc] sm:$0xff]
  %v2865 = vld [vmem:[%s2861 + $0x14] sm:$0xf]
  %v2866 = vld [vmem:[%s2861 + $0x18] sm:$0xff]
  %v2867 = vld [vmem:[%s2861 + $0x20] sm:$0xf]
  %v2868 = vld [vmem:[%s2861 + $0x24] sm:$0xff]
  %v2869 = vld [vmem:[%s2861 + $0x2c] sm:$0xf]
  %v2870 = vld [vmem:[%s2861 + $0x30] sm:$0xff]
  %v2871 = vld [vmem:[%s2861 + $0x38] sm:$0xf]
  %v2872 = vld [vmem:[%s2861 + $0x3c] sm:$0xff]
  %v2873 = vld [vmem:[%s2861 + $0x44] sm:$0xf]
  %v2874 = vld [vmem:[%s2861 + $0x48] sm:$0xff]
  %v2875 = vld [vmem:[%s2861 + $0x50] sm:$0xf]
  %v2876 = vld [vmem:[%s2861 + $0x54] sm:$0xff]
  %v2877 = vld [vmem:[%s2861 + $0x5c] sm:$0xf]
  %v2878 = vld [vmem:[%s2861 + $0x60] sm:$0xff]
  %v2879 = vld [vmem:[%s2861 + $0x68] sm:$0xf]
  %v2880 = vld [vmem:[%s2861 + $0x6c] sm:$0xff]
  %v2881 = vld [vmem:[%s2861 + $0x74] sm:$0xf]
  %v2882 = vld [vmem:[%s2861 + $0x78] sm:$0xff]
  %v2883 = vld [vmem:[%s2861 + $0x80] sm:$0xf]
  %v2884 = vld [vmem:[%s2861 + $0x84] sm:$0xff]
  %v2885 = vld [vmem:[%s2861 + $0x8c] sm:$0xf]
  %v2886 = vld [vmem:[%s2861 + $0x90] sm:$0xff]
  %v2887 = vld [vmem:[%s2861 + $0x98] sm:$0xf]
  %v2888 = vld [vmem:[%s2861 + $0x9c] sm:$0xff]
  %v2889 = vld [vmem:[%s2861 + $0xa4] sm:$0xf]
  %v2890 = vld [vmem:[%s2861 + $0xa8] sm:$0xff]
  %v2891 = vld [vmem:[%s2861 + $0xb0] sm:$0xf]
  %v2892 = vld [vmem:[%s2861 + $0xb4] sm:$0xff]
  %v2893 = vld [vmem:[%s2861 + $0xbc] sm:$0xf]
  %s2894 = scalar_lea.vmem %s8, 3
  %v2895 = vld [vmem:[%s2894] sm:$0x7]
  %v2896 = vpack.c.bf16 %v2858, %v2857
  %v2897 = vpack.c.bf16 %v2860, %v2859
  %v2899 = vperm.slane %v2895, 0
  %v2900 = vperm.slane %v2895, 1
  %v2901 = vperm.slane %v2895, 2
  %v2937 = vunpack.c.l.b16 %v2862
  %v2938 = vunpack.c.h.b16 %v2862
  %v2939 = vunpack.c.l.b16 %v2863
  %v2940 = vunpack.c.l.b16 %v2864
  %v2941 = vunpack.c.h.b16 %v2864
  %v2942 = vunpack.c.l.b16 %v2865
  %v2943 = vunpack.c.l.b16 %v2866
  %v2944 = vunpack.c.h.b16 %v2866
  %v2945 = vunpack.c.l.b16 %v2867
  %v2946 = vunpack.c.l.b16 %v2868
  %v2947 = vunpack.c.h.b16 %v2868
  %v2948 = vunpack.c.l.b16 %v2869
  %v2949 = vunpack.c.l.b16 %v2870
  %v2950 = vunpack.c.h.b16 %v2870
  %v2951 = vunpack.c.l.b16 %v2871
  %v2952 = vunpack.c.l.b16 %v2872
  %v2953 = vunpack.c.h.b16 %v2872
  %v2954 = vunpack.c.l.b16 %v2873
  %v2955 = vunpack.c.l.b16 %v2874
  %v2956 = vunpack.c.h.b16 %v2874
  %v2957 = vunpack.c.l.b16 %v2875
  %v2958 = vunpack.c.l.b16 %v2876
  %v2959 = vunpack.c.h.b16 %v2876
  %v2960 = vunpack.c.l.b16 %v2877
  %v2961 = vunpack.c.l.b16 %v2878
  %v2962 = vunpack.c.h.b16 %v2878
  %v2963 = vunpack.c.l.b16 %v2879
  %v2964 = vunpack.c.l.b16 %v2880
  %v2965 = vunpack.c.h.b16 %v2880
  %v2966 = vunpack.c.l.b16 %v2881
  %v2967 = vunpack.c.l.b16 %v2882
  %v2968 = vunpack.c.h.b16 %v2882
  %v2969 = vunpack.c.l.b16 %v2883
  %v2970 = vunpack.c.l.b16 %v2884
  %v2971 = vunpack.c.h.b16 %v2884
  %v2972 = vunpack.c.l.b16 %v2885
  %v2973 = vunpack.c.l.b16 %v2886
  %v2974 = vunpack.c.h.b16 %v2886
  %v2975 = vunpack.c.l.b16 %v2887
  %v2976 = vunpack.c.l.b16 %v2888
  %v2977 = vunpack.c.h.b16 %v2888
  %v2978 = vunpack.c.l.b16 %v2889
  %v2979 = vunpack.c.l.b16 %v2890
  %v2980 = vunpack.c.h.b16 %v2890
  %v2981 = vunpack.c.l.b16 %v2891
  %v2982 = vunpack.c.l.b16 %v2892
  %v2983 = vunpack.c.h.b16 %v2892
  %v2984 = vunpack.c.l.b16 %v2893
  %v2985 = vpack.c.b16 %v2940, %v2937
  %v2986 = vpack.c.b16 %v2941, %v2938
  %v2987 = vpack.c.b16 %v2942, %v2939
  %v2988 = vpack.c.b16 %v2946, %v2943
  %v2989 = vpack.c.b16 %v2947, %v2944
  %v2990 = vpack.c.b16 %v2948, %v2945
  %v2991 = vpack.c.b16 %v2952, %v2949
  %v2992 = vpack.c.b16 %v2953, %v2950
  %v2993 = vpack.c.b16 %v2954, %v2951
  %v2994 = vpack.c.b16 %v2958, %v2955
  %v2995 = vpack.c.b16 %v2959, %v2956
  %v2996 = vpack.c.b16 %v2960, %v2957
  %v2997 = vpack.c.b16 %v2964, %v2961
  %v2998 = vpack.c.b16 %v2965, %v2962
  %v2999 = vpack.c.b16 %v2966, %v2963
  %v3000 = vpack.c.b16 %v2970, %v2967
  %v3001 = vpack.c.b16 %v2971, %v2968
  %v3002 = vpack.c.b16 %v2972, %v2969
  %v3003 = vpack.c.b16 %v2976, %v2973
  %v3004 = vpack.c.b16 %v2977, %v2974
  %v3005 = vpack.c.b16 %v2978, %v2975
  %v3006 = vpack.c.b16 %v2982, %v2979
  %v3007 = vpack.c.b16 %v2983, %v2980
  %v3008 = vpack.c.b16 %v2984, %v2981
  %3033 = vmatpush.bf16.msra.mxu0 %v3006
  %3034 = vmatpush.bf16.msra.mxu0 %v3003
  %3035 = vmatpush.bf16.msra.mxu0 %v3000
  %3036 = vmatpush.bf16.msra.mxu0 %v2997
  %3037 = vmatpush.bf16.msra.mxu0 %v2994
  %3038 = vmatpush.bf16.msra.mxu0 %v2991
  %3039 = vmatpush.bf16.msra.mxu0 %v2988
  %3040 = vmatpush.bf16.msra.mxu0 %v2985
  %3041 = vmatmul.bf16.gmra.mxu0 %v2896
  %v3042 = vpop.f32.mrf.mxu0
  %v3043 = vadd.f32 %v2899, %v3042
  %v3044 = vpop.f32.mrf.mxu0
  %v3045 = vadd.f32 %v2899, %v3044
  %3046 = vmatmul.bf16.gmra.mxu0 %v2897
  %v3047 = vpop.f32.mrf.mxu0
  %v3048 = vadd.f32 %v2899, %v3047
  %v3049 = vpop.f32.mrf.mxu0
  %v3050 = vadd.f32 %v2899, %v3049
  %3051 = vdwg.mxu0
  %3052 = vmatpush.bf16.msra.mxu0 %v3007
  %3053 = vmatpush.bf16.msra.mxu0 %v3004
  %3054 = vmatpush.bf16.msra.mxu0 %v3001
  %3055 = vmatpush.bf16.msra.mxu0 %v2998
  %3056 = vmatpush.bf16.msra.mxu0 %v2995
  %3057 = vmatpush.bf16.msra.mxu0 %v2992
  %3058 = vmatpush.bf16.msra.mxu0 %v2989
  %3059 = vmatpush.bf16.msra.mxu0 %v2986
  %3060 = vmatmul.bf16.gmra.mxu0 %v2896
  %v3061 = vpop.f32.mrf.mxu0
  %v3062 = vadd.f32 %v2900, %v3061
  %v3063 = vpop.f32.mrf.mxu0
  %v3064 = vadd.f32 %v2900, %v3063
  %3065 = vmatmul.bf16.gmra.mxu0 %v2897
  %v3066 = vpop.f32.mrf.mxu0
  %v3067 = vadd.f32 %v2900, %v3066
  %v3068 = vpop.f32.mrf.mxu0
  %v3069 = vadd.f32 %v2900, %v3068
  %3070 = vdwg.mxu0
  %3071 = vmatpush.bf16.msra.mxu0 %v3008
  %3072 = vmatpush.bf16.msra.mxu0 %v3005
  %3073 = vmatpush.bf16.msra.mxu0 %v3002
  %3074 = vmatpush.bf16.msra.mxu0 %v2999
  %3075 = vmatpush.bf16.msra.mxu0 %v2996
  %3076 = vmatpush.bf16.msra.mxu0 %v2993
  %3077 = vmatpush.bf16.msra.mxu0 %v2990
  %3078 = vmatpush.bf16.msra.mxu0 %v2987
  %3079 = vmatmul.bf16.gmra.mxu0 %v2896
  %v3080 = vpop.f32.mrf.mxu0
  %v3081 = vadd.f32 %v2901, %v3080
  %v3082 = vpop.f32.mrf.mxu0
  %v3083 = vadd.f32 %v2901, %v3082
  %3084 = vmatmul.bf16.gmra.mxu0 %v2897
  %v3085 = vpop.f32.mrf.mxu0
  %v3086 = vadd.f32 %v2901, %v3085
  %v3087 = vpop.f32.mrf.mxu0
  %v3088 = vadd.f32 %v2901, %v3087
  %3089 = vdwg.mxu0
  %v3091 = vsel %vm1068, %v3043, 0
  %v3094 = vsel %vm1068, %v3062, 0
  %3096 = vmatpush.xpose.msra.mxu0 0.0
  %3097 = vmatpush.xpose.msra.mxu0 0.0
  %3098 = vmatpush.xpose.msra.mxu0 0.0
  %3099 = vmatpush.xpose.msra.mxu0 0.0
  %3100 = vmatpush.xpose.msra.mxu0 0.0
  %3101 = vmatpush.xpose.msra.mxu0 0.0
  %3102 = vmatpush.xpose.msra.mxu0 0.0
  %3103 = vmatpush.xpose.msra.mxu0 0.0
  %3104 = vmatpush.xpose.msra.mxu0 0.0
  %3105 = vmatpush.xpose.msra.mxu0 0.0
  %3106 = vmatpush.xpose.msra.mxu0 0.0
  %3107 = vmatpush.xpose.msra.mxu0 0.0
  %3108 = vmatpush.xpose.msra.mxu0 0.0
  %3109 = vmatpush.xpose.msra.mxu0 0.0
  %3110 = vmatpush.xpose.msra.mxu0 0.0
  %3111 = vmatpush.xpose.msra.mxu0 %v3094
  %3112 = vmatmul.f32.gmra.mxu0 %v3091
  %v3113 = vpop.f32.mrf.mxu0
  %v3114 = vadd.f32 0.0, %v3113
  %3115 = vdwg.mxu0
  %v3117 = vsel %vm1068, %v3045, 0
  %v3120 = vsel %vm1068, %v3064, 0
  %3122 = vmatpush.xpose.msra.mxu0 0.0
  %3123 = vmatpush.xpose.msra.mxu0 0.0
  %3124 = vmatpush.xpose.msra.mxu0 0.0
  %3125 = vmatpush.xpose.msra.mxu0 0.0
  %3126 = vmatpush.xpose.msra.mxu0 0.0
  %3127 = vmatpush.xpose.msra.mxu0 0.0
  %3128 = vmatpush.xpose.msra.mxu0 0.0
  %3129 = vmatpush.xpose.msra.mxu0 0.0
  %3130 = vmatpush.xpose.msra.mxu0 0.0
  %3131 = vmatpush.xpose.msra.mxu0 0.0
  %3132 = vmatpush.xpose.msra.mxu0 0.0
  %3133 = vmatpush.xpose.msra.mxu0 0.0
  %3134 = vmatpush.xpose.msra.mxu0 0.0
  %3135 = vmatpush.xpose.msra.mxu0 0.0
  %3136 = vmatpush.xpose.msra.mxu0 0.0
  %3137 = vmatpush.xpose.msra.mxu0 %v3120
  %3138 = vmatmul.f32.gmra.mxu0 %v3117
  %v3139 = vpop.f32.mrf.mxu0
  %v3140 = vadd.f32 0.0, %v3139
  %3141 = vdwg.mxu0
  %v3143 = vsel %vm1068, %v3048, 0
  %v3146 = vsel %vm1068, %v3067, 0
  %3148 = vmatpush.xpose.msra.mxu0 0.0
  %3149 = vmatpush.xpose.msra.mxu0 0.0
  %3150 = vmatpush.xpose.msra.mxu0 0.0
  %3151 = vmatpush.xpose.msra.mxu0 0.0
  %3152 = vmatpush.xpose.msra.mxu0 0.0
  %3153 = vmatpush.xpose.msra.mxu0 0.0
  %3154 = vmatpush.xpose.msra.mxu0 0.0
  %3155 = vmatpush.xpose.msra.mxu0 0.0
  %3156 = vmatpush.xpose.msra.mxu0 0.0
  %3157 = vmatpush.xpose.msra.mxu0 0.0
  %3158 = vmatpush.xpose.msra.mxu0 0.0
  %3159 = vmatpush.xpose.msra.mxu0 0.0
  %3160 = vmatpush.xpose.msra.mxu0 0.0
  %3161 = vmatpush.xpose.msra.mxu0 0.0
  %3162 = vmatpush.xpose.msra.mxu0 0.0
  %3163 = vmatpush.xpose.msra.mxu0 %v3146
  %3164 = vmatmul.f32.gmra.mxu0 %v3143
  %v3165 = vpop.f32.mrf.mxu0
  %v3166 = vadd.f32 0.0, %v3165
  %3167 = vdwg.mxu0
  %v3169 = vsel %vm1068, %v3050, 0
  %v3172 = vsel %vm1068, %v3069, 0
  %3174 = vmatpush.xpose.msra.mxu0 0.0
  %3175 = vmatpush.xpose.msra.mxu0 0.0
  %3176 = vmatpush.xpose.msra.mxu0 0.0
  %3177 = vmatpush.xpose.msra.mxu0 0.0
  %3178 = vmatpush.xpose.msra.mxu0 0.0
  %3179 = vmatpush.xpose.msra.mxu0 0.0
  %3180 = vmatpush.xpose.msra.mxu0 0.0
  %3181 = vmatpush.xpose.msra.mxu0 0.0
  %3182 = vmatpush.xpose.msra.mxu0 0.0
  %3183 = vmatpush.xpose.msra.mxu0 0.0
  %3184 = vmatpush.xpose.msra.mxu0 0.0
  %3185 = vmatpush.xpose.msra.mxu0 0.0
  %3186 = vmatpush.xpose.msra.mxu0 0.0
  %3187 = vmatpush.xpose.msra.mxu0 0.0
  %3188 = vmatpush.xpose.msra.mxu0 0.0
  %3189 = vmatpush.xpose.msra.mxu0 %v3172
  %3190 = vmatmul.f32.gmra.mxu0 %v3169
  %v3191 = vpop.f32.mrf.mxu0
  %v3192 = vadd.f32 0.0, %v3191
  %3193 = vdwg.mxu0
  %v3194 = vmul.f32 %v3114, 0.125
  %v3195 = vmul.f32 %v3140, 0.125
  %v3196 = vmul.f32 %v3166, 0.125
  %v3197 = vmul.f32 %v3192, 0.125
  %v3198 = vsel %vm744, %v3194, -1e+30
  %v3199 = vsel %vm744, %v3195, -1e+30
  %v3200 = vsel %vm744, %v3196, -1e+30
  %v3201 = vsel %vm744, %v3197, -1e+30
  %v3202 = vsel %vm1181, %v3198, -inf
  %3203 = vmax.xlane.f32.xlu0 %v3202
  %v3204 = vpop.xlane.xlu0 %3203
  %v3205 = vsel %vm1181, %v3199, -inf
  %3206 = vmax.xlane.f32.xlu0 %v3205
  %v3207 = vpop.xlane.xlu0 %3206
  %v3208 = vsel %vm1181, %v3200, -inf
  %3209 = vmax.xlane.f32.xlu0 %v3208
  %v3210 = vpop.xlane.xlu0 %3209
  %v3211 = vsel %vm1181, %v3201, -inf
  %3212 = vmax.xlane.f32.xlu0 %v3211
  %v3213 = vpop.xlane.xlu0 %3212
  %v3214 = vsub.f32 %v3198, %v3204
  %v3215 = vsub.f32 %v3199, %v3207
  %v3216 = vsub.f32 %v3200, %v3210
  %v3217 = vsub.f32 %v3201, %v3213
  %v3218 = vmul.f32 %v3214, 1.442695
  %v3219 = vpow.pop %v3218
  %v3220 = vmul.f32 %v3215, 1.442695
  %v3221 = vpow.pop %v3220
  %v3222 = vmul.f32 %v3216, 1.442695
  %v3223 = vpow.pop %v3222
  %v3224 = vmul.f32 %v3217, 1.442695
  %v3225 = vpow.pop %v3224
  %v3226 = vsel %vm1181, %v3219, 0.0
  %3227 = vadd.xlane.f32.xlu0 %v3226
  %v3228 = vpop.xlane.xlu0 %3227
  %v3229 = vsel %vm1181, %v3221, 0.0
  %3230 = vadd.xlane.f32.xlu0 %v3229
  %v3231 = vpop.xlane.xlu0 %3230
  %v3232 = vsel %vm1181, %v3223, 0.0
  %3233 = vadd.xlane.f32.xlu0 %v3232
  %v3234 = vpop.xlane.xlu0 %3233
  %v3235 = vsel %vm1181, %v3225, 0.0
  %3236 = vadd.xlane.f32.xlu0 %v3235
  %v3237 = vpop.xlane.xlu0 %3236
  %v3238 = vrcp.pop %v3228
  %v3239 = vrcp.pop %v3231
  %v3240 = vrcp.pop %v3234
  %v3241 = vrcp.pop %v3237
  %v3242 = vmul.f32 %v3219, %v3238
  %v3243 = vmul.f32 %v3221, %v3239
  %v3244 = vmul.f32 %v3223, %v3240
  %v3245 = vmul.f32 %v3225, %v3241
  %v3247 = vsel %vm1181, %v3242, 0
  %3249 = vmatpush.msra.mxu0 0.0
  %3250 = vmatpush.msra.mxu0 0.0
  %3251 = vmatpush.msra.mxu0 0.0
  %3252 = vmatpush.msra.mxu0 0.0
  %3253 = vmatpush.msra.mxu0 0.0
  %3254 = vmatpush.msra.mxu0 0.0
  %3255 = vmatpush.msra.mxu0 0.0
  %3256 = vmatpush.msra.mxu0 0.0
  %3257 = vmatpush.msra.mxu0 0.0
  %3258 = vmatpush.msra.mxu0 0.0
  %3259 = vmatpush.msra.mxu0 0.0
  %3260 = vmatpush.msra.mxu0 0.0
  %3261 = vmatpush.msra.mxu0 0.0
  %3262 = vmatpush.msra.mxu0 0.0
  %3263 = vmatpush.msra.mxu0 0.0
  %3264 = vmatpush.msra.mxu0 %v3081
  %3265 = vmatmul.f32.gmra.mxu0 %v3247
  %v3266 = vpop.f32.mrf.mxu0
  %v3267 = vadd.f32 0.0, %v3266
  %3268 = vdwg.mxu0
  %v3270 = vsel %vm1181, %v3243, 0
  %3272 = vmatpush.msra.mxu0 0.0
  %3273 = vmatpush.msra.mxu0 0.0
  %3274 = vmatpush.msra.mxu0 0.0
  %3275 = vmatpush.msra.mxu0 0.0
  %3276 = vmatpush.msra.mxu0 0.0
  %3277 = vmatpush.msra.mxu0 0.0
  %3278 = vmatpush.msra.mxu0 0.0
  %3279 = vmatpush.msra.mxu0 0.0
  %3280 = vmatpush.msra.mxu0 0.0
  %3281 = vmatpush.msra.mxu0 0.0
  %3282 = vmatpush.msra.mxu0 0.0
  %3283 = vmatpush.msra.mxu0 0.0
  %3284 = vmatpush.msra.mxu0 0.0
  %3285 = vmatpush.msra.mxu0 0.0
  %3286 = vmatpush.msra.mxu0 0.0
  %3287 = vmatpush.msra.mxu0 %v3083
  %3288 = vmatmul.f32.gmra.mxu0 %v3270
  %v3289 = vpop.f32.mrf.mxu0
  %v3290 = vadd.f32 0.0, %v3289
  %3291 = vdwg.mxu0
  %v3293 = vsel %vm1181, %v3244, 0
  %3295 = vmatpush.msra.mxu0 0.0
  %3296 = vmatpush.msra.mxu0 0.0
  %3297 = vmatpush.msra.mxu0 0.0
  %3298 = vmatpush.msra.mxu0 0.0
  %3299 = vmatpush.msra.mxu0 0.0
  %3300 = vmatpush.msra.mxu0 0.0
  %3301 = vmatpush.msra.mxu0 0.0
  %3302 = vmatpush.msra.mxu0 0.0
  %3303 = vmatpush.msra.mxu0 0.0
  %3304 = vmatpush.msra.mxu0 0.0
  %3305 = vmatpush.msra.mxu0 0.0
  %3306 = vmatpush.msra.mxu0 0.0
  %3307 = vmatpush.msra.mxu0 0.0
  %3308 = vmatpush.msra.mxu0 0.0
  %3309 = vmatpush.msra.mxu0 0.0
  %3310 = vmatpush.msra.mxu0 %v3086
  %3311 = vmatmul.f32.gmra.mxu0 %v3293
  %v3312 = vpop.f32.mrf.mxu0
  %v3313 = vadd.f32 0.0, %v3312
  %3314 = vdwg.mxu0
  %v3316 = vsel %vm1181, %v3245, 0
  %3318 = vmatpush.msra.mxu0 0.0
  %3319 = vmatpush.msra.mxu0 0.0
  %3320 = vmatpush.msra.mxu0 0.0
  %3321 = vmatpush.msra.mxu0 0.0
  %3322 = vmatpush.msra.mxu0 0.0
  %3323 = vmatpush.msra.mxu0 0.0
  %3324 = vmatpush.msra.mxu0 0.0
  %3325 = vmatpush.msra.mxu0 0.0
  %3326 = vmatpush.msra.mxu0 0.0
  %3327 = vmatpush.msra.mxu0 0.0
  %3328 = vmatpush.msra.mxu0 0.0
  %3329 = vmatpush.msra.mxu0 0.0
  %3330 = vmatpush.msra.mxu0 0.0
  %3331 = vmatpush.msra.mxu0 0.0
  %3332 = vmatpush.msra.mxu0 0.0
  %3333 = vmatpush.msra.mxu0 %v3088
  %3334 = vmatmul.f32.gmra.mxu0 %v3316
  %v3335 = vpop.f32.mrf.mxu0
  %v3336 = vadd.f32 0.0, %v3335
  %3337 = vdwg.mxu0
  %3338 = vrot.lane.b32.xlu0 %v3043, 64
  %v3339 = vpop.permute.xlu0 %3338
  %3340 = vrot.lane.b32.xlu0 %v3062, 64
  %v3341 = vpop.permute.xlu0 %3340
  %v3342 = vsel %vm1068, %v3339, 0
  %v3344 = vsel %vm1068, %v3341, 0
  %3346 = vmatpush.xpose.msra.mxu0 0.0
  %3347 = vmatpush.xpose.msra.mxu0 0.0
  %3348 = vmatpush.xpose.msra.mxu0 0.0
  %3349 = vmatpush.xpose.msra.mxu0 0.0
  %3350 = vmatpush.xpose.msra.mxu0 0.0
  %3351 = vmatpush.xpose.msra.mxu0 0.0
  %3352 = vmatpush.xpose.msra.mxu0 0.0
  %3353 = vmatpush.xpose.msra.mxu0 0.0
  %3354 = vmatpush.xpose.msra.mxu0 0.0
  %3355 = vmatpush.xpose.msra.mxu0 0.0
  %3356 = vmatpush.xpose.msra.mxu0 0.0
  %3357 = vmatpush.xpose.msra.mxu0 0.0
  %3358 = vmatpush.xpose.msra.mxu0 0.0
  %3359 = vmatpush.xpose.msra.mxu0 0.0
  %3360 = vmatpush.xpose.msra.mxu0 0.0
  %3361 = vmatpush.xpose.msra.mxu0 %v3344
  %3362 = vmatmul.f32.gmra.mxu0 %v3342
  %v3363 = vpop.f32.mrf.mxu0
  %v3364 = vadd.f32 0.0, %v3363
  %3365 = vdwg.mxu0
  %3366 = vrot.lane.b32.xlu0 %v3045, 64
  %v3367 = vpop.permute.xlu0 %3366
  %3368 = vrot.lane.b32.xlu0 %v3064, 64
  %v3369 = vpop.permute.xlu0 %3368
  %v3370 = vsel %vm1068, %v3367, 0
  %v3372 = vsel %vm1068, %v3369, 0
  %3374 = vmatpush.xpose.msra.mxu0 0.0
  %3375 = vmatpush.xpose.msra.mxu0 0.0
  %3376 = vmatpush.xpose.msra.mxu0 0.0
  %3377 = vmatpush.xpose.msra.mxu0 0.0
  %3378 = vmatpush.xpose.msra.mxu0 0.0
  %3379 = vmatpush.xpose.msra.mxu0 0.0
  %3380 = vmatpush.xpose.msra.mxu0 0.0
  %3381 = vmatpush.xpose.msra.mxu0 0.0
  %3382 = vmatpush.xpose.msra.mxu0 0.0
  %3383 = vmatpush.xpose.msra.mxu0 0.0
  %3384 = vmatpush.xpose.msra.mxu0 0.0
  %3385 = vmatpush.xpose.msra.mxu0 0.0
  %3386 = vmatpush.xpose.msra.mxu0 0.0
  %3387 = vmatpush.xpose.msra.mxu0 0.0
  %3388 = vmatpush.xpose.msra.mxu0 0.0
  %3389 = vmatpush.xpose.msra.mxu0 %v3372
  %3390 = vmatmul.f32.gmra.mxu0 %v3370
  %v3391 = vpop.f32.mrf.mxu0
  %v3392 = vadd.f32 0.0, %v3391
  %3393 = vdwg.mxu0
  %3394 = vrot.lane.b32.xlu0 %v3048, 64
  %v3395 = vpop.permute.xlu0 %3394
  %3396 = vrot.lane.b32.xlu0 %v3067, 64
  %v3397 = vpop.permute.xlu0 %3396
  %v3398 = vsel %vm1068, %v3395, 0
  %v3400 = vsel %vm1068, %v3397, 0
  %3402 = vmatpush.xpose.msra.mxu0 0.0
  %3403 = vmatpush.xpose.msra.mxu0 0.0
  %3404 = vmatpush.xpose.msra.mxu0 0.0
  %3405 = vmatpush.xpose.msra.mxu0 0.0
  %3406 = vmatpush.xpose.msra.mxu0 0.0
  %3407 = vmatpush.xpose.msra.mxu0 0.0
  %3408 = vmatpush.xpose.msra.mxu0 0.0
  %3409 = vmatpush.xpose.msra.mxu0 0.0
  %3410 = vmatpush.xpose.msra.mxu0 0.0
  %3411 = vmatpush.xpose.msra.mxu0 0.0
  %3412 = vmatpush.xpose.msra.mxu0 0.0
  %3413 = vmatpush.xpose.msra.mxu0 0.0
  %3414 = vmatpush.xpose.msra.mxu0 0.0
  %3415 = vmatpush.xpose.msra.mxu0 0.0
  %3416 = vmatpush.xpose.msra.mxu0 0.0
  %3417 = vmatpush.xpose.msra.mxu0 %v3400
  %3418 = vmatmul.f32.gmra.mxu0 %v3398
  %v3419 = vpop.f32.mrf.mxu0
  %v3420 = vadd.f32 0.0, %v3419
  %3421 = vdwg.mxu0
  %3422 = vrot.lane.b32.xlu0 %v3050, 64
  %v3423 = vpop.permute.xlu0 %3422
  %3424 = vrot.lane.b32.xlu0 %v3069, 64
  %v3425 = vpop.permute.xlu0 %3424
  %v3426 = vsel %vm1068, %v3423, 0
  %v3428 = vsel %vm1068, %v3425, 0
  %3430 = vmatpush.xpose.msra.mxu0 0.0
  %3431 = vmatpush.xpose.msra.mxu0 0.0
  %3432 = vmatpush.xpose.msra.mxu0 0.0
  %3433 = vmatpush.xpose.msra.mxu0 0.0
  %3434 = vmatpush.xpose.msra.mxu0 0.0
  %3435 = vmatpush.xpose.msra.mxu0 0.0
  %3436 = vmatpush.xpose.msra.mxu0 0.0
  %3437 = vmatpush.xpose.msra.mxu0 0.0
  %3438 = vmatpush.xpose.msra.mxu0 0.0
  %3439 = vmatpush.xpose.msra.mxu0 0.0
  %3440 = vmatpush.xpose.msra.mxu0 0.0
  %3441 = vmatpush.xpose.msra.mxu0 0.0
  %3442 = vmatpush.xpose.msra.mxu0 0.0
  %3443 = vmatpush.xpose.msra.mxu0 0.0
  %3444 = vmatpush.xpose.msra.mxu0 0.0
  %3445 = vmatpush.xpose.msra.mxu0 %v3428
  %3446 = vmatmul.f32.gmra.mxu0 %v3426
  %v3447 = vpop.f32.mrf.mxu0
  %v3448 = vadd.f32 0.0, %v3447
  %3449 = vdwg.mxu0
  %v3450 = vmul.f32 %v3364, 0.125
  %v3451 = vmul.f32 %v3392, 0.125
  %v3452 = vmul.f32 %v3420, 0.125
  %v3453 = vmul.f32 %v3448, 0.125
  %v3454 = vsel %vm744, %v3450, -1e+30
  %v3455 = vsel %vm744, %v3451, -1e+30
  %v3456 = vsel %vm744, %v3452, -1e+30
  %v3457 = vsel %vm744, %v3453, -1e+30
  %v3458 = vsel %vm1181, %v3454, -inf
  %3459 = vmax.xlane.f32.xlu0 %v3458
  %v3460 = vpop.xlane.xlu0 %3459
  %v3461 = vsel %vm1181, %v3455, -inf
  %3462 = vmax.xlane.f32.xlu0 %v3461
  %v3463 = vpop.xlane.xlu0 %3462
  %v3464 = vsel %vm1181, %v3456, -inf
  %3465 = vmax.xlane.f32.xlu0 %v3464
  %v3466 = vpop.xlane.xlu0 %3465
  %v3467 = vsel %vm1181, %v3457, -inf
  %3468 = vmax.xlane.f32.xlu0 %v3467
  %v3469 = vpop.xlane.xlu0 %3468
  %v3470 = vsub.f32 %v3454, %v3460
  %v3471 = vsub.f32 %v3455, %v3463
  %v3472 = vsub.f32 %v3456, %v3466
  %v3473 = vsub.f32 %v3457, %v3469
  %v3474 = vmul.f32 %v3470, 1.442695
  %v3475 = vpow.pop %v3474
  %v3476 = vmul.f32 %v3471, 1.442695
  %v3477 = vpow.pop %v3476
  %v3478 = vmul.f32 %v3472, 1.442695
  %v3479 = vpow.pop %v3478
  %v3480 = vmul.f32 %v3473, 1.442695
  %v3481 = vpow.pop %v3480
  %v3482 = vsel %vm1181, %v3475, 0.0
  %3483 = vadd.xlane.f32.xlu0 %v3482
  %v3484 = vpop.xlane.xlu0 %3483
  %v3485 = vsel %vm1181, %v3477, 0.0
  %3486 = vadd.xlane.f32.xlu0 %v3485
  %v3487 = vpop.xlane.xlu0 %3486
  %v3488 = vsel %vm1181, %v3479, 0.0
  %3489 = vadd.xlane.f32.xlu0 %v3488
  %v3490 = vpop.xlane.xlu0 %3489
  %v3491 = vsel %vm1181, %v3481, 0.0
  %3492 = vadd.xlane.f32.xlu0 %v3491
  %v3493 = vpop.xlane.xlu0 %3492
  %v3494 = vrcp.pop %v3484
  %v3495 = vrcp.pop %v3487
  %v3496 = vrcp.pop %v3490
  %v3497 = vrcp.pop %v3493
  %v3498 = vmul.f32 %v3475, %v3494
  %v3499 = vmul.f32 %v3477, %v3495
  %v3500 = vmul.f32 %v3479, %v3496
  %v3501 = vmul.f32 %v3481, %v3497
  %3503 = vrot.lane.b32.xlu0 %v3081, 64
  %v3504 = vpop.permute.xlu0 %3503
  %v3507 = vsel %vm1181, %v3498, 0
  %3509 = vmatpush.msra.mxu0 0.0
  %3510 = vmatpush.msra.mxu0 0.0
  %3511 = vmatpush.msra.mxu0 0.0
  %3512 = vmatpush.msra.mxu0 0.0
  %3513 = vmatpush.msra.mxu0 0.0
  %3514 = vmatpush.msra.mxu0 0.0
  %3515 = vmatpush.msra.mxu0 0.0
  %3516 = vmatpush.msra.mxu0 0.0
  %3517 = vmatpush.msra.mxu0 0.0
  %3518 = vmatpush.msra.mxu0 0.0
  %3519 = vmatpush.msra.mxu0 0.0
  %3520 = vmatpush.msra.mxu0 0.0
  %3521 = vmatpush.msra.mxu0 0.0
  %3522 = vmatpush.msra.mxu0 0.0
  %3523 = vmatpush.msra.mxu0 0.0
  %3524 = vmatpush.msra.mxu0 %v3504
  %3525 = vmatmul.f32.gmra.mxu0 %v3507
  %v3526 = vpop.f32.mrf.mxu0
  %v3527 = vadd.f32 0.0, %v3526
  %3528 = vdwg.mxu0
  %3530 = vrot.lane.b32.xlu0 %v3083, 64
  %v3531 = vpop.permute.xlu0 %3530
  %v3534 = vsel %vm1181, %v3499, 0
  %3536 = vmatpush.msra.mxu0 0.0
  %3537 = vmatpush.msra.mxu0 0.0
  %3538 = vmatpush.msra.mxu0 0.0
  %3539 = vmatpush.msra.mxu0 0.0
  %3540 = vmatpush.msra.mxu0 0.0
  %3541 = vmatpush.msra.mxu0 0.0
  %3542 = vmatpush.msra.mxu0 0.0
  %3543 = vmatpush.msra.mxu0 0.0
  %3544 = vmatpush.msra.mxu0 0.0
  %3545 = vmatpush.msra.mxu0 0.0
  %3546 = vmatpush.msra.mxu0 0.0
  %3547 = vmatpush.msra.mxu0 0.0
  %3548 = vmatpush.msra.mxu0 0.0
  %3549 = vmatpush.msra.mxu0 0.0
  %3550 = vmatpush.msra.mxu0 0.0
  %3551 = vmatpush.msra.mxu0 %v3531
  %3552 = vmatmul.f32.gmra.mxu0 %v3534
  %v3553 = vpop.f32.mrf.mxu0
  %v3554 = vadd.f32 0.0, %v3553
  %3555 = vdwg.mxu0
  %3557 = vrot.lane.b32.xlu0 %v3086, 64
  %v3558 = vpop.permute.xlu0 %3557
  %v3561 = vsel %vm1181, %v3500, 0
  %3563 = vmatpush.msra.mxu0 0.0
  %3564 = vmatpush.msra.mxu0 0.0
  %3565 = vmatpush.msra.mxu0 0.0
  %3566 = vmatpush.msra.mxu0 0.0
  %3567 = vmatpush.msra.mxu0 0.0
  %3568 = vmatpush.msra.mxu0 0.0
  %3569 = vmatpush.msra.mxu0 0.0
  %3570 = vmatpush.msra.mxu0 0.0
  %3571 = vmatpush.msra.mxu0 0.0
  %3572 = vmatpush.msra.mxu0 0.0
  %3573 = vmatpush.msra.mxu0 0.0
  %3574 = vmatpush.msra.mxu0 0.0
  %3575 = vmatpush.msra.mxu0 0.0
  %3576 = vmatpush.msra.mxu0 0.0
  %3577 = vmatpush.msra.mxu0 0.0
  %3578 = vmatpush.msra.mxu0 %v3558
  %3579 = vmatmul.f32.gmra.mxu0 %v3561
  %v3580 = vpop.f32.mrf.mxu0
  %v3581 = vadd.f32 0.0, %v3580
  %3582 = vdwg.mxu0
  %3584 = vrot.lane.b32.xlu0 %v3088, 64
  %v3585 = vpop.permute.xlu0 %3584
  %v3588 = vsel %vm1181, %v3501, 0
  %3590 = vmatpush.msra.mxu0 0.0
  %3591 = vmatpush.msra.mxu0 0.0
  %3592 = vmatpush.msra.mxu0 0.0
  %3593 = vmatpush.msra.mxu0 0.0
  %3594 = vmatpush.msra.mxu0 0.0
  %3595 = vmatpush.msra.mxu0 0.0
  %3596 = vmatpush.msra.mxu0 0.0
  %3597 = vmatpush.msra.mxu0 0.0
  %3598 = vmatpush.msra.mxu0 0.0
  %3599 = vmatpush.msra.mxu0 0.0
  %3600 = vmatpush.msra.mxu0 0.0
  %3601 = vmatpush.msra.mxu0 0.0
  %3602 = vmatpush.msra.mxu0 0.0
  %3603 = vmatpush.msra.mxu0 0.0
  %3604 = vmatpush.msra.mxu0 0.0
  %3605 = vmatpush.msra.mxu0 %v3585
  %3606 = vmatmul.f32.gmra.mxu0 %v3588
  %v3607 = vpop.f32.mrf.mxu0
  %v3608 = vadd.f32 0.0, %v3607
  %3609 = vdwg.mxu0
  %3614 = vrot.lane.b32.xlu0 %v3527, 64
  %v3615 = vpop.permute.xlu0 %3614
  %3616 = vrot.lane.b32.xlu0 %v3554, 64
  %v3617 = vpop.permute.xlu0 %3616
  %3618 = vrot.lane.b32.xlu0 %v3581, 64
  %v3619 = vpop.permute.xlu0 %3618
  %3620 = vrot.lane.b32.xlu0 %v3608, 64
  %v3621 = vpop.permute.xlu0 %3620
  %v3626 = vsel %vm1068, %v3267, %v3615
  %v3627 = vsel %vm1068, %v3290, %v3617
  %v3628 = vsel %vm1068, %v3313, %v3619
  %v3629 = vsel %vm1068, %v3336, %v3621
  %s3630 = scalar_lea.vmem %s9, 64
  %v3631 = vld [vmem:[%s3630] sm:$0xf]
  %v3632 = vld [vmem:[%s3630 + $0x4] sm:$0xf]
  %v3633 = vld [vmem:[%s3630 + $0x8] sm:$0xf]
  %v3634 = vld [vmem:[%s3630 + $0xc] sm:$0xf]
  %v3635 = vld [vmem:[%s3630 + $0x10] sm:$0xf]
  %v3636 = vld [vmem:[%s3630 + $0x14] sm:$0xf]
  %v3637 = vld [vmem:[%s3630 + $0x18] sm:$0xf]
  %v3638 = vld [vmem:[%s3630 + $0x1c] sm:$0xf]
  %v3639 = vld [vmem:[%s3630 + $0x20] sm:$0xf]
  %v3640 = vld [vmem:[%s3630 + $0x24] sm:$0xf]
  %v3641 = vld [vmem:[%s3630 + $0x28] sm:$0xf]
  %v3642 = vld [vmem:[%s3630 + $0x2c] sm:$0xf]
  %v3643 = vld [vmem:[%s3630 + $0x30] sm:$0xf]
  %v3644 = vld [vmem:[%s3630 + $0x34] sm:$0xf]
  %v3645 = vld [vmem:[%s3630 + $0x38] sm:$0xf]
  %v3646 = vld [vmem:[%s3630 + $0x3c] sm:$0xf]
  %s3647 = scalar_lea.vmem %s10, 1
  %v3648 = vld [vmem:[%s3647] sm:$0x1]
  %v3649 = vpack.c.bf16 %v3627, %v3626
  %v3650 = vpack.c.bf16 %v3629, %v3628
  %v3652 = vperm.slane %v3648, 0
  %v3670 = vunpack.c.l.b16 %v3631
  %v3671 = vunpack.c.l.b16 %v3632
  %v3672 = vunpack.c.l.b16 %v3633
  %v3673 = vunpack.c.l.b16 %v3634
  %v3674 = vunpack.c.l.b16 %v3635
  %v3675 = vunpack.c.l.b16 %v3636
  %v3676 = vunpack.c.l.b16 %v3637
  %v3677 = vunpack.c.l.b16 %v3638
  %v3678 = vunpack.c.l.b16 %v3639
  %v3679 = vunpack.c.l.b16 %v3640
  %v3680 = vunpack.c.l.b16 %v3641
  %v3681 = vunpack.c.l.b16 %v3642
  %v3682 = vunpack.c.l.b16 %v3643
  %v3683 = vunpack.c.l.b16 %v3644
  %v3684 = vunpack.c.l.b16 %v3645
  %v3685 = vunpack.c.l.b16 %v3646
  %v3686 = vpack.c.b16 %v3671, %v3670
  %v3687 = vpack.c.b16 %v3673, %v3672
  %v3688 = vpack.c.b16 %v3675, %v3674
  %v3689 = vpack.c.b16 %v3677, %v3676
  %v3690 = vpack.c.b16 %v3679, %v3678
  %v3691 = vpack.c.b16 %v3681, %v3680
  %v3692 = vpack.c.b16 %v3683, %v3682
  %v3693 = vpack.c.b16 %v3685, %v3684
  %3702 = vmatpush.bf16.msra.mxu0 %v3693
  %3703 = vmatpush.bf16.msra.mxu0 %v3692
  %3704 = vmatpush.bf16.msra.mxu0 %v3691
  %3705 = vmatpush.bf16.msra.mxu0 %v3690
  %3706 = vmatpush.bf16.msra.mxu0 %v3689
  %3707 = vmatpush.bf16.msra.mxu0 %v3688
  %3708 = vmatpush.bf16.msra.mxu0 %v3687
  %3709 = vmatpush.bf16.msra.mxu0 %v3686
  %3710 = vmatmul.bf16.gmra.mxu0 %v3649
  %v3711 = vpop.f32.mrf.mxu0
  %v3712 = vadd.f32 %v3652, %v3711
  %v3713 = vpop.f32.mrf.mxu0
  %v3714 = vadd.f32 %v3652, %v3713
  %3715 = vmatmul.bf16.gmra.mxu0 %v3650
  %v3716 = vpop.f32.mrf.mxu0
  %v3717 = vadd.f32 %v3652, %v3716
  %v3718 = vpop.f32.mrf.mxu0
  %v3719 = vadd.f32 %v3652, %v3718
  %3720 = vdwg.mxu0
  %v3721 = vadd.f32 %v2759, %v3712
  %v3722 = vadd.f32 %v2760, %v3714
  %v3723 = vadd.f32 %v2761, %v3717
  %v3724 = vadd.f32 %v2762, %v3719
  %s3725 = scalar_lea.vmem %s11, 1
  %v3726 = vld [vmem:[%s3725] sm:$0x1]
  %s3727 = scalar_lea.vmem %s12, 1
  %v3728 = vld [vmem:[%s3727] sm:$0x1]
  %3729 = vadd.xlane.f32.xlu0 %v3721
  %v3730 = vpop.xlane.xlu0 %3729
  %3731 = vadd.xlane.f32.xlu0 %v3722
  %v3732 = vpop.xlane.xlu0 %3731
  %3733 = vadd.xlane.f32.xlu0 %v3723
  %v3734 = vpop.xlane.xlu0 %3733
  %3735 = vadd.xlane.f32.xlu0 %v3724
  %v3736 = vpop.xlane.xlu0 %3735
  %v3737 = vmul.f32 %v3730, %v655
  %v3738 = vmul.f32 %v3732, %v655
  %v3739 = vmul.f32 %v3734, %v655
  %v3740 = vmul.f32 %v3736, %v655
  %v3741 = vsub.f32 %v3721, %v3737
  %v3742 = vsub.f32 %v3722, %v3738
  %v3743 = vsub.f32 %v3723, %v3739
  %v3744 = vsub.f32 %v3724, %v3740
  %v3745 = vmul.f32 %v3741, %v3741
  %v3746 = vmul.f32 %v3742, %v3742
  %v3747 = vmul.f32 %v3743, %v3743
  %v3748 = vmul.f32 %v3744, %v3744
  %3749 = vadd.xlane.f32.xlu0 %v3745
  %v3750 = vpop.xlane.xlu0 %3749
  %3751 = vadd.xlane.f32.xlu0 %v3746
  %v3752 = vpop.xlane.xlu0 %3751
  %3753 = vadd.xlane.f32.xlu0 %v3747
  %v3754 = vpop.xlane.xlu0 %3753
  %3755 = vadd.xlane.f32.xlu0 %v3748
  %v3756 = vpop.xlane.xlu0 %3755
  %v3757 = vmul.f32 %v3750, %v655
  %v3758 = vmul.f32 %v3752, %v655
  %v3759 = vmul.f32 %v3754, %v655
  %v3760 = vmul.f32 %v3756, %v655
  %v3761 = vadd.f32 %v3757, 1e-05
  %v3762 = vadd.f32 %v3758, 1e-05
  %v3763 = vadd.f32 %v3759, 1e-05
  %v3764 = vadd.f32 %v3760, 1e-05
  %v3765 = vrsqrt.pop %v3761
  %v3766 = vmul.f32 %v3765, %v3761
  %v3767 = vmul.f32 %v3766, %v3765
  %v3768 = vmul.f32 0.5, %v3767
  %v3769 = vsub.f32 1.5, %v3768
  %v3770 = vmul.f32 %v3765, %v3769
  %vm3771 = vweird.f32 %v3761
  %vm3772 = vweird.f32 %v3765
  %vm3773 = vmor %vm3771, %vm3772
  %v3774 = vsel %vm3773, %v3765, %v3770
  %v3775 = vrsqrt.pop %v3762
  %v3776 = vmul.f32 %v3775, %v3762
  %v3777 = vmul.f32 %v3776, %v3775
  %v3778 = vmul.f32 0.5, %v3777
  %v3779 = vsub.f32 1.5, %v3778
  %v3780 = vmul.f32 %v3775, %v3779
  %vm3781 = vweird.f32 %v3762
  %vm3782 = vweird.f32 %v3775
  %vm3783 = vmor %vm3781, %vm3782
  %v3784 = vsel %vm3783, %v3775, %v3780
  %v3785 = vrsqrt.pop %v3763
  %v3786 = vmul.f32 %v3785, %v3763
  %v3787 = vmul.f32 %v3786, %v3785
  %v3788 = vmul.f32 0.5, %v3787
  %v3789 = vsub.f32 1.5, %v3788
  %v3790 = vmul.f32 %v3785, %v3789
  %vm3791 = vweird.f32 %v3763
  %vm3792 = vweird.f32 %v3785
  %vm3793 = vmor %vm3791, %vm3792
  %v3794 = vsel %vm3793, %v3785, %v3790
  %v3795 = vrsqrt.pop %v3764
  %v3796 = vmul.f32 %v3795, %v3764
  %v3797 = vmul.f32 %v3796, %v3795
  %v3798 = vmul.f32 0.5, %v3797
  %v3799 = vsub.f32 1.5, %v3798
  %v3800 = vmul.f32 %v3795, %v3799
  %vm3801 = vweird.f32 %v3764
  %vm3802 = vweird.f32 %v3795
  %vm3803 = vmor %vm3801, %vm3802
  %v3804 = vsel %vm3803, %v3795, %v3800
  %v3805 = vmul.f32 %v3741, %v3774
  %v3806 = vmul.f32 %v3742, %v3784
  %v3807 = vmul.f32 %v3743, %v3794
  %v3808 = vmul.f32 %v3744, %v3804
  %v3810 = vperm.slane %v3726, 0
  %v3812 = vmul.f32 %v3805, %v3810
  %v3813 = vmul.f32 %v3806, %v3810
  %v3814 = vmul.f32 %v3807, %v3810
  %v3815 = vmul.f32 %v3808, %v3810
  %v3817 = vperm.slane %v3728, 0
  %v3819 = vadd.f32 %v3812, %v3817
  %v3820 = vadd.f32 %v3813, %v3817
  %v3821 = vadd.f32 %v3814, %v3817
  %v3822 = vadd.f32 %v3815, %v3817
  %s3823 = scalar_lea.vmem %s13, 256
  %v3824 = vld [vmem:[%s3823] sm:$0xff]
  %v3825 = vld [vmem:[%s3823 + $0x8] sm:$0xff]
  %v3826 = vld [vmem:[%s3823 + $0x10] sm:$0xff]
  %v3827 = vld [vmem:[%s3823 + $0x18] sm:$0xff]
  %v3828 = vld [vmem:[%s3823 + $0x20] sm:$0xff]
  %v3829 = vld [vmem:[%s3823 + $0x28] sm:$0xff]
  %v3830 = vld [vmem:[%s3823 + $0x30] sm:$0xff]
  %v3831 = vld [vmem:[%s3823 + $0x38] sm:$0xff]
  %v3832 = vld [vmem:[%s3823 + $0x40] sm:$0xff]
  %v3833 = vld [vmem:[%s3823 + $0x48] sm:$0xff]
  %v3834 = vld [vmem:[%s3823 + $0x50] sm:$0xff]
  %v3835 = vld [vmem:[%s3823 + $0x58] sm:$0xff]
  %v3836 = vld [vmem:[%s3823 + $0x60] sm:$0xff]
  %v3837 = vld [vmem:[%s3823 + $0x68] sm:$0xff]
  %v3838 = vld [vmem:[%s3823 + $0x70] sm:$0xff]
  %v3839 = vld [vmem:[%s3823 + $0x78] sm:$0xff]
  %v3840 = vld [vmem:[%s3823 + $0x80] sm:$0xff]
  %v3841 = vld [vmem:[%s3823 + $0x88] sm:$0xff]
  %v3842 = vld [vmem:[%s3823 + $0x90] sm:$0xff]
  %v3843 = vld [vmem:[%s3823 + $0x98] sm:$0xff]
  %v3844 = vld [vmem:[%s3823 + $0xa0] sm:$0xff]
  %v3845 = vld [vmem:[%s3823 + $0xa8] sm:$0xff]
  %v3846 = vld [vmem:[%s3823 + $0xb0] sm:$0xff]
  %v3847 = vld [vmem:[%s3823 + $0xb8] sm:$0xff]
  %v3848 = vld [vmem:[%s3823 + $0xc0] sm:$0xff]
  %v3849 = vld [vmem:[%s3823 + $0xc8] sm:$0xff]
  %v3850 = vld [vmem:[%s3823 + $0xd0] sm:$0xff]
  %v3851 = vld [vmem:[%s3823 + $0xd8] sm:$0xff]
  %v3852 = vld [vmem:[%s3823 + $0xe0] sm:$0xff]
  %v3853 = vld [vmem:[%s3823 + $0xe8] sm:$0xff]
  %v3854 = vld [vmem:[%s3823 + $0xf0] sm:$0xff]
  %v3855 = vld [vmem:[%s3823 + $0xf8] sm:$0xff]
  %s3856 = scalar_lea.vmem %s14, 4
  %v3857 = vld [vmem:[%s3856] sm:$0xf]
  %v3858 = vpack.c.bf16 %v3820, %v3819
  %v3859 = vpack.c.bf16 %v3822, %v3821
  %v3861 = vperm.slane %v3857, 0
  %v3862 = vperm.slane %v3857, 1
  %v3863 = vperm.slane %v3857, 2
  %v3864 = vperm.slane %v3857, 3
  %v3901 = vunpack.c.l.b16 %v3824
  %v3902 = vunpack.c.h.b16 %v3824
  %v3903 = vunpack.c.l.b16 %v3825
  %v3904 = vunpack.c.h.b16 %v3825
  %v3905 = vunpack.c.l.b16 %v3826
  %v3906 = vunpack.c.h.b16 %v3826
  %v3907 = vunpack.c.l.b16 %v3827
  %v3908 = vunpack.c.h.b16 %v3827
  %v3909 = vunpack.c.l.b16 %v3828
  %v3910 = vunpack.c.h.b16 %v3828
  %v3911 = vunpack.c.l.b16 %v3829
  %v3912 = vunpack.c.h.b16 %v3829
  %v3913 = vunpack.c.l.b16 %v3830
  %v3914 = vunpack.c.h.b16 %v3830
  %v3915 = vunpack.c.l.b16 %v3831
  %v3916 = vunpack.c.h.b16 %v3831
  %v3917 = vunpack.c.l.b16 %v3832
  %v3918 = vunpack.c.h.b16 %v3832
  %v3919 = vunpack.c.l.b16 %v3833
  %v3920 = vunpack.c.h.b16 %v3833
  %v3921 = vunpack.c.l.b16 %v3834
  %v3922 = vunpack.c.h.b16 %v3834
  %v3923 = vunpack.c.l.b16 %v3835
  %v3924 = vunpack.c.h.b16 %v3835
  %v3925 = vunpack.c.l.b16 %v3836
  %v3926 = vunpack.c.h.b16 %v3836
  %v3927 = vunpack.c.l.b16 %v3837
  %v3928 = vunpack.c.h.b16 %v3837
  %v3929 = vunpack.c.l.b16 %v3838
  %v3930 = vunpack.c.h.b16 %v3838
  %v3931 = vunpack.c.l.b16 %v3839
  %v3932 = vunpack.c.h.b16 %v3839
  %v3933 = vunpack.c.l.b16 %v3840
  %v3934 = vunpack.c.h.b16 %v3840
  %v3935 = vunpack.c.l.b16 %v3841
  %v3936 = vunpack.c.h.b16 %v3841
  %v3937 = vunpack.c.l.b16 %v3842
  %v3938 = vunpack.c.h.b16 %v3842
  %v3939 = vunpack.c.l.b16 %v3843
  %v3940 = vunpack.c.h.b16 %v3843
  %v3941 = vunpack.c.l.b16 %v3844
  %v3942 = vunpack.c.h.b16 %v3844
  %v3943 = vunpack.c.l.b16 %v3845
  %v3944 = vunpack.c.h.b16 %v3845
  %v3945 = vunpack.c.l.b16 %v3846
  %v3946 = vunpack.c.h.b16 %v3846
  %v3947 = vunpack.c.l.b16 %v3847
  %v3948 = vunpack.c.h.b16 %v3847
  %v3949 = vunpack.c.l.b16 %v3848
  %v3950 = vunpack.c.h.b16 %v3848
  %v3951 = vunpack.c.l.b16 %v3849
  %v3952 = vunpack.c.h.b16 %v3849
  %v3953 = vunpack.c.l.b16 %v3850
  %v3954 = vunpack.c.h.b16 %v3850
  %v3955 = vunpack.c.l.b16 %v3851
  %v3956 = vunpack.c.h.b16 %v3851
  %v3957 = vunpack.c.l.b16 %v3852
  %v3958 = vunpack.c.h.b16 %v3852
  %v3959 = vunpack.c.l.b16 %v3853
  %v3960 = vunpack.c.h.b16 %v3853
  %v3961 = vunpack.c.l.b16 %v3854
  %v3962 = vunpack.c.h.b16 %v3854
  %v3963 = vunpack.c.l.b16 %v3855
  %v3964 = vunpack.c.h.b16 %v3855
  %v3965 = vpack.c.b16 %v3905, %v3901
  %v3966 = vpack.c.b16 %v3906, %v3902
  %v3967 = vpack.c.b16 %v3907, %v3903
  %v3968 = vpack.c.b16 %v3908, %v3904
  %v3969 = vpack.c.b16 %v3913, %v3909
  %v3970 = vpack.c.b16 %v3914, %v3910
  %v3971 = vpack.c.b16 %v3915, %v3911
  %v3972 = vpack.c.b16 %v3916, %v3912
  %v3973 = vpack.c.b16 %v3921, %v3917
  %v3974 = vpack.c.b16 %v3922, %v3918
  %v3975 = vpack.c.b16 %v3923, %v3919
  %v3976 = vpack.c.b16 %v3924, %v3920
  %v3977 = vpack.c.b16 %v3929, %v3925
  %v3978 = vpack.c.b16 %v3930, %v3926
  %v3979 = vpack.c.b16 %v3931, %v3927
  %v3980 = vpack.c.b16 %v3932, %v3928
  %v3981 = vpack.c.b16 %v3937, %v3933
  %v3982 = vpack.c.b16 %v3938, %v3934
  %v3983 = vpack.c.b16 %v3939, %v3935
  %v3984 = vpack.c.b16 %v3940, %v3936
  %v3985 = vpack.c.b16 %v3945, %v3941
  %v3986 = vpack.c.b16 %v3946, %v3942
  %v3987 = vpack.c.b16 %v3947, %v3943
  %v3988 = vpack.c.b16 %v3948, %v3944
  %v3989 = vpack.c.b16 %v3953, %v3949
  %v3990 = vpack.c.b16 %v3954, %v3950
  %v3991 = vpack.c.b16 %v3955, %v3951
  %v3992 = vpack.c.b16 %v3956, %v3952
  %v3993 = vpack.c.b16 %v3961, %v3957
  %v3994 = vpack.c.b16 %v3962, %v3958
  %v3995 = vpack.c.b16 %v3963, %v3959
  %v3996 = vpack.c.b16 %v3964, %v3960
  %4029 = vmatpush.bf16.msra.mxu0 %v3993
  %4030 = vmatpush.bf16.msra.mxu0 %v3989
  %4031 = vmatpush.bf16.msra.mxu0 %v3985
  %4032 = vmatpush.bf16.msra.mxu0 %v3981
  %4033 = vmatpush.bf16.msra.mxu0 %v3977
  %4034 = vmatpush.bf16.msra.mxu0 %v3973
  %4035 = vmatpush.bf16.msra.mxu0 %v3969
  %4036 = vmatpush.bf16.msra.mxu0 %v3965
  %4037 = vmatmul.bf16.gmra.mxu0 %v3858
  %v4038 = vpop.f32.mrf.mxu0
  %v4039 = vadd.f32 %v3861, %v4038
  %v4040 = vpop.f32.mrf.mxu0
  %v4041 = vadd.f32 %v3861, %v4040
  %4042 = vmatmul.bf16.gmra.mxu0 %v3859
  %v4043 = vpop.f32.mrf.mxu0
  %v4044 = vadd.f32 %v3861, %v4043
  %v4045 = vpop.f32.mrf.mxu0
  %v4046 = vadd.f32 %v3861, %v4045
  %4047 = vdwg.mxu0
  %4048 = vmatpush.bf16.msra.mxu0 %v3994
  %4049 = vmatpush.bf16.msra.mxu0 %v3990
  %4050 = vmatpush.bf16.msra.mxu0 %v3986
  %4051 = vmatpush.bf16.msra.mxu0 %v3982
  %4052 = vmatpush.bf16.msra.mxu0 %v3978
  %4053 = vmatpush.bf16.msra.mxu0 %v3974
  %4054 = vmatpush.bf16.msra.mxu0 %v3970
  %4055 = vmatpush.bf16.msra.mxu0 %v3966
  %4056 = vmatmul.bf16.gmra.mxu0 %v3858
  %v4057 = vpop.f32.mrf.mxu0
  %v4058 = vadd.f32 %v3862, %v4057
  %v4059 = vpop.f32.mrf.mxu0
  %v4060 = vadd.f32 %v3862, %v4059
  %4061 = vmatmul.bf16.gmra.mxu0 %v3859
  %v4062 = vpop.f32.mrf.mxu0
  %v4063 = vadd.f32 %v3862, %v4062
  %v4064 = vpop.f32.mrf.mxu0
  %v4065 = vadd.f32 %v3862, %v4064
  %4066 = vdwg.mxu0
  %4067 = vmatpush.bf16.msra.mxu0 %v3995
  %4068 = vmatpush.bf16.msra.mxu0 %v3991
  %4069 = vmatpush.bf16.msra.mxu0 %v3987
  %4070 = vmatpush.bf16.msra.mxu0 %v3983
  %4071 = vmatpush.bf16.msra.mxu0 %v3979
  %4072 = vmatpush.bf16.msra.mxu0 %v3975
  %4073 = vmatpush.bf16.msra.mxu0 %v3971
  %4074 = vmatpush.bf16.msra.mxu0 %v3967
  %4075 = vmatmul.bf16.gmra.mxu0 %v3858
  %v4076 = vpop.f32.mrf.mxu0
  %v4077 = vadd.f32 %v3863, %v4076
  %v4078 = vpop.f32.mrf.mxu0
  %v4079 = vadd.f32 %v3863, %v4078
  %4080 = vmatmul.bf16.gmra.mxu0 %v3859
  %v4081 = vpop.f32.mrf.mxu0
  %v4082 = vadd.f32 %v3863, %v4081
  %v4083 = vpop.f32.mrf.mxu0
  %v4084 = vadd.f32 %v3863, %v4083
  %4085 = vdwg.mxu0
  %4086 = vmatpush.bf16.msra.mxu0 %v3996
  %4087 = vmatpush.bf16.msra.mxu0 %v3992
  %4088 = vmatpush.bf16.msra.mxu0 %v3988
  %4089 = vmatpush.bf16.msra.mxu0 %v3984
  %4090 = vmatpush.bf16.msra.mxu0 %v3980
  %4091 = vmatpush.bf16.msra.mxu0 %v3976
  %4092 = vmatpush.bf16.msra.mxu0 %v3972
  %4093 = vmatpush.bf16.msra.mxu0 %v3968
  %4094 = vmatmul.bf16.gmra.mxu0 %v3858
  %v4095 = vpop.f32.mrf.mxu0
  %v4096 = vadd.f32 %v3864, %v4095
  %v4097 = vpop.f32.mrf.mxu0
  %v4098 = vadd.f32 %v3864, %v4097
  %4099 = vmatmul.bf16.gmra.mxu0 %v3859
  %v4100 = vpop.f32.mrf.mxu0
  %v4101 = vadd.f32 %v3864, %v4100
  %v4102 = vpop.f32.mrf.mxu0
  %v4103 = vadd.f32 %v3864, %v4102
  %4104 = vdwg.mxu0
  %v4105 = vmul.f32 %v4039, 1.702
  %v4106 = vmul.f32 %v4058, 1.702
  %v4107 = vmul.f32 %v4077, 1.702
  %v4108 = vmul.f32 %v4096, 1.702
  %v4109 = vmul.f32 %v4041, 1.702
  %v4110 = vmul.f32 %v4060, 1.702
  %v4111 = vmul.f32 %v4079, 1.702
  %v4112 = vmul.f32 %v4098, 1.702
  %v4113 = vmul.f32 %v4044, 1.702
  %v4114 = vmul.f32 %v4063, 1.702
  %v4115 = vmul.f32 %v4082, 1.702
  %v4116 = vmul.f32 %v4101, 1.702
  %v4117 = vmul.f32 %v4046, 1.702
  %v4118 = vmul.f32 %v4065, 1.702
  %v4119 = vmul.f32 %v4084, 1.702
  %v4120 = vmul.f32 %v4103, 1.702
  %v4121 = vxor.u32 %v4105, 2147483648
  %v4122 = vxor.u32 %v4106, 2147483648
  %v4123 = vxor.u32 %v4107, 2147483648
  %v4124 = vxor.u32 %v4108, 2147483648
  %v4125 = vxor.u32 %v4109, 2147483648
  %v4126 = vxor.u32 %v4110, 2147483648
  %v4127 = vxor.u32 %v4111, 2147483648
  %v4128 = vxor.u32 %v4112, 2147483648
  %v4129 = vxor.u32 %v4113, 2147483648
  %v4130 = vxor.u32 %v4114, 2147483648
  %v4131 = vxor.u32 %v4115, 2147483648
  %v4132 = vxor.u32 %v4116, 2147483648
  %v4133 = vxor.u32 %v4117, 2147483648
  %v4134 = vxor.u32 %v4118, 2147483648
  %v4135 = vxor.u32 %v4119, 2147483648
  %v4136 = vxor.u32 %v4120, 2147483648
  %v4137 = vmul.f32 %v4121, 1.442695
  %v4138 = vpow.pop %v4137
  %v4139 = vmul.f32 %v4122, 1.442695
  %v4140 = vpow.pop %v4139
  %v4141 = vmul.f32 %v4123, 1.442695
  %v4142 = vpow.pop %v4141
  %v4143 = vmul.f32 %v4124, 1.442695
  %v4144 = vpow.pop %v4143
  %v4145 = vmul.f32 %v4125, 1.442695
  %v4146 = vpow.pop %v4145
  %v4147 = vmul.f32 %v4126, 1.442695
  %v4148 = vpow.pop %v4147
  %v4149 = vmul.f32 %v4127, 1.442695
  %v4150 = vpow.pop %v4149
  %v4151 = vmul.f32 %v4128, 1.442695
  %v4152 = vpow.pop %v4151
  %v4153 = vmul.f32 %v4129, 1.442695
  %v4154 = vpow.pop %v4153
  %v4155 = vmul.f32 %v4130, 1.442695
  %v4156 = vpow.pop %v4155
  %v4157 = vmul.f32 %v4131, 1.442695
  %v4158 = vpow.pop %v4157
  %v4159 = vmul.f32 %v4132, 1.442695
  %v4160 = vpow.pop %v4159
  %v4161 = vmul.f32 %v4133, 1.442695
  %v4162 = vpow.pop %v4161
  %v4163 = vmul.f32 %v4134, 1.442695
  %v4164 = vpow.pop %v4163
  %v4165 = vmul.f32 %v4135, 1.442695
  %v4166 = vpow.pop %v4165
  %v4167 = vmul.f32 %v4136, 1.442695
  %v4168 = vpow.pop %v4167
  %v4169 = vadd.f32 %v4138, 1.0
  %v4170 = vadd.f32 %v4140, 1.0
  %v4171 = vadd.f32 %v4142, 1.0
  %v4172 = vadd.f32 %v4144, 1.0
  %v4173 = vadd.f32 %v4146, 1.0
  %v4174 = vadd.f32 %v4148, 1.0
  %v4175 = vadd.f32 %v4150, 1.0
  %v4176 = vadd.f32 %v4152, 1.0
  %v4177 = vadd.f32 %v4154, 1.0
  %v4178 = vadd.f32 %v4156, 1.0
  %v4179 = vadd.f32 %v4158, 1.0
  %v4180 = vadd.f32 %v4160, 1.0
  %v4181 = vadd.f32 %v4162, 1.0
  %v4182 = vadd.f32 %v4164, 1.0
  %v4183 = vadd.f32 %v4166, 1.0
  %v4184 = vadd.f32 %v4168, 1.0
  %v4185 = vrcp.pop %v4169
  %v4186 = vmul.f32 %v4169, %v4185
  %v4187 = vsub.f32 1.0, %v4186
  %v4188 = vmul.f32 %v4185, %v4187
  %v4189 = vadd.f32 %v4185, %v4188
  %vm4190 = vweird.f32 %v4169
  %vm4191 = vweird.f32 %v4185
  %vm4192 = vmor %vm4190, %vm4191
  %v4193 = vsel %vm4192, %v4185, %v4189
  %v4194 = vand.u32 2147483647, %v4169
  %vm4195 = vcmp.eq.f32.partialorder %v4194, 8.507059e+37
  %v4196 = vand.u32 %v4169, 2147483648
  %v4197 = vor.u32 1.1754944e-38, %v4196
  %v4198 = vsel %vm4195, %v4197, %v4193
  %v4199 = vmul.f32 1.0, %v4198
  %v4200 = vrcp.pop %v4170
  %v4201 = vmul.f32 %v4170, %v4200
  %v4202 = vsub.f32 1.0, %v4201
  %v4203 = vmul.f32 %v4200, %v4202
  %v4204 = vadd.f32 %v4200, %v4203
  %vm4205 = vweird.f32 %v4170
  %vm4206 = vweird.f32 %v4200
  %vm4207 = vmor %vm4205, %vm4206
  %v4208 = vsel %vm4207, %v4200, %v4204
  %v4209 = vand.u32 2147483647, %v4170
  %vm4210 = vcmp.eq.f32.partialorder %v4209, 8.507059e+37
  %v4211 = vand.u32 %v4170, 2147483648
  %v4212 = vor.u32 1.1754944e-38, %v4211
  %v4213 = vsel %vm4210, %v4212, %v4208
  %v4214 = vmul.f32 1.0, %v4213
  %v4215 = vrcp.pop %v4171
  %v4216 = vmul.f32 %v4171, %v4215
  %v4217 = vsub.f32 1.0, %v4216
  %v4218 = vmul.f32 %v4215, %v4217
  %v4219 = vadd.f32 %v4215, %v4218
  %vm4220 = vweird.f32 %v4171
  %vm4221 = vweird.f32 %v4215
  %vm4222 = vmor %vm4220, %vm4221
  %v4223 = vsel %vm4222, %v4215, %v4219
  %v4224 = vand.u32 2147483647, %v4171
  %vm4225 = vcmp.eq.f32.partialorder %v4224, 8.507059e+37
  %v4226 = vand.u32 %v4171, 2147483648
  %v4227 = vor.u32 1.1754944e-38, %v4226
  %v4228 = vsel %vm4225, %v4227, %v4223
  %v4229 = vmul.f32 1.0, %v4228
  %v4230 = vrcp.pop %v4172
  %v4231 = vmul.f32 %v4172, %v4230
  %v4232 = vsub.f32 1.0, %v4231
  %v4233 = vmul.f32 %v4230, %v4232
  %v4234 = vadd.f32 %v4230, %v4233
  %vm4235 = vweird.f32 %v4172
  %vm4236 = vweird.f32 %v4230
  %vm4237 = vmor %vm4235, %vm4236
  %v4238 = vsel %vm4237, %v4230, %v4234
  %v4239 = vand.u32 2147483647, %v4172
  %vm4240 = vcmp.eq.f32.partialorder %v4239, 8.507059e+37
  %v4241 = vand.u32 %v4172, 2147483648
  %v4242 = vor.u32 1.1754944e-38, %v4241
  %v4243 = vsel %vm4240, %v4242, %v4238
  %v4244 = vmul.f32 1.0, %v4243
  %v4245 = vrcp.pop %v4173
  %v4246 = vmul.f32 %v4173, %v4245
  %v4247 = vsub.f32 1.0, %v4246
  %v4248 = vmul.f32 %v4245, %v4247
  %v4249 = vadd.f32 %v4245, %v4248
  %vm4250 = vweird.f32 %v4173
  %vm4251 = vweird.f32 %v4245
  %vm4252 = vmor %vm4250, %vm4251
  %v4253 = vsel %vm4252, %v4245, %v4249
  %v4254 = vand.u32 2147483647, %v4173
  %vm4255 = vcmp.eq.f32.partialorder %v4254, 8.507059e+37
  %v4256 = vand.u32 %v4173, 2147483648
  %v4257 = vor.u32 1.1754944e-38, %v4256
  %v4258 = vsel %vm4255, %v4257, %v4253
  %v4259 = vmul.f32 1.0, %v4258
  %v4260 = vrcp.pop %v4174
  %v4261 = vmul.f32 %v4174, %v4260
  %v4262 = vsub.f32 1.0, %v4261
  %v4263 = vmul.f32 %v4260, %v4262
  %v4264 = vadd.f32 %v4260, %v4263
  %vm4265 = vweird.f32 %v4174
  %vm4266 = vweird.f32 %v4260
  %vm4267 = vmor %vm4265, %vm4266
  %v4268 = vsel %vm4267, %v4260, %v4264
  %v4269 = vand.u32 2147483647, %v4174
  %vm4270 = vcmp.eq.f32.partialorder %v4269, 8.507059e+37
  %v4271 = vand.u32 %v4174, 2147483648
  %v4272 = vor.u32 1.1754944e-38, %v4271
  %v4273 = vsel %vm4270, %v4272, %v4268
  %v4274 = vmul.f32 1.0, %v4273
  %v4275 = vrcp.pop %v4175
  %v4276 = vmul.f32 %v4175, %v4275
  %v4277 = vsub.f32 1.0, %v4276
  %v4278 = vmul.f32 %v4275, %v4277
  %v4279 = vadd.f32 %v4275, %v4278
  %vm4280 = vweird.f32 %v4175
  %vm4281 = vweird.f32 %v4275
  %vm4282 = vmor %vm4280, %vm4281
  %v4283 = vsel %vm4282, %v4275, %v4279
  %v4284 = vand.u32 2147483647, %v4175
  %vm4285 = vcmp.eq.f32.partialorder %v4284, 8.507059e+37
  %v4286 = vand.u32 %v4175, 2147483648
  %v4287 = vor.u32 1.1754944e-38, %v4286
  %v4288 = vsel %vm4285, %v4287, %v4283
  %v4289 = vmul.f32 1.0, %v4288
  %v4290 = vrcp.pop %v4176
  %v4291 = vmul.f32 %v4176, %v4290
  %v4292 = vsub.f32 1.0, %v4291
  %v4293 = vmul.f32 %v4290, %v4292
  %v4294 = vadd.f32 %v4290, %v4293
  %vm4295 = vweird.f32 %v4176
  %vm4296 = vweird.f32 %v4290
  %vm4297 = vmor %vm4295, %vm4296
  %v4298 = vsel %vm4297, %v4290, %v4294
  %v4299 = vand.u32 2147483647, %v4176
  %vm4300 = vcmp.eq.f32.partialorder %v4299, 8.507059e+37
  %v4301 = vand.u32 %v4176, 2147483648
  %v4302 = vor.u32 1.1754944e-38, %v4301
  %v4303 = vsel %vm4300, %v4302, %v4298
  %v4304 = vmul.f32 1.0, %v4303
  %v4305 = vrcp.pop %v4177
  %v4306 = vmul.f32 %v4177, %v4305
  %v4307 = vsub.f32 1.0, %v4306
  %v4308 = vmul.f32 %v4305, %v4307
  %v4309 = vadd.f32 %v4305, %v4308
  %vm4310 = vweird.f32 %v4177
  %vm4311 = vweird.f32 %v4305
  %vm4312 = vmor %vm4310, %vm4311
  %v4313 = vsel %vm4312, %v4305, %v4309
  %v4314 = vand.u32 2147483647, %v4177
  %vm4315 = vcmp.eq.f32.partialorder %v4314, 8.507059e+37
  %v4316 = vand.u32 %v4177, 2147483648
  %v4317 = vor.u32 1.1754944e-38, %v4316
  %v4318 = vsel %vm4315, %v4317, %v4313
  %v4319 = vmul.f32 1.0, %v4318
  %v4320 = vrcp.pop %v4178
  %v4321 = vmul.f32 %v4178, %v4320
  %v4322 = vsub.f32 1.0, %v4321
  %v4323 = vmul.f32 %v4320, %v4322
  %v4324 = vadd.f32 %v4320, %v4323
  %vm4325 = vweird.f32 %v4178
  %vm4326 = vweird.f32 %v4320
  %vm4327 = vmor %vm4325, %vm4326
  %v4328 = vsel %vm4327, %v4320, %v4324
  %v4329 = vand.u32 2147483647, %v4178
  %vm4330 = vcmp.eq.f32.partialorder %v4329, 8.507059e+37
  %v4331 = vand.u32 %v4178, 2147483648
  %v4332 = vor.u32 1.1754944e-38, %v4331
  %v4333 = vsel %vm4330, %v4332, %v4328
  %v4334 = vmul.f32 1.0, %v4333
  %v4335 = vrcp.pop %v4179
  %v4336 = vmul.f32 %v4179, %v4335
  %v4337 = vsub.f32 1.0, %v4336
  %v4338 = vmul.f32 %v4335, %v4337
  %v4339 = vadd.f32 %v4335, %v4338
  %vm4340 = vweird.f32 %v4179
  %vm4341 = vweird.f32 %v4335
  %vm4342 = vmor %vm4340, %vm4341
  %v4343 = vsel %vm4342, %v4335, %v4339
  %v4344 = vand.u32 2147483647, %v4179
  %vm4345 = vcmp.eq.f32.partialorder %v4344, 8.507059e+37
  %v4346 = vand.u32 %v4179, 2147483648
  %v4347 = vor.u32 1.1754944e-38, %v4346
  %v4348 = vsel %vm4345, %v4347, %v4343
  %v4349 = vmul.f32 1.0, %v4348
  %v4350 = vrcp.pop %v4180
  %v4351 = vmul.f32 %v4180, %v4350
  %v4352 = vsub.f32 1.0, %v4351
  %v4353 = vmul.f32 %v4350, %v4352
  %v4354 = vadd.f32 %v4350, %v4353
  %vm4355 = vweird.f32 %v4180
  %vm4356 = vweird.f32 %v4350
  %vm4357 = vmor %vm4355, %vm4356
  %v4358 = vsel %vm4357, %v4350, %v4354
  %v4359 = vand.u32 2147483647, %v4180
  %vm4360 = vcmp.eq.f32.partialorder %v4359, 8.507059e+37
  %v4361 = vand.u32 %v4180, 2147483648
  %v4362 = vor.u32 1.1754944e-38, %v4361
  %v4363 = vsel %vm4360, %v4362, %v4358
  %v4364 = vmul.f32 1.0, %v4363
  %v4365 = vrcp.pop %v4181
  %v4366 = vmul.f32 %v4181, %v4365
  %v4367 = vsub.f32 1.0, %v4366
  %v4368 = vmul.f32 %v4365, %v4367
  %v4369 = vadd.f32 %v4365, %v4368
  %vm4370 = vweird.f32 %v4181
  %vm4371 = vweird.f32 %v4365
  %vm4372 = vmor %vm4370, %vm4371
  %v4373 = vsel %vm4372, %v4365, %v4369
  %v4374 = vand.u32 2147483647, %v4181
  %vm4375 = vcmp.eq.f32.partialorder %v4374, 8.507059e+37
  %v4376 = vand.u32 %v4181, 2147483648
  %v4377 = vor.u32 1.1754944e-38, %v4376
  %v4378 = vsel %vm4375, %v4377, %v4373
  %v4379 = vmul.f32 1.0, %v4378
  %v4380 = vrcp.pop %v4182
  %v4381 = vmul.f32 %v4182, %v4380
  %v4382 = vsub.f32 1.0, %v4381
  %v4383 = vmul.f32 %v4380, %v4382
  %v4384 = vadd.f32 %v4380, %v4383
  %vm4385 = vweird.f32 %v4182
  %vm4386 = vweird.f32 %v4380
  %vm4387 = vmor %vm4385, %vm4386
  %v4388 = vsel %vm4387, %v4380, %v4384
  %v4389 = vand.u32 2147483647, %v4182
  %vm4390 = vcmp.eq.f32.partialorder %v4389, 8.507059e+37
  %v4391 = vand.u32 %v4182, 2147483648
  %v4392 = vor.u32 1.1754944e-38, %v4391
  %v4393 = vsel %vm4390, %v4392, %v4388
  %v4394 = vmul.f32 1.0, %v4393
  %v4395 = vrcp.pop %v4183
  %v4396 = vmul.f32 %v4183, %v4395
  %v4397 = vsub.f32 1.0, %v4396
  %v4398 = vmul.f32 %v4395, %v4397
  %v4399 = vadd.f32 %v4395, %v4398
  %vm4400 = vweird.f32 %v4183
  %vm4401 = vweird.f32 %v4395
  %vm4402 = vmor %vm4400, %vm4401
  %v4403 = vsel %vm4402, %v4395, %v4399
  %v4404 = vand.u32 2147483647, %v4183
  %vm4405 = vcmp.eq.f32.partialorder %v4404, 8.507059e+37
  %v4406 = vand.u32 %v4183, 2147483648
  %v4407 = vor.u32 1.1754944e-38, %v4406
  %v4408 = vsel %vm4405, %v4407, %v4403
  %v4409 = vmul.f32 1.0, %v4408
  %v4410 = vrcp.pop %v4184
  %v4411 = vmul.f32 %v4184, %v4410
  %v4412 = vsub.f32 1.0, %v4411
  %v4413 = vmul.f32 %v4410, %v4412
  %v4414 = vadd.f32 %v4410, %v4413
  %vm4415 = vweird.f32 %v4184
  %vm4416 = vweird.f32 %v4410
  %vm4417 = vmor %vm4415, %vm4416
  %v4418 = vsel %vm4417, %v4410, %v4414
  %v4419 = vand.u32 2147483647, %v4184
  %vm4420 = vcmp.eq.f32.partialorder %v4419, 8.507059e+37
  %v4421 = vand.u32 %v4184, 2147483648
  %v4422 = vor.u32 1.1754944e-38, %v4421
  %v4423 = vsel %vm4420, %v4422, %v4418
  %v4424 = vmul.f32 1.0, %v4423
  %v4425 = vmul.f32 %v4039, %v4199
  %v4426 = vmul.f32 %v4058, %v4214
  %v4427 = vmul.f32 %v4077, %v4229
  %v4428 = vmul.f32 %v4096, %v4244
  %v4429 = vmul.f32 %v4041, %v4259
  %v4430 = vmul.f32 %v4060, %v4274
  %v4431 = vmul.f32 %v4079, %v4289
  %v4432 = vmul.f32 %v4098, %v4304
  %v4433 = vmul.f32 %v4044, %v4319
  %v4434 = vmul.f32 %v4063, %v4334
  %v4435 = vmul.f32 %v4082, %v4349
  %v4436 = vmul.f32 %v4101, %v4364
  %v4437 = vmul.f32 %v4046, %v4379
  %v4438 = vmul.f32 %v4065, %v4394
  %v4439 = vmul.f32 %v4084, %v4409
  %v4440 = vmul.f32 %v4103, %v4424
  %s4441 = scalar_lea.vmem %s15, 256
  %v4442 = vld [vmem:[%s4441] sm:$0xf]
  %v4443 = vld [vmem:[%s4441 + $0x4] sm:$0xf]
  %v4444 = vld [vmem:[%s4441 + $0x8] sm:$0xf]
  %v4445 = vld [vmem:[%s4441 + $0xc] sm:$0xf]
  %v4446 = vld [vmem:[%s4441 + $0x10] sm:$0xf]
  %v4447 = vld [vmem:[%s4441 + $0x14] sm:$0xf]
  %v4448 = vld [vmem:[%s4441 + $0x18] sm:$0xf]
  %v4449 = vld [vmem:[%s4441 + $0x1c] sm:$0xf]
  %v4450 = vld [vmem:[%s4441 + $0x20] sm:$0xf]
  %v4451 = vld [vmem:[%s4441 + $0x24] sm:$0xf]
  %v4452 = vld [vmem:[%s4441 + $0x28] sm:$0xf]
  %v4453 = vld [vmem:[%s4441 + $0x2c] sm:$0xf]
  %v4454 = vld [vmem:[%s4441 + $0x30] sm:$0xf]
  %v4455 = vld [vmem:[%s4441 + $0x34] sm:$0xf]
  %v4456 = vld [vmem:[%s4441 + $0x38] sm:$0xf]
  %v4457 = vld [vmem:[%s4441 + $0x3c] sm:$0xf]
  %v4458 = vld [vmem:[%s4441 + $0x40] sm:$0xf]
  %v4459 = vld [vmem:[%s4441 + $0x44] sm:$0xf]
  %v4460 = vld [vmem:[%s4441 + $0x48] sm:$0xf]
  %v4461 = vld [vmem:[%s4441 + $0x4c] sm:$0xf]
  %v4462 = vld [vmem:[%s4441 + $0x50] sm:$0xf]
  %v4463 = vld [vmem:[%s4441 + $0x54] sm:$0xf]
  %v4464 = vld [vmem:[%s4441 + $0x58] sm:$0xf]
  %v4465 = vld [vmem:[%s4441 + $0x5c] sm:$0xf]
  %v4466 = vld [vmem:[%s4441 + $0x60] sm:$0xf]
  %v4467 = vld [vmem:[%s4441 + $0x64] sm:$0xf]
  %v4468 = vld [vmem:[%s4441 + $0x68] sm:$0xf]
  %v4469 = vld [vmem:[%s4441 + $0x6c] sm:$0xf]
  %v4470 = vld [vmem:[%s4441 + $0x70] sm:$0xf]
  %v4471 = vld [vmem:[%s4441 + $0x74] sm:$0xf]
  %v4472 = vld [vmem:[%s4441 + $0x78] sm:$0xf]
  %v4473 = vld [vmem:[%s4441 + $0x7c] sm:$0xf]
  %v4474 = vld [vmem:[%s4441 + $0x80] sm:$0xf]
  %v4475 = vld [vmem:[%s4441 + $0x84] sm:$0xf]
  %v4476 = vld [vmem:[%s4441 + $0x88] sm:$0xf]
  %v4477 = vld [vmem:[%s4441 + $0x8c] sm:$0xf]
  %v4478 = vld [vmem:[%s4441 + $0x90] sm:$0xf]
  %v4479 = vld [vmem:[%s4441 + $0x94] sm:$0xf]
  %v4480 = vld [vmem:[%s4441 + $0x98] sm:$0xf]
  %v4481 = vld [vmem:[%s4441 + $0x9c] sm:$0xf]
  %v4482 = vld [vmem:[%s4441 + $0xa0] sm:$0xf]
  %v4483 = vld [vmem:[%s4441 + $0xa4] sm:$0xf]
  %v4484 = vld [vmem:[%s4441 + $0xa8] sm:$0xf]
  %v4485 = vld [vmem:[%s4441 + $0xac] sm:$0xf]
  %v4486 = vld [vmem:[%s4441 + $0xb0] sm:$0xf]
  %v4487 = vld [vmem:[%s4441 + $0xb4] sm:$0xf]
  %v4488 = vld [vmem:[%s4441 + $0xb8] sm:$0xf]
  %v4489 = vld [vmem:[%s4441 + $0xbc] sm:$0xf]
  %v4490 = vld [vmem:[%s4441 + $0xc0] sm:$0xf]
  %v4491 = vld [vmem:[%s4441 + $0xc4] sm:$0xf]
  %v4492 = vld [vmem:[%s4441 + $0xc8] sm:$0xf]
  %v4493 = vld [vmem:[%s4441 + $0xcc] sm:$0xf]
  %v4494 = vld [vmem:[%s4441 + $0xd0] sm:$0xf]
  %v4495 = vld [vmem:[%s4441 + $0xd4] sm:$0xf]
  %v4496 = vld [vmem:[%s4441 + $0xd8] sm:$0xf]
  %v4497 = vld [vmem:[%s4441 + $0xdc] sm:$0xf]
  %v4498 = vld [vmem:[%s4441 + $0xe0] sm:$0xf]
  %v4499 = vld [vmem:[%s4441 + $0xe4] sm:$0xf]
  %v4500 = vld [vmem:[%s4441 + $0xe8] sm:$0xf]
  %v4501 = vld [vmem:[%s4441 + $0xec] sm:$0xf]
  %v4502 = vld [vmem:[%s4441 + $0xf0] sm:$0xf]
  %v4503 = vld [vmem:[%s4441 + $0xf4] sm:$0xf]
  %v4504 = vld [vmem:[%s4441 + $0xf8] sm:$0xf]
  %v4505 = vld [vmem:[%s4441 + $0xfc] sm:$0xf]
  %s4506 = scalar_lea.vmem %s16, 1
  %v4507 = vld [vmem:[%s4506] sm:$0x1]
  %v4508 = vpack.c.bf16 %v4429, %v4425
  %v4509 = vpack.c.bf16 %v4430, %v4426
  %v4510 = vpack.c.bf16 %v4431, %v4427
  %v4511 = vpack.c.bf16 %v4432, %v4428
  %v4512 = vpack.c.bf16 %v4437, %v4433
  %v4513 = vpack.c.bf16 %v4438, %v4434
  %v4514 = vpack.c.bf16 %v4439, %v4435
  %v4515 = vpack.c.bf16 %v4440, %v4436
  %v4517 = vperm.slane %v4507, 0
  %v4583 = vunpack.c.l.b16 %v4442
  %v4584 = vunpack.c.l.b16 %v4443
  %v4585 = vunpack.c.l.b16 %v4444
  %v4586 = vunpack.c.l.b16 %v4445
  %v4587 = vunpack.c.l.b16 %v4446
  %v4588 = vunpack.c.l.b16 %v4447
  %v4589 = vunpack.c.l.b16 %v4448
  %v4590 = vunpack.c.l.b16 %v4449
  %v4591 = vunpack.c.l.b16 %v4450
  %v4592 = vunpack.c.l.b16 %v4451
  %v4593 = vunpack.c.l.b16 %v4452
  %v4594 = vunpack.c.l.b16 %v4453
  %v4595 = vunpack.c.l.b16 %v4454
  %v4596 = vunpack.c.l.b16 %v4455
  %v4597 = vunpack.c.l.b16 %v4456
  %v4598 = vunpack.c.l.b16 %v4457
  %v4599 = vunpack.c.l.b16 %v4458
  %v4600 = vunpack.c.l.b16 %v4459
  %v4601 = vunpack.c.l.b16 %v4460
  %v4602 = vunpack.c.l.b16 %v4461
  %v4603 = vunpack.c.l.b16 %v4462
  %v4604 = vunpack.c.l.b16 %v4463
  %v4605 = vunpack.c.l.b16 %v4464
  %v4606 = vunpack.c.l.b16 %v4465
  %v4607 = vunpack.c.l.b16 %v4466
  %v4608 = vunpack.c.l.b16 %v4467
  %v4609 = vunpack.c.l.b16 %v4468
  %v4610 = vunpack.c.l.b16 %v4469
  %v4611 = vunpack.c.l.b16 %v4470
  %v4612 = vunpack.c.l.b16 %v4471
  %v4613 = vunpack.c.l.b16 %v4472
  %v4614 = vunpack.c.l.b16 %v4473
  %v4615 = vunpack.c.l.b16 %v4474
  %v4616 = vunpack.c.l.b16 %v4475
  %v4617 = vunpack.c.l.b16 %v4476
  %v4618 = vunpack.c.l.b16 %v4477
  %v4619 = vunpack.c.l.b16 %v4478
  %v4620 = vunpack.c.l.b16 %v4479
  %v4621 = vunpack.c.l.b16 %v4480
  %v4622 = vunpack.c.l.b16 %v4481
  %v4623 = vunpack.c.l.b16 %v4482
  %v4624 = vunpack.c.l.b16 %v4483
  %v4625 = vunpack.c.l.b16 %v4484
  %v4626 = vunpack.c.l.b16 %v4485
  %v4627 = vunpack.c.l.b16 %v4486
  %v4628 = vunpack.c.l.b16 %v4487
  %v4629 = vunpack.c.l.b16 %v4488
  %v4630 = vunpack.c.l.b16 %v4489
  %v4631 = vunpack.c.l.b16 %v4490
  %v4632 = vunpack.c.l.b16 %v4491
  %v4633 = vunpack.c.l.b16 %v4492
  %v4634 = vunpack.c.l.b16 %v4493
  %v4635 = vunpack.c.l.b16 %v4494
  %v4636 = vunpack.c.l.b16 %v4495
  %v4637 = vunpack.c.l.b16 %v4496
  %v4638 = vunpack.c.l.b16 %v4497
  %v4639 = vunpack.c.l.b16 %v4498
  %v4640 = vunpack.c.l.b16 %v4499
  %v4641 = vunpack.c.l.b16 %v4500
  %v4642 = vunpack.c.l.b16 %v4501
  %v4643 = vunpack.c.l.b16 %v4502
  %v4644 = vunpack.c.l.b16 %v4503
  %v4645 = vunpack.c.l.b16 %v4504
  %v4646 = vunpack.c.l.b16 %v4505
  %v4647 = vpack.c.b16 %v4584, %v4583
  %v4648 = vpack.c.b16 %v4586, %v4585
  %v4649 = vpack.c.b16 %v4588, %v4587
  %v4650 = vpack.c.b16 %v4590, %v4589
  %v4651 = vpack.c.b16 %v4592, %v4591
  %v4652 = vpack.c.b16 %v4594, %v4593
  %v4653 = vpack.c.b16 %v4596, %v4595
  %v4654 = vpack.c.b16 %v4598, %v4597
  %v4655 = vpack.c.b16 %v4600, %v4599
  %v4656 = vpack.c.b16 %v4602, %v4601
  %v4657 = vpack.c.b16 %v4604, %v4603
  %v4658 = vpack.c.b16 %v4606, %v4605
  %v4659 = vpack.c.b16 %v4608, %v4607
  %v4660 = vpack.c.b16 %v4610, %v4609
  %v4661 = vpack.c.b16 %v4612, %v4611
  %v4662 = vpack.c.b16 %v4614, %v4613
  %v4663 = vpack.c.b16 %v4616, %v4615
  %v4664 = vpack.c.b16 %v4618, %v4617
  %v4665 = vpack.c.b16 %v4620, %v4619
  %v4666 = vpack.c.b16 %v4622, %v4621
  %v4667 = vpack.c.b16 %v4624, %v4623
  %v4668 = vpack.c.b16 %v4626, %v4625
  %v4669 = vpack.c.b16 %v4628, %v4627
  %v4670 = vpack.c.b16 %v4630, %v4629
  %v4671 = vpack.c.b16 %v4632, %v4631
  %v4672 = vpack.c.b16 %v4634, %v4633
  %v4673 = vpack.c.b16 %v4636, %v4635
  %v4674 = vpack.c.b16 %v4638, %v4637
  %v4675 = vpack.c.b16 %v4640, %v4639
  %v4676 = vpack.c.b16 %v4642, %v4641
  %v4677 = vpack.c.b16 %v4644, %v4643
  %v4678 = vpack.c.b16 %v4646, %v4645
  %4711 = vmatpush.bf16.msra.mxu0 %v4654
  %4712 = vmatpush.bf16.msra.mxu0 %v4653
  %4713 = vmatpush.bf16.msra.mxu0 %v4652
  %4714 = vmatpush.bf16.msra.mxu0 %v4651
  %4715 = vmatpush.bf16.msra.mxu0 %v4650
  %4716 = vmatpush.bf16.msra.mxu0 %v4649
  %4717 = vmatpush.bf16.msra.mxu0 %v4648
  %4718 = vmatpush.bf16.msra.mxu0 %v4647
  %4719 = vmatmul.bf16.gmra.mxu0 %v4508
  %v4720 = vpop.f32.mrf.mxu0
  %v4721 = vadd.f32 %v4517, %v4720
  %v4722 = vpop.f32.mrf.mxu0
  %v4723 = vadd.f32 %v4517, %v4722
  %4724 = vmatmul.bf16.gmra.mxu0 %v4512
  %v4725 = vpop.f32.mrf.mxu0
  %v4726 = vadd.f32 %v4517, %v4725
  %v4727 = vpop.f32.mrf.mxu0
  %v4728 = vadd.f32 %v4517, %v4727
  %4729 = vdwg.mxu0
  %4730 = vmatpush.bf16.msra.mxu0 %v4662
  %4731 = vmatpush.bf16.msra.mxu0 %v4661
  %4732 = vmatpush.bf16.msra.mxu0 %v4660
  %4733 = vmatpush.bf16.msra.mxu0 %v4659
  %4734 = vmatpush.bf16.msra.mxu0 %v4658
  %4735 = vmatpush.bf16.msra.mxu0 %v4657
  %4736 = vmatpush.bf16.msra.mxu0 %v4656
  %4737 = vmatpush.bf16.msra.mxu0 %v4655
  %4738 = vmatmul.bf16.gmra.mxu0 %v4509
  %v4739 = vpop.f32.mrf.mxu0
  %v4740 = vadd.f32 %v4721, %v4739
  %v4741 = vpop.f32.mrf.mxu0
  %v4742 = vadd.f32 %v4723, %v4741
  %4743 = vmatmul.bf16.gmra.mxu0 %v4513
  %v4744 = vpop.f32.mrf.mxu0
  %v4745 = vadd.f32 %v4726, %v4744
  %v4746 = vpop.f32.mrf.mxu0
  %v4747 = vadd.f32 %v4728, %v4746
  %4748 = vdwg.mxu0
  %4749 = vmatpush.bf16.msra.mxu0 %v4670
  %4750 = vmatpush.bf16.msra.mxu0 %v4669
  %4751 = vmatpush.bf16.msra.mxu0 %v4668
  %4752 = vmatpush.bf16.msra.mxu0 %v4667
  %4753 = vmatpush.bf16.msra.mxu0 %v4666
  %4754 = vmatpush.bf16.msra.mxu0 %v4665
  %4755 = vmatpush.bf16.msra.mxu0 %v4664
  %4756 = vmatpush.bf16.msra.mxu0 %v4663
  %4757 = vmatmul.bf16.gmra.mxu0 %v4510
  %v4758 = vpop.f32.mrf.mxu0
  %v4759 = vadd.f32 %v4740, %v4758
  %v4760 = vpop.f32.mrf.mxu0
  %v4761 = vadd.f32 %v4742, %v4760
  %4762 = vmatmul.bf16.gmra.mxu0 %v4514
  %v4763 = vpop.f32.mrf.mxu0
  %v4764 = vadd.f32 %v4745, %v4763
  %v4765 = vpop.f32.mrf.mxu0
  %v4766 = vadd.f32 %v4747, %v4765
  %4767 = vdwg.mxu0
  %4768 = vmatpush.bf16.msra.mxu0 %v4678
  %4769 = vmatpush.bf16.msra.mxu0 %v4677
  %4770 = vmatpush.bf16.msra.mxu0 %v4676
  %4771 = vmatpush.bf16.msra.mxu0 %v4675
  %4772 = vmatpush.bf16.msra.mxu0 %v4674
  %4773 = vmatpush.bf16.msra.mxu0 %v4673
  %4774 = vmatpush.bf16.msra.mxu0 %v4672
  %4775 = vmatpush.bf16.msra.mxu0 %v4671
  %4776 = vmatmul.bf16.gmra.mxu0 %v4511
  %v4777 = vpop.f32.mrf.mxu0
  %v4778 = vadd.f32 %v4759, %v4777
  %v4779 = vpop.f32.mrf.mxu0
  %v4780 = vadd.f32 %v4761, %v4779
  %4781 = vmatmul.bf16.gmra.mxu0 %v4515
  %v4782 = vpop.f32.mrf.mxu0
  %v4783 = vadd.f32 %v4764, %v4782
  %v4784 = vpop.f32.mrf.mxu0
  %v4785 = vadd.f32 %v4766, %v4784
  %4786 = vdwg.mxu0
  %v4787 = vadd.f32 %v3721, %v4778
  %v4788 = vadd.f32 %v3722, %v4780
  %v4789 = vadd.f32 %v3723, %v4783
  %v4790 = vadd.f32 %v3724, %v4785
  %v4791 = vld [vmem:[%s17] sm:$0x1]
  %v4792 = vld [vmem:[%s18] sm:$0x1]
  %v4797 = vrot.slane %v4788, 7
  %vm4798 = vcmask 1041409
  %v4799 = vsel %vm4798, %v4797, %v4787
  %v4800 = vrot.slane %v4789, 6
  %vm4801 = vcmask 1042434
  %v4802 = vsel %vm4801, %v4800, %v4799
  %v4803 = vrot.slane %v4790, 5
  %vm4804 = vcmask 1043459
  %v4805 = vsel %vm4804, %v4803, %v4802
  %vm4807 = vcmask 1043456
  %v4808 = vsel %vm4807, %v4805, 0.0
  %4809 = vadd.xlane.f32.xlu0 %v4808
  %v4810 = vpop.xlane.xlu0 %4809
  %v4811 = vmul.f32 %v4810, %v655
  %v4813 = vrot.slane %v4811, 1
  %v4814 = vrot.slane %v4811, 2
  %v4815 = vrot.slane %v4811, 3
  %v4820 = vsub.f32 %v4787, %v4811
  %v4821 = vsub.f32 %v4788, %v4813
  %v4822 = vsub.f32 %v4789, %v4814
  %v4823 = vsub.f32 %v4790, %v4815
  %v4824 = vmul.f32 %v4820, %v4820
  %v4825 = vmul.f32 %v4821, %v4821
  %v4826 = vmul.f32 %v4822, %v4822
  %v4827 = vmul.f32 %v4823, %v4823
  %v4832 = vrot.slane %v4825, 7
  %v4833 = vsel %vm4798, %v4832, %v4824
  %v4834 = vrot.slane %v4826, 6
  %v4835 = vsel %vm4801, %v4834, %v4833
  %v4836 = vrot.slane %v4827, 5
  %v4837 = vsel %vm4804, %v4836, %v4835
  %v4839 = vsel %vm4807, %v4837, 0.0
  %4840 = vadd.xlane.f32.xlu0 %v4839
  %v4841 = vpop.xlane.xlu0 %4840
  %v4842 = vmul.f32 %v4841, %v655
  %v4843 = vadd.f32 %v4842, 1e-05
  %v4844 = vrsqrt.pop %v4843
  %v4845 = vmul.f32 %v4844, %v4843
  %v4846 = vmul.f32 %v4845, %v4844
  %v4847 = vmul.f32 0.5, %v4846
  %v4848 = vsub.f32 1.5, %v4847
  %v4849 = vmul.f32 %v4844, %v4848
  %vm4850 = vweird.f32 %v4843
  %vm4851 = vweird.f32 %v4844
  %vm4852 = vmor %vm4850, %vm4851
  %v4853 = vsel %vm4852, %v4844, %v4849
  %v4855 = vrot.slane %v4853, 1
  %v4856 = vrot.slane %v4853, 2
  %v4857 = vrot.slane %v4853, 3
  %v4862 = vmul.f32 %v4820, %v4853
  %v4863 = vmul.f32 %v4821, %v4855
  %v4864 = vmul.f32 %v4822, %v4856
  %v4865 = vmul.f32 %v4823, %v4857
  %v4867 = vperm.slane %v4791, 0
  %v4869 = vmul.f32 %v4862, %v4867
  %v4870 = vmul.f32 %v4863, %v4867
  %v4871 = vmul.f32 %v4864, %v4867
  %v4872 = vmul.f32 %v4865, %v4867
  %v4874 = vperm.slane %v4792, 0
  %v4876 = vadd.f32 %v4869, %v4874
  %v4877 = vadd.f32 %v4870, %v4874
  %v4878 = vadd.f32 %v4871, %v4874
  %v4879 = vadd.f32 %v4872, %v4874
  %v4880 = vld [vmem:[%s19] sm:$0xf]
  %v4881 = vld [vmem:[%s19 + $0x4] sm:$0xf]
  %v4882 = vld [vmem:[%s19 + $0x8] sm:$0xf]
  %v4883 = vld [vmem:[%s19 + $0xc] sm:$0xf]
  %v4884 = vld [vmem:[%s19 + $0x10] sm:$0xf]
  %v4885 = vld [vmem:[%s19 + $0x14] sm:$0xf]
  %v4886 = vld [vmem:[%s19 + $0x18] sm:$0xf]
  %v4887 = vld [vmem:[%s19 + $0x1c] sm:$0xf]
  %v4888 = vld [vmem:[%s19 + $0x20] sm:$0xf]
  %v4889 = vld [vmem:[%s19 + $0x24] sm:$0xf]
  %v4890 = vld [vmem:[%s19 + $0x28] sm:$0xf]
  %v4891 = vld [vmem:[%s19 + $0x2c] sm:$0xf]
  %v4892 = vld [vmem:[%s19 + $0x30] sm:$0xf]
  %v4893 = vld [vmem:[%s19 + $0x34] sm:$0xf]
  %v4894 = vld [vmem:[%s19 + $0x38] sm:$0xf]
  %v4895 = vld [vmem:[%s19 + $0x3c] sm:$0xf]
  %v4896 = vpack.c.bf16 %v4876, %v4876
  %v4897 = vpack.c.bf16 %v4877, %v4877
  %v4898 = vpack.c.bf16 %v4878, %v4878
  %v4899 = vpack.c.bf16 %v4879, %v4879
  %v4904 = vunpack.c.l.b16 %v4896
  %v4905 = vunpack.c.l.b16 %v4897
  %v4906 = vunpack.c.l.b16 %v4898
  %v4907 = vunpack.c.l.b16 %v4899
  %v4908 = vrot.slane %v4905, 7
  %v4909 = vsel %vm4798, %v4908, %v4904
  %v4910 = vrot.slane %v4906, 6
  %v4911 = vsel %vm4801, %v4910, %v4909
  %v4912 = vrot.slane %v4907, 5
  %v4913 = vsel %vm4804, %v4912, %v4911
  %v4914 = vpack.c.b16 %v4913, %v4913
  %v4932 = vunpack.c.l.b16 %v4880
  %v4933 = vunpack.c.l.b16 %v4881
  %v4934 = vunpack.c.l.b16 %v4882
  %v4935 = vunpack.c.l.b16 %v4883
  %v4936 = vunpack.c.l.b16 %v4884
  %v4937 = vunpack.c.l.b16 %v4885
  %v4938 = vunpack.c.l.b16 %v4886
  %v4939 = vunpack.c.l.b16 %v4887
  %v4940 = vunpack.c.l.b16 %v4888
  %v4941 = vunpack.c.l.b16 %v4889
  %v4942 = vunpack.c.l.b16 %v4890
  %v4943 = vunpack.c.l.b16 %v4891
  %v4944 = vunpack.c.l.b16 %v4892
  %v4945 = vunpack.c.l.b16 %v4893
  %v4946 = vunpack.c.l.b16 %v4894
  %v4947 = vunpack.c.l.b16 %v4895
  %v4948 = vpack.c.b16 %v4933, %v4932
  %v4949 = vpack.c.b16 %v4935, %v4934
  %v4950 = vpack.c.b16 %v4937, %v4936
  %v4951 = vpack.c.b16 %v4939, %v4938
  %v4952 = vpack.c.b16 %v4941, %v4940
  %v4953 = vpack.c.b16 %v4943, %v4942
  %v4954 = vpack.c.b16 %v4945, %v4944
  %v4955 = vpack.c.b16 %v4947, %v4946
  %4964 = vmatpush.bf16.msra.mxu0 %v4955
  %4965 = vmatpush.bf16.msra.mxu0 %v4954
  %4966 = vmatpush.bf16.msra.mxu0 %v4953
  %4967 = vmatpush.bf16.msra.mxu0 %v4952
  %4968 = vmatpush.bf16.msra.mxu0 %v4951
  %4969 = vmatpush.bf16.msra.mxu0 %v4950
  %4970 = vmatpush.bf16.msra.mxu0 %v4949
  %4971 = vmatpush.bf16.msra.mxu0 %v4948
  %4972 = vmatmul.bf16.gmra.mxu0 %v4914
  %v4973 = vpop.f32.mrf.mxu0
  %v4974 = vadd.f32 0.0, %v4973
  %v4975 = vpop.f32.mrf.mxu0
  %4976 = vdwg.mxu0
  %4977 = vst [vmem:[%s20] sm:$0xf] %v4974
  // Predicated region
  $region82: #{image_clip_forward.1} parent=0 // pred_check
    _
  $region83: #{image_clip_forward.1} parent=0 // pred_check_branch
    %4979 = sbr.rel (0) target = $region85
  $region84: #{image_clip_forward.1} parent=0 // pred_region
    _
  $region85: #{image_clip_forward.1} parent=0 // pred_fallthru
    _
  // Predicated region
  $region86: #{image_clip_forward.1} parent=0 // pred_check
    _
  $region87: #{image_clip_forward.1} parent=0 // pred_check_branch
    %4981 = sbr.rel (0) target = $region89
  $region88: #{image_clip_forward.1} parent=0 // pred_region
    _
  $region89: #{image_clip_forward.1} parent=0 // pred_fallthru
    _

</llo_original>
